<compile_context>
chip_gen: v6e
topology: v6e:2x2x1
jax: 0.10.0
libtpu: 0.0.40
codegen_flags: <defaults>
</compile_context>

<pallas_src>
import numpy as np

import jax
import jax.numpy as jnp
from jax.experimental import pallas as pl
from jax.experimental.pallas import tpu as pltpu

PAD = 128  # lane-dense padding for the head


def _elu(x):
    # nn.ELU(alpha=1.0): x if x > 0 else exp(x) - 1, computed in f32.
    return jnp.where(x > 0, x, jnp.exp(jnp.minimum(x, 0.0)) - 1.0)


# ------------------------------ fused kernel -------------------------------

def _stage(src_ref, m_ref, b_ref, dst_ref, *, batch, h_in, kh, hp, wpc):
    """One conv(kh x kh) + bias + 2x2 maxpool + ELU stage (square spatial).

    src_ref: [batch*h_in, w_in*cin] f32   activation, rows=(b,h), lanes=(w,c)
    m_ref:   [kh, w_in*cin, 2*wpc] bf16   band matrices (col taps + col pool
                                          phase v folded into the lane dim)
    b_ref:   [1, wpc] f32                 bias tiled over pooled width
    dst_ref: [batch*hp, wpc] f32          pooled + ELU'd output
    """
    for b in range(batch):                      # static Python loop (B small)
        base = b * h_in
        # kh+1 stride-2 row slabs: slab[s][p, :] = src[base + s + 2*p, :]
        slabs = [
            src_ref[pl.ds(base + s, hp, stride=2), :].astype(jnp.bfloat16)
            for s in range(kh + 1)
        ]
        acc = [None, None]                      # pool row phase u in {0, 1}
        for di in range(kh):                    # same RHS reused for both u
            m = m_ref[di]                       # [w_in*cin, 2*wpc] bf16
            for u in range(2):
                t = jnp.dot(slabs[u + di], m,
                            preferred_element_type=jnp.float32)
                acc[u] = t if acc[u] is None else acc[u] + t
        s = jnp.maximum(acc[0], acc[1])         # max over pool row phase
        pooled = jnp.maximum(s[:, :wpc], s[:, wpc:])  # max over pool col phase
        dst_ref[pl.ds(b * hp, hp), :] = _elu(pooled + b_ref[...])


def _net_kernel(x_ref, m1_ref, b1_ref, m2_ref, b2_ref, m3_ref, b3_ref,
                m4_ref, fcw_ref, fcb_ref, o_ref, a1_ref, a2_ref, a3_ref):
    batch = o_ref.shape[0]

    # conv1(5x5, 3->4)  + ELU + pool : [B*28, 84] -> [B*12, 48]
    _stage(x_ref, m1_ref, b1_ref, a1_ref,
           batch=batch, h_in=28, kh=5, hp=12, wpc=48)
    # conv2(3x3, 4->8)  + ELU + pool : [B*12, 48] -> [B*5, 40]
    _stage(a1_ref, m2_ref, b2_ref, a2_ref,
           batch=batch, h_in=12, kh=3, hp=5, wpc=40)
    # conv3(2x2, 8->16) + ELU + pool : [B*5, 40]  -> [B*2, 32]
    _stage(a2_ref, m3_ref, b3_ref, a3_ref,
           batch=batch, h_in=5, kh=2, hp=2, wpc=32)

    # head: conv4(2x2, 16->32) has 1x1 output spatial -> two row-tap matmuls,
    # then fc1..fc4 chained with intermediates in vregs (lane-padded to 128).
    r0 = a3_ref[pl.ds(0, batch, stride=2), :].astype(jnp.bfloat16)  # rows 2b
    r1 = a3_ref[pl.ds(1, batch, stride=2), :].astype(jnp.bfloat16)  # rows 2b+1
    h = (jnp.dot(r0, m4_ref[0], preferred_element_type=jnp.float32)
         + jnp.dot(r1, m4_ref[1], preferred_element_type=jnp.float32))
    h = _elu(h + fcb_ref[0])                                        # conv4+ELU
    for i in range(4):                                              # fc1..fc4
        z = jnp.dot(h.astype(jnp.bfloat16), fcw_ref[i],
                    preferred_element_type=jnp.float32) + fcb_ref[i + 1]
        h = _elu(z) if i < 3 else z                                 # no ELU on fc4
    o_ref[...] = h                                                  # [B, 128]


# -------------------------------- wrapper -----------------------------------

def net_forward(kparams, x_nchw):
    b = x_nchw.shape[0]
    x = jnp.transpose(x_nchw, (0, 2, 3, 1)).astype(jnp.float32)  # NCHW -> NHWC
    x2d = x.reshape(b * 28, 28 * 3)                              # rows=(b,h), lanes=(w,c)

    vmem = pl.BlockSpec(memory_space=pltpu.MemorySpace.VMEM)
    out = pl.pallas_call(
        _net_kernel,
        out_shape=jax.ShapeDtypeStruct((b, PAD), jnp.float32),
        in_specs=[vmem] * 10,
        out_specs=vmem,
        scratch_shapes=[                      # VMEM-resident stage activations
            pltpu.VMEM((b * 12, 48), jnp.float32),
            pltpu.VMEM((b * 5, 40), jnp.float32),
            pltpu.VMEM((b * 2, 32), jnp.float32),
        ],
    )(x2d,
      kparams["m1"], kparams["b1"],
      kparams["m2"], kparams["b2"],
      kparams["m3"], kparams["b3"],
      kparams["m4"], kparams["fcw"], kparams["fcb"])
    return out[:, :4]                                            # [B, 4]


# ------------------------------- parameters ---------------------------------

def init_params(key):
    """Raw parameters, JAX-native layouts: conv [kh,kw,cin,cout], fc [in,out]."""
    def nrm(k, shape, scale=0.1):
        return scale * jax.random.normal(k, shape, dtype=jnp.float32)

    ks = jax.random.split(key, 16)
    return {
        "c1_w": nrm(ks[0], (5, 5, 3, 4)),   "c1_b": nrm(ks[1], (4,)),
        "c2_w": nrm(ks[2], (3, 3, 4, 8)),   "c2_b": nrm(ks[3], (8,)),
        "c3_w": nrm(ks[4], (2, 2, 8, 16)),  "c3_b": nrm(ks[5], (16,)),
        "c4_w": nrm(ks[6], (2, 2, 16, 32)), "c4_b": nrm(ks[7], (32,)),
        "fc1_w": nrm(ks[8], (32, 50)),   "fc1_b": nrm(ks[9], (50,)),
        "fc2_w": nrm(ks[10], (50, 50)),  "fc2_b": nrm(ks[11], (50,)),
        "fc3_w": nrm(ks[12], (50, 100)), "fc3_b": nrm(ks[13], (100,)),
        "fc4_w": nrm(ks[14], (100, 4)),  "fc4_b": nrm(ks[15], (4,)),
    }


def _band_matrices(w, w_in, wp):
    """conv weight [kh,kw,cin,cout] -> band matrices [kh, w_in*cin, 2*wp*cout].

    Column layout: v*wp*cout + q*cout + co (v = pool column phase, q = pooled
    output column); row layout: (2q+v+dj)*cin + ci.  A stride-2 row slab
    (start u+di) matmul'd with band[di], summed over di, yields the conv output
    at pooled position (p, q) for both column phases of the 2x2 pool window.
    """
    kh, kw, cin, cout = w.shape
    wpc = wp * cout
    m = np.zeros((kh, w_in * cin, 2 * wpc), np.float32)
    wn = np.asarray(w, np.float32)
    for di in range(kh):
        for v in range(2):
            for q in range(wp):
                for dj in range(kw):
                    r0 = (2 * q + v + dj) * cin
                    c0 = v * wpc + q * cout
                    m[di, r0:r0 + cin, c0:c0 + cout] = wn[di, dj]
    return m


def _pad2(w, rows, cols):
    w = np.asarray(w, np.float32)
    return np.pad(w, ((0, rows - w.shape[0]), (0, cols - w.shape[1])))


def pack_params(p):
    """Build the fused kernel's operand set (host-side, once)."""
    bf, f32 = jnp.bfloat16, jnp.float32

    def tiled_bias(bias, wp):  # [cout] -> [1, wp*cout], lane = q*cout + co
        return jnp.asarray(np.tile(np.asarray(bias, np.float32), wp)[None, :], f32)

    def pad_bias(bias):
        bias = np.asarray(bias, np.float32)
        return np.pad(bias, (0, PAD - bias.shape[0]))

    # conv4 acts on the [2, 2, 16] activation stored as 2 rows x (2*16) lanes:
    # m4[di, dj*16+ci, co] = w4[di, dj, ci, co], co zero-padded to 128.
    w4 = np.asarray(p["c4_w"], np.float32)            # [2, 2, 16, 32]
    m4 = np.zeros((2, 2 * 16, PAD), np.float32)
    for di in range(2):
        m4[di, :, :32] = w4[di].reshape(2 * 16, 32)

    fcw = np.stack([_pad2(p["fc1_w"], PAD, PAD), _pad2(p["fc2_w"], PAD, PAD),
                    _pad2(p["fc3_w"], PAD, PAD), _pad2(p["fc4_w"], PAD, PAD)])
    fcb = np.stack([pad_bias(p["c4_b"]), pad_bias(p["fc1_b"]),
                    pad_bias(p["fc2_b"]), pad_bias(p["fc3_b"]),
                    pad_bias(p["fc4_b"])])[:, None, :]  # [5, 1, 128]

    return {
        "m1": jnp.asarray(_band_matrices(p["c1_w"], 28, 12), bf),  # [5, 84, 96]
        "b1": tiled_bias(p["c1_b"], 12),                           # [1, 48]
        "m2": jnp.asarray(_band_matrices(p["c2_w"], 12, 5), bf),   # [3, 48, 80]
        "b2": tiled_bias(p["c2_b"], 5),                            # [1, 40]
        "m3": jnp.asarray(_band_matrices(p["c3_w"], 5, 2), bf),    # [2, 40, 64]
        "b3": tiled_bias(p["c3_b"], 2),                            # [1, 32]
        "m4": jnp.asarray(m4, bf),                                 # [2, 32, 128]
        "fcw": jnp.asarray(fcw, bf),                               # [4, 128, 128]
        "fcb": jnp.asarray(fcb, f32),                              # [5, 1, 128]
    }


# --------------------------------- main --------------------------------------

if __name__ == "__main__":
    key = jax.random.PRNGKey(0)
    kp, kx = jax.random.split(key)
    raw = init_params(kp)
    kparams = pack_params(raw)
    # 28x28 input is the spatial size for which the flatten yields exactly 32
    # features, matching nn.Linear(in_features=32, ...).
    x = jax.random.normal(kx, (2, 3, 28, 28), dtype=jnp.float32)
    fwd = jax.jit(net_forward)
    out = jax.block_until_ready(fwd(kparams, x))
    assert out.shape == (2, 4) and out.dtype == jnp.float32
    print("KERNEL_OK")
</pallas_src>

<mosaic_0001>
module attributes {stable_mosaic.version = 11 : i64} {
  func.func @_net_kernel(%arg0: memref<56x84xf32, #tpu.memory_space<vmem>>, %arg1: memref<5x84x96xbf16, #tpu.memory_space<vmem>>, %arg2: memref<1x48xf32, #tpu.memory_space<vmem>>, %arg3: memref<3x48x80xbf16, #tpu.memory_space<vmem>>, %arg4: memref<1x40xf32, #tpu.memory_space<vmem>>, %arg5: memref<2x40x64xbf16, #tpu.memory_space<vmem>>, %arg6: memref<1x32xf32, #tpu.memory_space<vmem>>, %arg7: memref<2x32x128xbf16, #tpu.memory_space<vmem>>, %arg8: memref<4x128x128xbf16, #tpu.memory_space<vmem>>, %arg9: memref<5x1x128xf32, #tpu.memory_space<vmem>>, %arg10: memref<2x128xf32, #tpu.memory_space<vmem>>, %arg11: memref<24x48xf32, #tpu.memory_space<vmem>>, %arg12: memref<10x40xf32, #tpu.memory_space<vmem>>, %arg13: memref<4x32xf32, #tpu.memory_space<vmem>>) attributes {dimension_semantics = [], scalar_prefetch = 0 : i64, scratch_operands = 3 : i64, tpu.core_type = #tpu.core_type<tc>} {
    %c0 = arith.constant 0 : index
    %c0_0 = arith.constant 0 : index
    %0 = tpu.strided_load %arg0[%c0, %c0_0] {strides = array<i32: 2, 1>} : memref<56x84xf32, #tpu.memory_space<vmem>>, vector<12x84xf32>
    %1 = arith.truncf %0 : vector<12x84xf32> to vector<12x84xbf16>
    %c1 = arith.constant 1 : index
    %c0_1 = arith.constant 0 : index
    %2 = tpu.strided_load %arg0[%c1, %c0_1] {strides = array<i32: 2, 1>} : memref<56x84xf32, #tpu.memory_space<vmem>>, vector<12x84xf32>
    %3 = arith.truncf %2 : vector<12x84xf32> to vector<12x84xbf16>
    %c2 = arith.constant 2 : index
    %c0_2 = arith.constant 0 : index
    %4 = tpu.strided_load %arg0[%c2, %c0_2] {strides = array<i32: 2, 1>} : memref<56x84xf32, #tpu.memory_space<vmem>>, vector<12x84xf32>
    %5 = arith.truncf %4 : vector<12x84xf32> to vector<12x84xbf16>
    %c3 = arith.constant 3 : index
    %c0_3 = arith.constant 0 : index
    %6 = tpu.strided_load %arg0[%c3, %c0_3] {strides = array<i32: 2, 1>} : memref<56x84xf32, #tpu.memory_space<vmem>>, vector<12x84xf32>
    %7 = arith.truncf %6 : vector<12x84xf32> to vector<12x84xbf16>
    %c4 = arith.constant 4 : index
    %c0_4 = arith.constant 0 : index
    %8 = tpu.strided_load %arg0[%c4, %c0_4] {strides = array<i32: 2, 1>} : memref<56x84xf32, #tpu.memory_space<vmem>>, vector<12x84xf32>
    %9 = arith.truncf %8 : vector<12x84xf32> to vector<12x84xbf16>
    %c5 = arith.constant 5 : index
    %c0_5 = arith.constant 0 : index
    %10 = tpu.strided_load %arg0[%c5, %c0_5] {strides = array<i32: 2, 1>} : memref<56x84xf32, #tpu.memory_space<vmem>>, vector<12x84xf32>
    %11 = arith.truncf %10 : vector<12x84xf32> to vector<12x84xbf16>
    %c0_6 = arith.constant 0 : index
    %c0_7 = arith.constant 0 : index
    %c0_8 = arith.constant 0 : index
    %12 = vector.load %arg1[%c0_6, %c0_7, %c0_8] : memref<5x84x96xbf16, #tpu.memory_space<vmem>>, vector<1x84x96xbf16>
    %13 = vector.shape_cast %12 : vector<1x84x96xbf16> to vector<84x96xbf16>
    %cst = arith.constant dense<0.000000e+00> : vector<12x96xf32>
    %14 = tpu.matmul %1, %13, %cst {dimension_numbers = #tpu.dot_dimension_numbers<[1], [0], [0], [1], [0, 0, 1, 1], [], []>} : vector<12x84xbf16>, vector<84x96xbf16>, vector<12x96xf32> -> vector<12x96xf32>
    %cst_9 = arith.constant dense<0.000000e+00> : vector<12x96xf32>
    %15 = tpu.matmul %3, %13, %cst_9 {dimension_numbers = #tpu.dot_dimension_numbers<[1], [0], [0], [1], [0, 0, 1, 1], [], []>} : vector<12x84xbf16>, vector<84x96xbf16>, vector<12x96xf32> -> vector<12x96xf32>
    %c1_10 = arith.constant 1 : index
    %c0_11 = arith.constant 0 : index
    %c0_12 = arith.constant 0 : index
    %16 = vector.load %arg1[%c1_10, %c0_11, %c0_12] : memref<5x84x96xbf16, #tpu.memory_space<vmem>>, vector<1x84x96xbf16>
    %17 = vector.shape_cast %16 : vector<1x84x96xbf16> to vector<84x96xbf16>
    %cst_13 = arith.constant dense<0.000000e+00> : vector<12x96xf32>
    %18 = tpu.matmul %3, %17, %cst_13 {dimension_numbers = #tpu.dot_dimension_numbers<[1], [0], [0], [1], [0, 0, 1, 1], [], []>} : vector<12x84xbf16>, vector<84x96xbf16>, vector<12x96xf32> -> vector<12x96xf32>
    %19 = arith.addf %14, %18 : vector<12x96xf32>
    %cst_14 = arith.constant dense<0.000000e+00> : vector<12x96xf32>
    %20 = tpu.matmul %5, %17, %cst_14 {dimension_numbers = #tpu.dot_dimension_numbers<[1], [0], [0], [1], [0, 0, 1, 1], [], []>} : vector<12x84xbf16>, vector<84x96xbf16>, vector<12x96xf32> -> vector<12x96xf32>
    %21 = arith.addf %15, %20 : vector<12x96xf32>
    %c2_15 = arith.constant 2 : index
    %c0_16 = arith.constant 0 : index
    %c0_17 = arith.constant 0 : index
    %22 = vector.load %arg1[%c2_15, %c0_16, %c0_17] : memref<5x84x96xbf16, #tpu.memory_space<vmem>>, vector<1x84x96xbf16>
    %23 = vector.shape_cast %22 : vector<1x84x96xbf16> to vector<84x96xbf16>
    %cst_18 = arith.constant dense<0.000000e+00> : vector<12x96xf32>
    %24 = tpu.matmul %5, %23, %cst_18 {dimension_numbers = #tpu.dot_dimension_numbers<[1], [0], [0], [1], [0, 0, 1, 1], [], []>} : vector<12x84xbf16>, vector<84x96xbf16>, vector<12x96xf32> -> vector<12x96xf32>
    %25 = arith.addf %19, %24 : vector<12x96xf32>
    %cst_19 = arith.constant dense<0.000000e+00> : vector<12x96xf32>
    %26 = tpu.matmul %7, %23, %cst_19 {dimension_numbers = #tpu.dot_dimension_numbers<[1], [0], [0], [1], [0, 0, 1, 1], [], []>} : vector<12x84xbf16>, vector<84x96xbf16>, vector<12x96xf32> -> vector<12x96xf32>
    %27 = arith.addf %21, %26 : vector<12x96xf32>
    %c3_20 = arith.constant 3 : index
    %c0_21 = arith.constant 0 : index
    %c0_22 = arith.constant 0 : index
    %28 = vector.load %arg1[%c3_20, %c0_21, %c0_22] : memref<5x84x96xbf16, #tpu.memory_space<vmem>>, vector<1x84x96xbf16>
    %29 = vector.shape_cast %28 : vector<1x84x96xbf16> to vector<84x96xbf16>
    %cst_23 = arith.constant dense<0.000000e+00> : vector<12x96xf32>
    %30 = tpu.matmul %7, %29, %cst_23 {dimension_numbers = #tpu.dot_dimension_numbers<[1], [0], [0], [1], [0, 0, 1, 1], [], []>} : vector<12x84xbf16>, vector<84x96xbf16>, vector<12x96xf32> -> vector<12x96xf32>
    %31 = arith.addf %25, %30 : vector<12x96xf32>
    %cst_24 = arith.constant dense<0.000000e+00> : vector<12x96xf32>
    %32 = tpu.matmul %9, %29, %cst_24 {dimension_numbers = #tpu.dot_dimension_numbers<[1], [0], [0], [1], [0, 0, 1, 1], [], []>} : vector<12x84xbf16>, vector<84x96xbf16>, vector<12x96xf32> -> vector<12x96xf32>
    %33 = arith.addf %27, %32 : vector<12x96xf32>
    %c4_25 = arith.constant 4 : index
    %c0_26 = arith.constant 0 : index
    %c0_27 = arith.constant 0 : index
    %34 = vector.load %arg1[%c4_25, %c0_26, %c0_27] : memref<5x84x96xbf16, #tpu.memory_space<vmem>>, vector<1x84x96xbf16>
    %35 = vector.shape_cast %34 : vector<1x84x96xbf16> to vector<84x96xbf16>
    %cst_28 = arith.constant dense<0.000000e+00> : vector<12x96xf32>
    %36 = tpu.matmul %9, %35, %cst_28 {dimension_numbers = #tpu.dot_dimension_numbers<[1], [0], [0], [1], [0, 0, 1, 1], [], []>} : vector<12x84xbf16>, vector<84x96xbf16>, vector<12x96xf32> -> vector<12x96xf32>
    %37 = arith.addf %31, %36 : vector<12x96xf32>
    %cst_29 = arith.constant dense<0.000000e+00> : vector<12x96xf32>
    %38 = tpu.matmul %11, %35, %cst_29 {dimension_numbers = #tpu.dot_dimension_numbers<[1], [0], [0], [1], [0, 0, 1, 1], [], []>} : vector<12x84xbf16>, vector<84x96xbf16>, vector<12x96xf32> -> vector<12x96xf32>
    %39 = arith.addf %33, %38 : vector<12x96xf32>
    %40 = arith.maximumf %37, %39 : vector<12x96xf32>
    %41 = vector.extract_strided_slice %40 {offsets = [0, 0], sizes = [12, 48], strides = [1, 1]} : vector<12x96xf32> to vector<12x48xf32>
    %42 = vector.extract_strided_slice %40 {offsets = [0, 48], sizes = [12, 48], strides = [1, 1]} : vector<12x96xf32> to vector<12x48xf32>
    %43 = arith.maximumf %41, %42 : vector<12x48xf32>
    %c0_30 = arith.constant 0 : index
    %c0_31 = arith.constant 0 : index
    %44 = vector.load %arg2[%c0_30, %c0_31] : memref<1x48xf32, #tpu.memory_space<vmem>>, vector<1x48xf32>
    %45 = vector.broadcast %44 : vector<1x48xf32> to vector<12x48xf32>
    %46 = arith.addf %43, %45 : vector<12x48xf32>
    %cst_32 = arith.constant 0.000000e+00 : f32
    %47 = vector.broadcast %cst_32 : f32 to vector<12x48xf32>
    %48 = arith.cmpf ogt, %46, %47 : vector<12x48xf32>
    %cst_33 = arith.constant 0.000000e+00 : f32
    %49 = vector.broadcast %cst_33 : f32 to vector<12x48xf32>
    %50 = arith.minimumf %46, %49 : vector<12x48xf32>
    %51 = math.exp %50 : vector<12x48xf32>
    %cst_34 = arith.constant 1.000000e+00 : f32
    %52 = vector.broadcast %cst_34 : f32 to vector<12x48xf32>
    %53 = arith.subf %51, %52 : vector<12x48xf32>
    %54 = arith.select %48, %46, %53 : vector<12x48xi1>, vector<12x48xf32>
    %c0_35 = arith.constant 0 : index
    %c0_36 = arith.constant 0 : index
    %55 = vector.load %arg11[%c0_35, %c0_36] : memref<24x48xf32, #tpu.memory_space<vmem>>, vector<12x48xf32>
    tpu.vector_store %arg11[%c0_35, %c0_36], %54 {strides = array<i32>} : memref<24x48xf32, #tpu.memory_space<vmem>>, vector<12x48xf32>,
    %c28 = arith.constant 28 : index
    %c0_37 = arith.constant 0 : index
    %56 = tpu.strided_load %arg0[%c28, %c0_37] {strides = array<i32: 2, 1>} : memref<56x84xf32, #tpu.memory_space<vmem>>, vector<12x84xf32>
    %57 = arith.truncf %56 : vector<12x84xf32> to vector<12x84xbf16>
    %c29 = arith.constant 29 : index
    %c0_38 = arith.constant 0 : index
    %58 = tpu.strided_load %arg0[%c29, %c0_38] {strides = array<i32: 2, 1>} : memref<56x84xf32, #tpu.memory_space<vmem>>, vector<12x84xf32>
    %59 = arith.truncf %58 : vector<12x84xf32> to vector<12x84xbf16>
    %c30 = arith.constant 30 : index
    %c0_39 = arith.constant 0 : index
    %60 = tpu.strided_load %arg0[%c30, %c0_39] {strides = array<i32: 2, 1>} : memref<56x84xf32, #tpu.memory_space<vmem>>, vector<12x84xf32>
    %61 = arith.truncf %60 : vector<12x84xf32> to vector<12x84xbf16>
    %c31 = arith.constant 31 : index
    %c0_40 = arith.constant 0 : index
    %62 = tpu.strided_load %arg0[%c31, %c0_40] {strides = array<i32: 2, 1>} : memref<56x84xf32, #tpu.memory_space<vmem>>, vector<12x84xf32>
    %63 = arith.truncf %62 : vector<12x84xf32> to vector<12x84xbf16>
    %c32 = arith.constant 32 : index
    %c0_41 = arith.constant 0 : index
    %64 = tpu.strided_load %arg0[%c32, %c0_41] {strides = array<i32: 2, 1>} : memref<56x84xf32, #tpu.memory_space<vmem>>, vector<12x84xf32>
    %65 = arith.truncf %64 : vector<12x84xf32> to vector<12x84xbf16>
    %c33 = arith.constant 33 : index
    %c0_42 = arith.constant 0 : index
    %66 = tpu.strided_load %arg0[%c33, %c0_42] {strides = array<i32: 2, 1>} : memref<56x84xf32, #tpu.memory_space<vmem>>, vector<12x84xf32>
    %67 = arith.truncf %66 : vector<12x84xf32> to vector<12x84xbf16>
    %c0_43 = arith.constant 0 : index
    %c0_44 = arith.constant 0 : index
    %c0_45 = arith.constant 0 : index
    %68 = vector.load %arg1[%c0_43, %c0_44, %c0_45] : memref<5x84x96xbf16, #tpu.memory_space<vmem>>, vector<1x84x96xbf16>
    %69 = vector.shape_cast %68 : vector<1x84x96xbf16> to vector<84x96xbf16>
    %cst_46 = arith.constant dense<0.000000e+00> : vector<12x96xf32>
    %70 = tpu.matmul %57, %69, %cst_46 {dimension_numbers = #tpu.dot_dimension_numbers<[1], [0], [0], [1], [0, 0, 1, 1], [], []>} : vector<12x84xbf16>, vector<84x96xbf16>, vector<12x96xf32> -> vector<12x96xf32>
    %cst_47 = arith.constant dense<0.000000e+00> : vector<12x96xf32>
    %71 = tpu.matmul %59, %69, %cst_47 {dimension_numbers = #tpu.dot_dimension_numbers<[1], [0], [0], [1], [0, 0, 1, 1], [], []>} : vector<12x84xbf16>, vector<84x96xbf16>, vector<12x96xf32> -> vector<12x96xf32>
    %c1_48 = arith.constant 1 : index
    %c0_49 = arith.constant 0 : index
    %c0_50 = arith.constant 0 : index
    %72 = vector.load %arg1[%c1_48, %c0_49, %c0_50] : memref<5x84x96xbf16, #tpu.memory_space<vmem>>, vector<1x84x96xbf16>
    %73 = vector.shape_cast %72 : vector<1x84x96xbf16> to vector<84x96xbf16>
    %cst_51 = arith.constant dense<0.000000e+00> : vector<12x96xf32>
    %74 = tpu.matmul %59, %73, %cst_51 {dimension_numbers = #tpu.dot_dimension_numbers<[1], [0], [0], [1], [0, 0, 1, 1], [], []>} : vector<12x84xbf16>, vector<84x96xbf16>, vector<12x96xf32> -> vector<12x96xf32>
    %75 = arith.addf %70, %74 : vector<12x96xf32>
    %cst_52 = arith.constant dense<0.000000e+00> : vector<12x96xf32>
    %76 = tpu.matmul %61, %73, %cst_52 {dimension_numbers = #tpu.dot_dimension_numbers<[1], [0], [0], [1], [0, 0, 1, 1], [], []>} : vector<12x84xbf16>, vector<84x96xbf16>, vector<12x96xf32> -> vector<12x96xf32>
    %77 = arith.addf %71, %76 : vector<12x96xf32>
    %c2_53 = arith.constant 2 : index
    %c0_54 = arith.constant 0 : index
    %c0_55 = arith.constant 0 : index
    %78 = vector.load %arg1[%c2_53, %c0_54, %c0_55] : memref<5x84x96xbf16, #tpu.memory_space<vmem>>, vector<1x84x96xbf16>
    %79 = vector.shape_cast %78 : vector<1x84x96xbf16> to vector<84x96xbf16>
    %cst_56 = arith.constant dense<0.000000e+00> : vector<12x96xf32>
    %80 = tpu.matmul %61, %79, %cst_56 {dimension_numbers = #tpu.dot_dimension_numbers<[1], [0], [0], [1], [0, 0, 1, 1], [], []>} : vector<12x84xbf16>, vector<84x96xbf16>, vector<12x96xf32> -> vector<12x96xf32>
    %81 = arith.addf %75, %80 : vector<12x96xf32>
    %cst_57 = arith.constant dense<0.000000e+00> : vector<12x96xf32>
    %82 = tpu.matmul %63, %79, %cst_57 {dimension_numbers = #tpu.dot_dimension_numbers<[1], [0], [0], [1], [0, 0, 1, 1], [], []>} : vector<12x84xbf16>, vector<84x96xbf16>, vector<12x96xf32> -> vector<12x96xf32>
    %83 = arith.addf %77, %82 : vector<12x96xf32>
    %c3_58 = arith.constant 3 : index
    %c0_59 = arith.constant 0 : index
    %c0_60 = arith.constant 0 : index
    %84 = vector.load %arg1[%c3_58, %c0_59, %c0_60] : memref<5x84x96xbf16, #tpu.memory_space<vmem>>, vector<1x84x96xbf16>
    %85 = vector.shape_cast %84 : vector<1x84x96xbf16> to vector<84x96xbf16>
    %cst_61 = arith.constant dense<0.000000e+00> : vector<12x96xf32>
    %86 = tpu.matmul %63, %85, %cst_61 {dimension_numbers = #tpu.dot_dimension_numbers<[1], [0], [0], [1], [0, 0, 1, 1], [], []>} : vector<12x84xbf16>, vector<84x96xbf16>, vector<12x96xf32> -> vector<12x96xf32>
    %87 = arith.addf %81, %86 : vector<12x96xf32>
    %cst_62 = arith.constant dense<0.000000e+00> : vector<12x96xf32>
    %88 = tpu.matmul %65, %85, %cst_62 {dimension_numbers = #tpu.dot_dimension_numbers<[1], [0], [0], [1], [0, 0, 1, 1], [], []>} : vector<12x84xbf16>, vector<84x96xbf16>, vector<12x96xf32> -> vector<12x96xf32>
    %89 = arith.addf %83, %88 : vector<12x96xf32>
    %c4_63 = arith.constant 4 : index
    %c0_64 = arith.constant 0 : index
    %c0_65 = arith.constant 0 : index
    %90 = vector.load %arg1[%c4_63, %c0_64, %c0_65] : memref<5x84x96xbf16, #tpu.memory_space<vmem>>, vector<1x84x96xbf16>
    %91 = vector.shape_cast %90 : vector<1x84x96xbf16> to vector<84x96xbf16>
    %cst_66 = arith.constant dense<0.000000e+00> : vector<12x96xf32>
    %92 = tpu.matmul %65, %91, %cst_66 {dimension_numbers = #tpu.dot_dimension_numbers<[1], [0], [0], [1], [0, 0, 1, 1], [], []>} : vector<12x84xbf16>, vector<84x96xbf16>, vector<12x96xf32> -> vector<12x96xf32>
    %93 = arith.addf %87, %92 : vector<12x96xf32>
    %cst_67 = arith.constant dense<0.000000e+00> : vector<12x96xf32>
    %94 = tpu.matmul %67, %91, %cst_67 {dimension_numbers = #tpu.dot_dimension_numbers<[1], [0], [0], [1], [0, 0, 1, 1], [], []>} : vector<12x84xbf16>, vector<84x96xbf16>, vector<12x96xf32> -> vector<12x96xf32>
    %95 = arith.addf %89, %94 : vector<12x96xf32>
    %96 = arith.maximumf %93, %95 : vector<12x96xf32>
    %97 = vector.extract_strided_slice %96 {offsets = [0, 0], sizes = [12, 48], strides = [1, 1]} : vector<12x96xf32> to vector<12x48xf32>
    %98 = vector.extract_strided_slice %96 {offsets = [0, 48], sizes = [12, 48], strides = [1, 1]} : vector<12x96xf32> to vector<12x48xf32>
    %99 = arith.maximumf %97, %98 : vector<12x48xf32>
    %c0_68 = arith.constant 0 : index
    %c0_69 = arith.constant 0 : index
    %100 = vector.load %arg2[%c0_68, %c0_69] : memref<1x48xf32, #tpu.memory_space<vmem>>, vector<1x48xf32>
    %101 = vector.broadcast %100 : vector<1x48xf32> to vector<12x48xf32>
    %102 = arith.addf %99, %101 : vector<12x48xf32>
    %cst_70 = arith.constant 0.000000e+00 : f32
    %103 = vector.broadcast %cst_70 : f32 to vector<12x48xf32>
    %104 = arith.cmpf ogt, %102, %103 : vector<12x48xf32>
    %cst_71 = arith.constant 0.000000e+00 : f32
    %105 = vector.broadcast %cst_71 : f32 to vector<12x48xf32>
    %106 = arith.minimumf %102, %105 : vector<12x48xf32>
    %107 = math.exp %106 : vector<12x48xf32>
    %cst_72 = arith.constant 1.000000e+00 : f32
    %108 = vector.broadcast %cst_72 : f32 to vector<12x48xf32>
    %109 = arith.subf %107, %108 : vector<12x48xf32>
    %110 = arith.select %104, %102, %109 : vector<12x48xi1>, vector<12x48xf32>
    %c12 = arith.constant 12 : index
    %c0_73 = arith.constant 0 : index
    %111 = vector.load %arg11[%c12, %c0_73] : memref<24x48xf32, #tpu.memory_space<vmem>>, vector<12x48xf32>
    tpu.vector_store %arg11[%c12, %c0_73], %110 {strides = array<i32>} : memref<24x48xf32, #tpu.memory_space<vmem>>, vector<12x48xf32>,
    %c0_74 = arith.constant 0 : index
    %c0_75 = arith.constant 0 : index
    %112 = tpu.strided_load %arg11[%c0_74, %c0_75] {strides = array<i32: 2, 1>} : memref<24x48xf32, #tpu.memory_space<vmem>>, vector<5x48xf32>
    %113 = arith.truncf %112 : vector<5x48xf32> to vector<5x48xbf16>
    %c1_76 = arith.constant 1 : index
    %c0_77 = arith.constant 0 : index
    %114 = tpu.strided_load %arg11[%c1_76, %c0_77] {strides = array<i32: 2, 1>} : memref<24x48xf32, #tpu.memory_space<vmem>>, vector<5x48xf32>
    %115 = arith.truncf %114 : vector<5x48xf32> to vector<5x48xbf16>
    %c2_78 = arith.constant 2 : index
    %c0_79 = arith.constant 0 : index
    %116 = tpu.strided_load %arg11[%c2_78, %c0_79] {strides = array<i32: 2, 1>} : memref<24x48xf32, #tpu.memory_space<vmem>>, vector<5x48xf32>
    %117 = arith.truncf %116 : vector<5x48xf32> to vector<5x48xbf16>
    %c3_80 = arith.constant 3 : index
    %c0_81 = arith.constant 0 : index
    %118 = tpu.strided_load %arg11[%c3_80, %c0_81] {strides = array<i32: 2, 1>} : memref<24x48xf32, #tpu.memory_space<vmem>>, vector<5x48xf32>
    %119 = arith.truncf %118 : vector<5x48xf32> to vector<5x48xbf16>
    %c0_82 = arith.constant 0 : index
    %c0_83 = arith.constant 0 : index
    %c0_84 = arith.constant 0 : index
    %120 = vector.load %arg3[%c0_82, %c0_83, %c0_84] : memref<3x48x80xbf16, #tpu.memory_space<vmem>>, vector<1x48x80xbf16>
    %121 = vector.shape_cast %120 : vector<1x48x80xbf16> to vector<48x80xbf16>
    %cst_85 = arith.constant dense<0.000000e+00> : vector<5x80xf32>
    %122 = tpu.matmul %113, %121, %cst_85 {dimension_numbers = #tpu.dot_dimension_numbers<[1], [0], [0], [1], [0, 0, 1, 1], [], []>} : vector<5x48xbf16>, vector<48x80xbf16>, vector<5x80xf32> -> vector<5x80xf32>
    %cst_86 = arith.constant dense<0.000000e+00> : vector<5x80xf32>
    %123 = tpu.matmul %115, %121, %cst_86 {dimension_numbers = #tpu.dot_dimension_numbers<[1], [0], [0], [1], [0, 0, 1, 1], [], []>} : vector<5x48xbf16>, vector<48x80xbf16>, vector<5x80xf32> -> vector<5x80xf32>
    %c1_87 = arith.constant 1 : index
    %c0_88 = arith.constant 0 : index
    %c0_89 = arith.constant 0 : index
    %124 = vector.load %arg3[%c1_87, %c0_88, %c0_89] : memref<3x48x80xbf16, #tpu.memory_space<vmem>>, vector<1x48x80xbf16>
    %125 = vector.shape_cast %124 : vector<1x48x80xbf16> to vector<48x80xbf16>
    %cst_90 = arith.constant dense<0.000000e+00> : vector<5x80xf32>
    %126 = tpu.matmul %115, %125, %cst_90 {dimension_numbers = #tpu.dot_dimension_numbers<[1], [0], [0], [1], [0, 0, 1, 1], [], []>} : vector<5x48xbf16>, vector<48x80xbf16>, vector<5x80xf32> -> vector<5x80xf32>
    %127 = arith.addf %122, %126 : vector<5x80xf32>
    %cst_91 = arith.constant dense<0.000000e+00> : vector<5x80xf32>
    %128 = tpu.matmul %117, %125, %cst_91 {dimension_numbers = #tpu.dot_dimension_numbers<[1], [0], [0], [1], [0, 0, 1, 1], [], []>} : vector<5x48xbf16>, vector<48x80xbf16>, vector<5x80xf32> -> vector<5x80xf32>
    %129 = arith.addf %123, %128 : vector<5x80xf32>
    %c2_92 = arith.constant 2 : index
    %c0_93 = arith.constant 0 : index
    %c0_94 = arith.constant 0 : index
    %130 = vector.load %arg3[%c2_92, %c0_93, %c0_94] : memref<3x48x80xbf16, #tpu.memory_space<vmem>>, vector<1x48x80xbf16>
    %131 = vector.shape_cast %130 : vector<1x48x80xbf16> to vector<48x80xbf16>
    %cst_95 = arith.constant dense<0.000000e+00> : vector<5x80xf32>
    %132 = tpu.matmul %117, %131, %cst_95 {dimension_numbers = #tpu.dot_dimension_numbers<[1], [0], [0], [1], [0, 0, 1, 1], [], []>} : vector<5x48xbf16>, vector<48x80xbf16>, vector<5x80xf32> -> vector<5x80xf32>
    %133 = arith.addf %127, %132 : vector<5x80xf32>
    %cst_96 = arith.constant dense<0.000000e+00> : vector<5x80xf32>
    %134 = tpu.matmul %119, %131, %cst_96 {dimension_numbers = #tpu.dot_dimension_numbers<[1], [0], [0], [1], [0, 0, 1, 1], [], []>} : vector<5x48xbf16>, vector<48x80xbf16>, vector<5x80xf32> -> vector<5x80xf32>
    %135 = arith.addf %129, %134 : vector<5x80xf32>
    %136 = arith.maximumf %133, %135 : vector<5x80xf32>
    %137 = vector.extract_strided_slice %136 {offsets = [0, 0], sizes = [5, 40], strides = [1, 1]} : vector<5x80xf32> to vector<5x40xf32>
    %138 = vector.extract_strided_slice %136 {offsets = [0, 40], sizes = [5, 40], strides = [1, 1]} : vector<5x80xf32> to vector<5x40xf32>
    %139 = arith.maximumf %137, %138 : vector<5x40xf32>
    %c0_97 = arith.constant 0 : index
    %c0_98 = arith.constant 0 : index
    %140 = vector.load %arg4[%c0_97, %c0_98] : memref<1x40xf32, #tpu.memory_space<vmem>>, vector<1x40xf32>
    %141 = vector.broadcast %140 : vector<1x40xf32> to vector<5x40xf32>
    %142 = arith.addf %139, %141 : vector<5x40xf32>
    %cst_99 = arith.constant 0.000000e+00 : f32
    %143 = vector.broadcast %cst_99 : f32 to vector<5x40xf32>
    %144 = arith.cmpf ogt, %142, %143 : vector<5x40xf32>
    %cst_100 = arith.constant 0.000000e+00 : f32
    %145 = vector.broadcast %cst_100 : f32 to vector<5x40xf32>
    %146 = arith.minimumf %142, %145 : vector<5x40xf32>
    %147 = math.exp %146 : vector<5x40xf32>
    %cst_101 = arith.constant 1.000000e+00 : f32
    %148 = vector.broadcast %cst_101 : f32 to vector<5x40xf32>
    %149 = arith.subf %147, %148 : vector<5x40xf32>
    %150 = arith.select %144, %142, %149 : vector<5x40xi1>, vector<5x40xf32>
    %c0_102 = arith.constant 0 : index
    %c0_103 = arith.constant 0 : index
    %151 = vector.load %arg12[%c0_102, %c0_103] : memref<10x40xf32, #tpu.memory_space<vmem>>, vector<5x40xf32>
    tpu.vector_store %arg12[%c0_102, %c0_103], %150 {strides = array<i32>} : memref<10x40xf32, #tpu.memory_space<vmem>>, vector<5x40xf32>,
    %c12_104 = arith.constant 12 : index
    %c0_105 = arith.constant 0 : index
    %152 = tpu.strided_load %arg11[%c12_104, %c0_105] {strides = array<i32: 2, 1>} : memref<24x48xf32, #tpu.memory_space<vmem>>, vector<5x48xf32>
    %153 = arith.truncf %152 : vector<5x48xf32> to vector<5x48xbf16>
    %c13 = arith.constant 13 : index
    %c0_106 = arith.constant 0 : index
    %154 = tpu.strided_load %arg11[%c13, %c0_106] {strides = array<i32: 2, 1>} : memref<24x48xf32, #tpu.memory_space<vmem>>, vector<5x48xf32>
    %155 = arith.truncf %154 : vector<5x48xf32> to vector<5x48xbf16>
    %c14 = arith.constant 14 : index
    %c0_107 = arith.constant 0 : index
    %156 = tpu.strided_load %arg11[%c14, %c0_107] {strides = array<i32: 2, 1>} : memref<24x48xf32, #tpu.memory_space<vmem>>, vector<5x48xf32>
    %157 = arith.truncf %156 : vector<5x48xf32> to vector<5x48xbf16>
    %c15 = arith.constant 15 : index
    %c0_108 = arith.constant 0 : index
    %158 = tpu.strided_load %arg11[%c15, %c0_108] {strides = array<i32: 2, 1>} : memref<24x48xf32, #tpu.memory_space<vmem>>, vector<5x48xf32>
    %159 = arith.truncf %158 : vector<5x48xf32> to vector<5x48xbf16>
    %c0_109 = arith.constant 0 : index
    %c0_110 = arith.constant 0 : index
    %c0_111 = arith.constant 0 : index
    %160 = vector.load %arg3[%c0_109, %c0_110, %c0_111] : memref<3x48x80xbf16, #tpu.memory_space<vmem>>, vector<1x48x80xbf16>
    %161 = vector.shape_cast %160 : vector<1x48x80xbf16> to vector<48x80xbf16>
    %cst_112 = arith.constant dense<0.000000e+00> : vector<5x80xf32>
    %162 = tpu.matmul %153, %161, %cst_112 {dimension_numbers = #tpu.dot_dimension_numbers<[1], [0], [0], [1], [0, 0, 1, 1], [], []>} : vector<5x48xbf16>, vector<48x80xbf16>, vector<5x80xf32> -> vector<5x80xf32>
    %cst_113 = arith.constant dense<0.000000e+00> : vector<5x80xf32>
    %163 = tpu.matmul %155, %161, %cst_113 {dimension_numbers = #tpu.dot_dimension_numbers<[1], [0], [0], [1], [0, 0, 1, 1], [], []>} : vector<5x48xbf16>, vector<48x80xbf16>, vector<5x80xf32> -> vector<5x80xf32>
    %c1_114 = arith.constant 1 : index
    %c0_115 = arith.constant 0 : index
    %c0_116 = arith.constant 0 : index
    %164 = vector.load %arg3[%c1_114, %c0_115, %c0_116] : memref<3x48x80xbf16, #tpu.memory_space<vmem>>, vector<1x48x80xbf16>
    %165 = vector.shape_cast %164 : vector<1x48x80xbf16> to vector<48x80xbf16>
    %cst_117 = arith.constant dense<0.000000e+00> : vector<5x80xf32>
    %166 = tpu.matmul %155, %165, %cst_117 {dimension_numbers = #tpu.dot_dimension_numbers<[1], [0], [0], [1], [0, 0, 1, 1], [], []>} : vector<5x48xbf16>, vector<48x80xbf16>, vector<5x80xf32> -> vector<5x80xf32>
    %167 = arith.addf %162, %166 : vector<5x80xf32>
    %cst_118 = arith.constant dense<0.000000e+00> : vector<5x80xf32>
    %168 = tpu.matmul %157, %165, %cst_118 {dimension_numbers = #tpu.dot_dimension_numbers<[1], [0], [0], [1], [0, 0, 1, 1], [], []>} : vector<5x48xbf16>, vector<48x80xbf16>, vector<5x80xf32> -> vector<5x80xf32>
    %169 = arith.addf %163, %168 : vector<5x80xf32>
    %c2_119 = arith.constant 2 : index
    %c0_120 = arith.constant 0 : index
    %c0_121 = arith.constant 0 : index
    %170 = vector.load %arg3[%c2_119, %c0_120, %c0_121] : memref<3x48x80xbf16, #tpu.memory_space<vmem>>, vector<1x48x80xbf16>
    %171 = vector.shape_cast %170 : vector<1x48x80xbf16> to vector<48x80xbf16>
    %cst_122 = arith.constant dense<0.000000e+00> : vector<5x80xf32>
    %172 = tpu.matmul %157, %171, %cst_122 {dimension_numbers = #tpu.dot_dimension_numbers<[1], [0], [0], [1], [0, 0, 1, 1], [], []>} : vector<5x48xbf16>, vector<48x80xbf16>, vector<5x80xf32> -> vector<5x80xf32>
    %173 = arith.addf %167, %172 : vector<5x80xf32>
    %cst_123 = arith.constant dense<0.000000e+00> : vector<5x80xf32>
    %174 = tpu.matmul %159, %171, %cst_123 {dimension_numbers = #tpu.dot_dimension_numbers<[1], [0], [0], [1], [0, 0, 1, 1], [], []>} : vector<5x48xbf16>, vector<48x80xbf16>, vector<5x80xf32> -> vector<5x80xf32>
    %175 = arith.addf %169, %174 : vector<5x80xf32>
    %176 = arith.maximumf %173, %175 : vector<5x80xf32>
    %177 = vector.extract_strided_slice %176 {offsets = [0, 0], sizes = [5, 40], strides = [1, 1]} : vector<5x80xf32> to vector<5x40xf32>
    %178 = vector.extract_strided_slice %176 {offsets = [0, 40], sizes = [5, 40], strides = [1, 1]} : vector<5x80xf32> to vector<5x40xf32>
    %179 = arith.maximumf %177, %178 : vector<5x40xf32>
    %c0_124 = arith.constant 0 : index
    %c0_125 = arith.constant 0 : index
    %180 = vector.load %arg4[%c0_124, %c0_125] : memref<1x40xf32, #tpu.memory_space<vmem>>, vector<1x40xf32>
    %181 = vector.broadcast %180 : vector<1x40xf32> to vector<5x40xf32>
    %182 = arith.addf %179, %181 : vector<5x40xf32>
    %cst_126 = arith.constant 0.000000e+00 : f32
    %183 = vector.broadcast %cst_126 : f32 to vector<5x40xf32>
    %184 = arith.cmpf ogt, %182, %183 : vector<5x40xf32>
    %cst_127 = arith.constant 0.000000e+00 : f32
    %185 = vector.broadcast %cst_127 : f32 to vector<5x40xf32>
    %186 = arith.minimumf %182, %185 : vector<5x40xf32>
    %187 = math.exp %186 : vector<5x40xf32>
    %cst_128 = arith.constant 1.000000e+00 : f32
    %188 = vector.broadcast %cst_128 : f32 to vector<5x40xf32>
    %189 = arith.subf %187, %188 : vector<5x40xf32>
    %190 = arith.select %184, %182, %189 : vector<5x40xi1>, vector<5x40xf32>
    %c5_129 = arith.constant 5 : index
    %c0_130 = arith.constant 0 : index
    %191 = vector.load %arg12[%c5_129, %c0_130] : memref<10x40xf32, #tpu.memory_space<vmem>>, vector<5x40xf32>
    tpu.vector_store %arg12[%c5_129, %c0_130], %190 {strides = array<i32>} : memref<10x40xf32, #tpu.memory_space<vmem>>, vector<5x40xf32>,
    %c0_131 = arith.constant 0 : index
    %c0_132 = arith.constant 0 : index
    %192 = tpu.strided_load %arg12[%c0_131, %c0_132] {strides = array<i32: 2, 1>} : memref<10x40xf32, #tpu.memory_space<vmem>>, vector<2x40xf32>
    %193 = arith.truncf %192 : vector<2x40xf32> to vector<2x40xbf16>
    %c1_133 = arith.constant 1 : index
    %c0_134 = arith.constant 0 : index
    %194 = tpu.strided_load %arg12[%c1_133, %c0_134] {strides = array<i32: 2, 1>} : memref<10x40xf32, #tpu.memory_space<vmem>>, vector<2x40xf32>
    %195 = arith.truncf %194 : vector<2x40xf32> to vector<2x40xbf16>
    %c2_135 = arith.constant 2 : index
    %c0_136 = arith.constant 0 : index
    %196 = tpu.strided_load %arg12[%c2_135, %c0_136] {strides = array<i32: 2, 1>} : memref<10x40xf32, #tpu.memory_space<vmem>>, vector<2x40xf32>
    %197 = arith.truncf %196 : vector<2x40xf32> to vector<2x40xbf16>
    %c0_137 = arith.constant 0 : index
    %c0_138 = arith.constant 0 : index
    %c0_139 = arith.constant 0 : index
    %198 = vector.load %arg5[%c0_137, %c0_138, %c0_139] : memref<2x40x64xbf16, #tpu.memory_space<vmem>>, vector<1x40x64xbf16>
    %199 = vector.shape_cast %198 : vector<1x40x64xbf16> to vector<40x64xbf16>
    %cst_140 = arith.constant dense<0.000000e+00> : vector<2x64xf32>
    %200 = tpu.matmul %193, %199, %cst_140 {dimension_numbers = #tpu.dot_dimension_numbers<[1], [0], [0], [1], [0, 0, 1, 1], [], []>} : vector<2x40xbf16>, vector<40x64xbf16>, vector<2x64xf32> -> vector<2x64xf32>
    %cst_141 = arith.constant dense<0.000000e+00> : vector<2x64xf32>
    %201 = tpu.matmul %195, %199, %cst_141 {dimension_numbers = #tpu.dot_dimension_numbers<[1], [0], [0], [1], [0, 0, 1, 1], [], []>} : vector<2x40xbf16>, vector<40x64xbf16>, vector<2x64xf32> -> vector<2x64xf32>
    %c1_142 = arith.constant 1 : index
    %c0_143 = arith.constant 0 : index
    %c0_144 = arith.constant 0 : index
    %202 = vector.load %arg5[%c1_142, %c0_143, %c0_144] : memref<2x40x64xbf16, #tpu.memory_space<vmem>>, vector<1x40x64xbf16>
    %203 = vector.shape_cast %202 : vector<1x40x64xbf16> to vector<40x64xbf16>
    %cst_145 = arith.constant dense<0.000000e+00> : vector<2x64xf32>
    %204 = tpu.matmul %195, %203, %cst_145 {dimension_numbers = #tpu.dot_dimension_numbers<[1], [0], [0], [1], [0, 0, 1, 1], [], []>} : vector<2x40xbf16>, vector<40x64xbf16>, vector<2x64xf32> -> vector<2x64xf32>
    %205 = arith.addf %200, %204 : vector<2x64xf32>
    %cst_146 = arith.constant dense<0.000000e+00> : vector<2x64xf32>
    %206 = tpu.matmul %197, %203, %cst_146 {dimension_numbers = #tpu.dot_dimension_numbers<[1], [0], [0], [1], [0, 0, 1, 1], [], []>} : vector<2x40xbf16>, vector<40x64xbf16>, vector<2x64xf32> -> vector<2x64xf32>
    %207 = arith.addf %201, %206 : vector<2x64xf32>
    %208 = arith.maximumf %205, %207 : vector<2x64xf32>
    %209 = vector.extract_strided_slice %208 {offsets = [0, 0], sizes = [2, 32], strides = [1, 1]} : vector<2x64xf32> to vector<2x32xf32>
    %210 = vector.extract_strided_slice %208 {offsets = [0, 32], sizes = [2, 32], strides = [1, 1]} : vector<2x64xf32> to vector<2x32xf32>
    %211 = arith.maximumf %209, %210 : vector<2x32xf32>
    %c0_147 = arith.constant 0 : index
    %c0_148 = arith.constant 0 : index
    %212 = vector.load %arg6[%c0_147, %c0_148] : memref<1x32xf32, #tpu.memory_space<vmem>>, vector<1x32xf32>
    %213 = vector.broadcast %212 : vector<1x32xf32> to vector<2x32xf32>
    %214 = arith.addf %211, %213 : vector<2x32xf32>
    %cst_149 = arith.constant 0.000000e+00 : f32
    %215 = vector.broadcast %cst_149 : f32 to vector<2x32xf32>
    %216 = arith.cmpf ogt, %214, %215 : vector<2x32xf32>
    %cst_150 = arith.constant 0.000000e+00 : f32
    %217 = vector.broadcast %cst_150 : f32 to vector<2x32xf32>
    %218 = arith.minimumf %214, %217 : vector<2x32xf32>
    %219 = math.exp %218 : vector<2x32xf32>
    %cst_151 = arith.constant 1.000000e+00 : f32
    %220 = vector.broadcast %cst_151 : f32 to vector<2x32xf32>
    %221 = arith.subf %219, %220 : vector<2x32xf32>
    %222 = arith.select %216, %214, %221 : vector<2x32xi1>, vector<2x32xf32>
    %c0_152 = arith.constant 0 : index
    %c0_153 = arith.constant 0 : index
    %223 = vector.load %arg13[%c0_152, %c0_153] : memref<4x32xf32, #tpu.memory_space<vmem>>, vector<2x32xf32>
    tpu.vector_store %arg13[%c0_152, %c0_153], %222 {strides = array<i32>} : memref<4x32xf32, #tpu.memory_space<vmem>>, vector<2x32xf32>,
    %c5_154 = arith.constant 5 : index
    %c0_155 = arith.constant 0 : index
    %224 = tpu.strided_load %arg12[%c5_154, %c0_155] {strides = array<i32: 2, 1>} : memref<10x40xf32, #tpu.memory_space<vmem>>, vector<2x40xf32>
    %225 = arith.truncf %224 : vector<2x40xf32> to vector<2x40xbf16>
    %c6 = arith.constant 6 : index
    %c0_156 = arith.constant 0 : index
    %226 = tpu.strided_load %arg12[%c6, %c0_156] {strides = array<i32: 2, 1>} : memref<10x40xf32, #tpu.memory_space<vmem>>, vector<2x40xf32>
    %227 = arith.truncf %226 : vector<2x40xf32> to vector<2x40xbf16>
    %c7 = arith.constant 7 : index
    %c0_157 = arith.constant 0 : index
    %228 = tpu.strided_load %arg12[%c7, %c0_157] {strides = array<i32: 2, 1>} : memref<10x40xf32, #tpu.memory_space<vmem>>, vector<2x40xf32>
    %229 = arith.truncf %228 : vector<2x40xf32> to vector<2x40xbf16>
    %c0_158 = arith.constant 0 : index
    %c0_159 = arith.constant 0 : index
    %c0_160 = arith.constant 0 : index
    %230 = vector.load %arg5[%c0_158, %c0_159, %c0_160] : memref<2x40x64xbf16, #tpu.memory_space<vmem>>, vector<1x40x64xbf16>
    %231 = vector.shape_cast %230 : vector<1x40x64xbf16> to vector<40x64xbf16>
    %cst_161 = arith.constant dense<0.000000e+00> : vector<2x64xf32>
    %232 = tpu.matmul %225, %231, %cst_161 {dimension_numbers = #tpu.dot_dimension_numbers<[1], [0], [0], [1], [0, 0, 1, 1], [], []>} : vector<2x40xbf16>, vector<40x64xbf16>, vector<2x64xf32> -> vector<2x64xf32>
    %cst_162 = arith.constant dense<0.000000e+00> : vector<2x64xf32>
    %233 = tpu.matmul %227, %231, %cst_162 {dimension_numbers = #tpu.dot_dimension_numbers<[1], [0], [0], [1], [0, 0, 1, 1], [], []>} : vector<2x40xbf16>, vector<40x64xbf16>, vector<2x64xf32> -> vector<2x64xf32>
    %c1_163 = arith.constant 1 : index
    %c0_164 = arith.constant 0 : index
    %c0_165 = arith.constant 0 : index
    %234 = vector.load %arg5[%c1_163, %c0_164, %c0_165] : memref<2x40x64xbf16, #tpu.memory_space<vmem>>, vector<1x40x64xbf16>
    %235 = vector.shape_cast %234 : vector<1x40x64xbf16> to vector<40x64xbf16>
    %cst_166 = arith.constant dense<0.000000e+00> : vector<2x64xf32>
    %236 = tpu.matmul %227, %235, %cst_166 {dimension_numbers = #tpu.dot_dimension_numbers<[1], [0], [0], [1], [0, 0, 1, 1], [], []>} : vector<2x40xbf16>, vector<40x64xbf16>, vector<2x64xf32> -> vector<2x64xf32>
    %237 = arith.addf %232, %236 : vector<2x64xf32>
    %cst_167 = arith.constant dense<0.000000e+00> : vector<2x64xf32>
    %238 = tpu.matmul %229, %235, %cst_167 {dimension_numbers = #tpu.dot_dimension_numbers<[1], [0], [0], [1], [0, 0, 1, 1], [], []>} : vector<2x40xbf16>, vector<40x64xbf16>, vector<2x64xf32> -> vector<2x64xf32>
    %239 = arith.addf %233, %238 : vector<2x64xf32>
    %240 = arith.maximumf %237, %239 : vector<2x64xf32>
    %241 = vector.extract_strided_slice %240 {offsets = [0, 0], sizes = [2, 32], strides = [1, 1]} : vector<2x64xf32> to vector<2x32xf32>
    %242 = vector.extract_strided_slice %240 {offsets = [0, 32], sizes = [2, 32], strides = [1, 1]} : vector<2x64xf32> to vector<2x32xf32>
    %243 = arith.maximumf %241, %242 : vector<2x32xf32>
    %c0_168 = arith.constant 0 : index
    %c0_169 = arith.constant 0 : index
    %244 = vector.load %arg6[%c0_168, %c0_169] : memref<1x32xf32, #tpu.memory_space<vmem>>, vector<1x32xf32>
    %245 = vector.broadcast %244 : vector<1x32xf32> to vector<2x32xf32>
    %246 = arith.addf %243, %245 : vector<2x32xf32>
    %cst_170 = arith.constant 0.000000e+00 : f32
    %247 = vector.broadcast %cst_170 : f32 to vector<2x32xf32>
    %248 = arith.cmpf ogt, %246, %247 : vector<2x32xf32>
    %cst_171 = arith.constant 0.000000e+00 : f32
    %249 = vector.broadcast %cst_171 : f32 to vector<2x32xf32>
    %250 = arith.minimumf %246, %249 : vector<2x32xf32>
    %251 = math.exp %250 : vector<2x32xf32>
    %cst_172 = arith.constant 1.000000e+00 : f32
    %252 = vector.broadcast %cst_172 : f32 to vector<2x32xf32>
    %253 = arith.subf %251, %252 : vector<2x32xf32>
    %254 = arith.select %248, %246, %253 : vector<2x32xi1>, vector<2x32xf32>
    %c2_173 = arith.constant 2 : index
    %c0_174 = arith.constant 0 : index
    %255 = vector.load %arg13[%c2_173, %c0_174] : memref<4x32xf32, #tpu.memory_space<vmem>>, vector<2x32xf32>
    tpu.vector_store %arg13[%c2_173, %c0_174], %254 {strides = array<i32>} : memref<4x32xf32, #tpu.memory_space<vmem>>, vector<2x32xf32>,
    %c0_175 = arith.constant 0 : index
    %c0_176 = arith.constant 0 : index
    %256 = tpu.strided_load %arg13[%c0_175, %c0_176] {strides = array<i32: 2, 1>} : memref<4x32xf32, #tpu.memory_space<vmem>>, vector<2x32xf32>
    %257 = arith.truncf %256 : vector<2x32xf32> to vector<2x32xbf16>
    %c1_177 = arith.constant 1 : index
    %c0_178 = arith.constant 0 : index
    %258 = tpu.strided_load %arg13[%c1_177, %c0_178] {strides = array<i32: 2, 1>} : memref<4x32xf32, #tpu.memory_space<vmem>>, vector<2x32xf32>
    %259 = arith.truncf %258 : vector<2x32xf32> to vector<2x32xbf16>
    %c0_179 = arith.constant 0 : index
    %c0_180 = arith.constant 0 : index
    %c0_181 = arith.constant 0 : index
    %260 = vector.load %arg7[%c0_179, %c0_180, %c0_181] : memref<2x32x128xbf16, #tpu.memory_space<vmem>>, vector<1x32x128xbf16>
    %261 = vector.shape_cast %260 : vector<1x32x128xbf16> to vector<32x128xbf16>
    %cst_182 = arith.constant dense<0.000000e+00> : vector<2x128xf32>
    %262 = tpu.matmul %257, %261, %cst_182 {dimension_numbers = #tpu.dot_dimension_numbers<[1], [0], [0], [1], [0, 0, 1, 1], [], []>} : vector<2x32xbf16>, vector<32x128xbf16>, vector<2x128xf32> -> vector<2x128xf32>
    %c1_183 = arith.constant 1 : index
    %c0_184 = arith.constant 0 : index
    %c0_185 = arith.constant 0 : index
    %263 = vector.load %arg7[%c1_183, %c0_184, %c0_185] : memref<2x32x128xbf16, #tpu.memory_space<vmem>>, vector<1x32x128xbf16>
    %264 = vector.shape_cast %263 : vector<1x32x128xbf16> to vector<32x128xbf16>
    %cst_186 = arith.constant dense<0.000000e+00> : vector<2x128xf32>
    %265 = tpu.matmul %259, %264, %cst_186 {dimension_numbers = #tpu.dot_dimension_numbers<[1], [0], [0], [1], [0, 0, 1, 1], [], []>} : vector<2x32xbf16>, vector<32x128xbf16>, vector<2x128xf32> -> vector<2x128xf32>
    %266 = arith.addf %262, %265 : vector<2x128xf32>
    %c0_187 = arith.constant 0 : index
    %c0_188 = arith.constant 0 : index
    %c0_189 = arith.constant 0 : index
    %267 = vector.load %arg9[%c0_187, %c0_188, %c0_189] : memref<5x1x128xf32, #tpu.memory_space<vmem>>, vector<1x1x128xf32>
    %268 = vector.shape_cast %267 : vector<1x1x128xf32> to vector<1x128xf32>
    %269 = vector.broadcast %268 : vector<1x128xf32> to vector<2x128xf32>
    %270 = arith.addf %266, %269 : vector<2x128xf32>
    %cst_190 = arith.constant 0.000000e+00 : f32
    %271 = vector.broadcast %cst_190 : f32 to vector<2x128xf32>
    %272 = arith.cmpf ogt, %270, %271 : vector<2x128xf32>
    %cst_191 = arith.constant 0.000000e+00 : f32
    %273 = vector.broadcast %cst_191 : f32 to vector<2x128xf32>
    %274 = arith.minimumf %270, %273 : vector<2x128xf32>
    %275 = math.exp %274 : vector<2x128xf32>
    %cst_192 = arith.constant 1.000000e+00 : f32
    %276 = vector.broadcast %cst_192 : f32 to vector<2x128xf32>
    %277 = arith.subf %275, %276 : vector<2x128xf32>
    %278 = arith.select %272, %270, %277 : vector<2x128xi1>, vector<2x128xf32>
    %279 = arith.truncf %278 : vector<2x128xf32> to vector<2x128xbf16>
    %c0_193 = arith.constant 0 : index
    %c0_194 = arith.constant 0 : index
    %c0_195 = arith.constant 0 : index
    %280 = vector.load %arg8[%c0_193, %c0_194, %c0_195] : memref<4x128x128xbf16, #tpu.memory_space<vmem>>, vector<1x128x128xbf16>
    %281 = vector.shape_cast %280 : vector<1x128x128xbf16> to vector<128x128xbf16>
    %cst_196 = arith.constant dense<0.000000e+00> : vector<2x128xf32>
    %282 = tpu.matmul %279, %281, %cst_196 {dimension_numbers = #tpu.dot_dimension_numbers<[1], [0], [0], [1], [0, 0, 1, 1], [], []>} : vector<2x128xbf16>, vector<128x128xbf16>, vector<2x128xf32> -> vector<2x128xf32>
    %c1_197 = arith.constant 1 : index
    %c0_198 = arith.constant 0 : index
    %c0_199 = arith.constant 0 : index
    %283 = vector.load %arg9[%c1_197, %c0_198, %c0_199] : memref<5x1x128xf32, #tpu.memory_space<vmem>>, vector<1x1x128xf32>
    %284 = vector.shape_cast %283 : vector<1x1x128xf32> to vector<1x128xf32>
    %285 = vector.broadcast %284 : vector<1x128xf32> to vector<2x128xf32>
    %286 = arith.addf %282, %285 : vector<2x128xf32>
    %cst_200 = arith.constant 0.000000e+00 : f32
    %287 = vector.broadcast %cst_200 : f32 to vector<2x128xf32>
    %288 = arith.cmpf ogt, %286, %287 : vector<2x128xf32>
    %cst_201 = arith.constant 0.000000e+00 : f32
    %289 = vector.broadcast %cst_201 : f32 to vector<2x128xf32>
    %290 = arith.minimumf %286, %289 : vector<2x128xf32>
    %291 = math.exp %290 : vector<2x128xf32>
    %cst_202 = arith.constant 1.000000e+00 : f32
    %292 = vector.broadcast %cst_202 : f32 to vector<2x128xf32>
    %293 = arith.subf %291, %292 : vector<2x128xf32>
    %294 = arith.select %288, %286, %293 : vector<2x128xi1>, vector<2x128xf32>
    %295 = arith.truncf %294 : vector<2x128xf32> to vector<2x128xbf16>
    %c1_203 = arith.constant 1 : index
    %c0_204 = arith.constant 0 : index
    %c0_205 = arith.constant 0 : index
    %296 = vector.load %arg8[%c1_203, %c0_204, %c0_205] : memref<4x128x128xbf16, #tpu.memory_space<vmem>>, vector<1x128x128xbf16>
    %297 = vector.shape_cast %296 : vector<1x128x128xbf16> to vector<128x128xbf16>
    %cst_206 = arith.constant dense<0.000000e+00> : vector<2x128xf32>
    %298 = tpu.matmul %295, %297, %cst_206 {dimension_numbers = #tpu.dot_dimension_numbers<[1], [0], [0], [1], [0, 0, 1, 1], [], []>} : vector<2x128xbf16>, vector<128x128xbf16>, vector<2x128xf32> -> vector<2x128xf32>
    %c2_207 = arith.constant 2 : index
    %c0_208 = arith.constant 0 : index
    %c0_209 = arith.constant 0 : index
    %299 = vector.load %arg9[%c2_207, %c0_208, %c0_209] : memref<5x1x128xf32, #tpu.memory_space<vmem>>, vector<1x1x128xf32>
    %300 = vector.shape_cast %299 : vector<1x1x128xf32> to vector<1x128xf32>
    %301 = vector.broadcast %300 : vector<1x128xf32> to vector<2x128xf32>
    %302 = arith.addf %298, %301 : vector<2x128xf32>
    %cst_210 = arith.constant 0.000000e+00 : f32
    %303 = vector.broadcast %cst_210 : f32 to vector<2x128xf32>
    %304 = arith.cmpf ogt, %302, %303 : vector<2x128xf32>
    %cst_211 = arith.constant 0.000000e+00 : f32
    %305 = vector.broadcast %cst_211 : f32 to vector<2x128xf32>
    %306 = arith.minimumf %302, %305 : vector<2x128xf32>
    %307 = math.exp %306 : vector<2x128xf32>
    %cst_212 = arith.constant 1.000000e+00 : f32
    %308 = vector.broadcast %cst_212 : f32 to vector<2x128xf32>
    %309 = arith.subf %307, %308 : vector<2x128xf32>
    %310 = arith.select %304, %302, %309 : vector<2x128xi1>, vector<2x128xf32>
    %311 = arith.truncf %310 : vector<2x128xf32> to vector<2x128xbf16>
    %c2_213 = arith.constant 2 : index
    %c0_214 = arith.constant 0 : index
    %c0_215 = arith.constant 0 : index
    %312 = vector.load %arg8[%c2_213, %c0_214, %c0_215] : memref<4x128x128xbf16, #tpu.memory_space<vmem>>, vector<1x128x128xbf16>
    %313 = vector.shape_cast %312 : vector<1x128x128xbf16> to vector<128x128xbf16>
    %cst_216 = arith.constant dense<0.000000e+00> : vector<2x128xf32>
    %314 = tpu.matmul %311, %313, %cst_216 {dimension_numbers = #tpu.dot_dimension_numbers<[1], [0], [0], [1], [0, 0, 1, 1], [], []>} : vector<2x128xbf16>, vector<128x128xbf16>, vector<2x128xf32> -> vector<2x128xf32>
    %c3_217 = arith.constant 3 : index
    %c0_218 = arith.constant 0 : index
    %c0_219 = arith.constant 0 : index
    %315 = vector.load %arg9[%c3_217, %c0_218, %c0_219] : memref<5x1x128xf32, #tpu.memory_space<vmem>>, vector<1x1x128xf32>
    %316 = vector.shape_cast %315 : vector<1x1x128xf32> to vector<1x128xf32>
    %317 = vector.broadcast %316 : vector<1x128xf32> to vector<2x128xf32>
    %318 = arith.addf %314, %317 : vector<2x128xf32>
    %cst_220 = arith.constant 0.000000e+00 : f32
    %319 = vector.broadcast %cst_220 : f32 to vector<2x128xf32>
    %320 = arith.cmpf ogt, %318, %319 : vector<2x128xf32>
    %cst_221 = arith.constant 0.000000e+00 : f32
    %321 = vector.broadcast %cst_221 : f32 to vector<2x128xf32>
    %322 = arith.minimumf %318, %321 : vector<2x128xf32>
    %323 = math.exp %322 : vector<2x128xf32>
    %cst_222 = arith.constant 1.000000e+00 : f32
    %324 = vector.broadcast %cst_222 : f32 to vector<2x128xf32>
    %325 = arith.subf %323, %324 : vector<2x128xf32>
    %326 = arith.select %320, %318, %325 : vector<2x128xi1>, vector<2x128xf32>
    %327 = arith.truncf %326 : vector<2x128xf32> to vector<2x128xbf16>
    %c3_223 = arith.constant 3 : index
    %c0_224 = arith.constant 0 : index
    %c0_225 = arith.constant 0 : index
    %328 = vector.load %arg8[%c3_223, %c0_224, %c0_225] : memref<4x128x128xbf16, #tpu.memory_space<vmem>>, vector<1x128x128xbf16>
    %329 = vector.shape_cast %328 : vector<1x128x128xbf16> to vector<128x128xbf16>
    %cst_226 = arith.constant dense<0.000000e+00> : vector<2x128xf32>
    %330 = tpu.matmul %327, %329, %cst_226 {dimension_numbers = #tpu.dot_dimension_numbers<[1], [0], [0], [1], [0, 0, 1, 1], [], []>} : vector<2x128xbf16>, vector<128x128xbf16>, vector<2x128xf32> -> vector<2x128xf32>
    %c4_227 = arith.constant 4 : index
    %c0_228 = arith.constant 0 : index
    %c0_229 = arith.constant 0 : index
    %331 = vector.load %arg9[%c4_227, %c0_228, %c0_229] : memref<5x1x128xf32, #tpu.memory_space<vmem>>, vector<1x1x128xf32>
    %332 = vector.shape_cast %331 : vector<1x1x128xf32> to vector<1x128xf32>
    %333 = vector.broadcast %332 : vector<1x128xf32> to vector<2x128xf32>
    %334 = arith.addf %330, %333 : vector<2x128xf32>
    %c0_230 = arith.constant 0 : index
    %c0_231 = arith.constant 0 : index
    %335 = vector.load %arg10[%c0_230, %c0_231] : memref<2x128xf32, #tpu.memory_space<vmem>>, vector<2x128xf32>
    tpu.vector_store %arg10[%c0_230, %c0_231], %334 {strides = array<i32>} : memref<2x128xf32, #tpu.memory_space<vmem>>, vector<2x128xf32>,
    return
  }
}

</mosaic_0001>

<llo_original>
// kernel: net_forward.1
$region0: #{net_forward.1}
  #allocation0 [shape = 'u32[]', space=smem, size = 0x4, offset = 0x4, fixed_abs, tag = 'smem constant byte address 0x4 - core index']
  #allocation1 [shape = 'u32[144,128]{1,0:T(1,128)}', space=vmem, size = 0x12000, scoped, tag = 'internal scratch']
  #allocation2 [shape = 'f32[24,48]{1,0:T(8,128)}', space=vmem, size = 0x3000, scoped, tag = 'scratch operand']
  #allocation3 [shape = 'f32[10,40]{1,0:T(8,128)}', space=vmem, size = 0x2000, scoped, tag = 'scratch operand']
  #allocation4 [shape = 'f32[4,32]{1,0:T(4,128)}', space=vmem, size = 0x800, scoped, tag = 'scratch operand']
  %s0 = inlined_call_operand.vmem [shape: f32[56,84], index: 0, kind: input, shape index: {}]
  %s1 = inlined_call_operand.vmem [shape: bf16[5,84,96], index: 1, kind: input, shape index: {}]
  %s2 = inlined_call_operand.vmem [shape: f32[1,48], index: 2, kind: input, shape index: {}]
  %s3 = inlined_call_operand.vmem [shape: bf16[3,48,80], index: 3, kind: input, shape index: {}]
  %s4 = inlined_call_operand.vmem [shape: f32[1,40], index: 4, kind: input, shape index: {}]
  %s5 = inlined_call_operand.vmem [shape: bf16[2,40,64], index: 5, kind: input, shape index: {}]
  %s6 = inlined_call_operand.vmem [shape: f32[1,32], index: 6, kind: input, shape index: {}]
  %s7 = inlined_call_operand.vmem [shape: bf16[2,32,128], index: 7, kind: input, shape index: {}]
  %s8 = inlined_call_operand.vmem [shape: bf16[4,128,128], index: 8, kind: input, shape index: {}]
  %s9 = inlined_call_operand.vmem [shape: f32[5,1,128], index: 9, kind: input, shape index: {}]
  %s10 = inlined_call_operand.hbm [shape: f32[2,128], index: 10, kind: output, shape index: {}]
  %s11 = sld [smem:[#allocation0]]
  $region50: #{net_forward.1} parent=0
    _
  %s13 = ssub.s32 1, %s11
  %s14 = scalar_select 0, %s13, %s11
  $region1: #{net_forward.1} parent=0
    #allocation5 [shape = 'u8[1024]{0}', space=vmem, size = 0x400, scoped, tag = 'output window, operand 0, single buffered']
    #allocation6 [shape = 's32[1]{0}', space=sflag, size = 0x4, scoped, tag = 'scoped memory for net_forward.1']
    %15 = vsyncpa [#allocation6], 0
    // Predicated region
    $region2: #{net_forward.1} parent=1 // pred_check
      _
    $region3: #{net_forward.1} parent=1 // pred_check_branch
      %17 = sbr.rel (0) target = $region5
    $region4: #{net_forward.1} parent=1 // pred_region
      _
    $region5: #{net_forward.1} parent=1 // pred_fallthru
      _
    // Predicated region
    $region6: #{net_forward.1} parent=1 // pred_check
      _
    $region7: #{net_forward.1} parent=1 // pred_check_branch
      %19 = sbr.rel (0) target = $region9
    $region8: #{net_forward.1} parent=1 // pred_region
      _
    $region9: #{net_forward.1} parent=1 // pred_fallthru
      _
    // Predicated region
    $region10: #{net_forward.1} parent=1 // pred_check
      _
    $region11: #{net_forward.1} parent=1 // pred_check_branch
      %21 = sbr.rel (0) target = $region13
    $region12: #{net_forward.1} parent=1 // pred_region
      _
    $region13: #{net_forward.1} parent=1 // pred_fallthru
      _
    // Predicated region
    $region14: #{net_forward.1} parent=1 // pred_check
      _
    $region15: #{net_forward.1} parent=1 // pred_check_branch
      %23 = sbr.rel (0) target = $region17
    $region16: #{net_forward.1} parent=1 // pred_region
      _
    $region17: #{net_forward.1} parent=1 // pred_fallthru
      _
    // Predicated region
    $region18: #{net_forward.1} parent=1 // pred_check
      _
    $region19: #{net_forward.1} parent=1 // pred_check_branch
      %25 = sbr.rel (0) target = $region21
    $region20: #{net_forward.1} parent=1 // pred_region
      _
    $region21: #{net_forward.1} parent=1 // pred_fallthru
      _
    // Predicated region
    $region22: #{net_forward.1} parent=1 // pred_check
      _
    $region23: #{net_forward.1} parent=1 // pred_check_branch
      %27 = sbr.rel (0) target = $region25
    $region24: #{net_forward.1} parent=1 // pred_region
      _
    $region25: #{net_forward.1} parent=1 // pred_fallthru
      _
    // Predicated region
    $region26: #{net_forward.1} parent=1 // pred_check
      _
    $region27: #{net_forward.1} parent=1 // pred_check_branch
      %29 = sbr.rel (0) target = $region29
    $region28: #{net_forward.1} parent=1 // pred_region
      _
    $region29: #{net_forward.1} parent=1 // pred_fallthru
      _
    // Predicated region
    $region30: #{net_forward.1} parent=1 // pred_check
      _
    $region31: #{net_forward.1} parent=1 // pred_check_branch
      %31 = sbr.rel (0) target = $region33
    $region32: #{net_forward.1} parent=1 // pred_region
      _
    $region33: #{net_forward.1} parent=1 // pred_fallthru
      _
    // Predicated region
    $region34: #{net_forward.1} parent=1 // pred_check
      _
    $region35: #{net_forward.1} parent=1 // pred_check_branch
      %33 = sbr.rel (0) target = $region37
    $region36: #{net_forward.1} parent=1 // pred_region
      _
    $region37: #{net_forward.1} parent=1 // pred_fallthru
      _
    // Predicated region
    $region38: #{net_forward.1} parent=1 // pred_check
      _
    $region39: #{net_forward.1} parent=1 // pred_check_branch
      %35 = sbr.rel (0) target = $region41
    $region40: #{net_forward.1} parent=1 // pred_region
      _
    $region41: #{net_forward.1} parent=1 // pred_fallthru
      _
    %v37 = vld [vmem:[%s0] ss:$2 sm:$0xff]
    %s38 = scalar_lea.vmem %s0, 16
    %v39 = vld [vmem:[%s38] ss:$2 sm:$0xf]
    %v40 = vpack.c.bf16 %v39, %v37
    %s41 = scalar_lea.vmem %s0, 1
    %v42 = vld [vmem:[%s41] ss:$2 sm:$0xff]
    %s43 = scalar_lea.vmem %s0, 17
    %v44 = vld [vmem:[%s43] ss:$2 sm:$0xf]
    %v45 = vpack.c.bf16 %v44, %v42
    %s46 = scalar_lea.vmem %s0, 2
    %v47 = vld [vmem:[%s46] ss:$2 sm:$0xff]
    %s48 = scalar_lea.vmem %s0, 18
    %v49 = vld [vmem:[%s48] ss:$2 sm:$0xf]
    %v50 = vpack.c.bf16 %v49, %v47
    %s51 = scalar_lea.vmem %s0, 3
    %v52 = vld [vmem:[%s51] ss:$2 sm:$0xff]
    %s53 = scalar_lea.vmem %s0, 19
    %v54 = vld [vmem:[%s53] ss:$2 sm:$0xf]
    %v55 = vpack.c.bf16 %v54, %v52
    %s56 = scalar_lea.vmem %s0, 4
    %v57 = vld [vmem:[%s56] ss:$2 sm:$0xff]
    %s58 = scalar_lea.vmem %s0, 20
    %v59 = vld [vmem:[%s58] ss:$2 sm:$0xf]
    %v60 = vpack.c.bf16 %v59, %v57
    %s61 = scalar_lea.vmem %s0, 5
    %v62 = vld [vmem:[%s61] ss:$2 sm:$0xff]
    %s63 = scalar_lea.vmem %s0, 21
    %v64 = vld [vmem:[%s63] ss:$2 sm:$0xf]
    %v65 = vpack.c.bf16 %v64, %v62
    %v66 = vld [vmem:[%s1] sm:$0xf]
    %v67 = vld [vmem:[%s1 + $0x4] sm:$0xf]
    %v68 = vld [vmem:[%s1 + $0x8] sm:$0xf]
    %v69 = vld [vmem:[%s1 + $0xc] sm:$0xf]
    %v70 = vld [vmem:[%s1 + $0x10] sm:$0xf]
    %v71 = vld [vmem:[%s1 + $0x14] sm:$0xf]
    %v72 = vld [vmem:[%s1 + $0x18] sm:$0xf]
    %v73 = vld [vmem:[%s1 + $0x1c] sm:$0xf]
    %v74 = vld [vmem:[%s1 + $0x20] sm:$0xf]
    %v75 = vld [vmem:[%s1 + $0x24] sm:$0xf]
    %v76 = vld [vmem:[%s1 + $0x28] sm:$0x3]
    %s77 = scalar_lea.vmem %s1, 44
    %v78 = vld [vmem:[%s77] sm:$0xf]
    %v79 = vld [vmem:[%s77 + $0x4] sm:$0xf]
    %v80 = vld [vmem:[%s77 + $0x8] sm:$0xf]
    %v81 = vld [vmem:[%s77 + $0xc] sm:$0xf]
    %v82 = vld [vmem:[%s77 + $0x10] sm:$0xf]
    %v83 = vld [vmem:[%s77 + $0x14] sm:$0xf]
    %v84 = vld [vmem:[%s77 + $0x18] sm:$0xf]
    %v85 = vld [vmem:[%s77 + $0x1c] sm:$0xf]
    %v86 = vld [vmem:[%s77 + $0x20] sm:$0xf]
    %v87 = vld [vmem:[%s77 + $0x24] sm:$0xf]
    %v88 = vld [vmem:[%s77 + $0x28] sm:$0x3]
    %v100 = vunpack.c.l.b16 %v78
    %v101 = vunpack.c.l.b16 %v79
    %v102 = vunpack.c.l.b16 %v80
    %v103 = vunpack.c.l.b16 %v81
    %v104 = vunpack.c.l.b16 %v82
    %v105 = vunpack.c.l.b16 %v83
    %v106 = vunpack.c.l.b16 %v84
    %v107 = vunpack.c.l.b16 %v85
    %v108 = vunpack.c.l.b16 %v86
    %v109 = vunpack.c.l.b16 %v87
    %v110 = vunpack.c.l.b16 %v88
    %v111 = vpack.c.b16 %v101, %v100
    %v112 = vpack.c.b16 %v103, %v102
    %v113 = vpack.c.b16 %v105, %v104
    %v114 = vpack.c.b16 %v107, %v106
    %v115 = vpack.c.b16 %v109, %v108
    %v116 = vpack.c.b16 %v110, %v110
    %vm122 = vcmask 687104
    %v124 = vsel %vm122, %v45, 0
    %vm126 = vcmask 1041408
    %v128 = vsel %vm126, %v116, 0
    %130 = vmatprep.subr.bf16.mxu0 0
    %131 = vmatpush1.bf16.msra.mxu0 0
    %132 = vmatprep.subr.bf16.mxu0 0
    %133 = vmatpush1.bf16.msra.mxu0 0
    %134 = vmatprep.subr.bf16.mxu0 0
    %135 = vmatpush1.bf16.msra.mxu0 %v128
    %136 = vmatprep.subr.bf16.mxu0 0
    %137 = vmatpush1.bf16.msra.mxu0 %v115
    %138 = vmatprep.subr.bf16.mxu0 0
    %139 = vmatpush1.bf16.msra.mxu0 %v114
    %140 = vmatprep.subr.bf16.mxu0 0
    %141 = vmatpush1.bf16.msra.mxu0 %v113
    %142 = vmatprep.subr.bf16.mxu0 0
    %143 = vmatpush1.bf16.msra.mxu0 %v112
    %144 = vmatprep.subr.bf16.mxu0 0
    %145 = vmatpush1.bf16.msra.mxu0 %v111
    %146 = vmatprep.subr.bf16.mxu0 0
    %147 = vmatpush2.bf16.msra.mxu0 0
    %148 = vmatprep.subr.bf16.mxu0 0
    %149 = vmatpush2.bf16.msra.mxu0 0
    %150 = vmatprep.subr.bf16.mxu0 0
    %151 = vmatpush2.bf16.msra.mxu0 0
    %152 = vmatprep.subr.bf16.mxu0 0
    %153 = vmatpush2.bf16.msra.mxu0 0
    %154 = vmatprep.subr.bf16.mxu0 0
    %155 = vmatpush2.bf16.msra.mxu0 0
    %156 = vmatprep.subr.bf16.mxu0 0
    %157 = vmatpush2.bf16.msra.mxu0 0
    %158 = vmatprep.subr.bf16.mxu0 0
    %159 = vmatpush2.bf16.msra.mxu0 0
    %160 = vmatprep.subr.bf16.mxu0 0
    %161 = vmatpush2.bf16.msra.mxu0 0
    %162 = vmatprep.mubr.bf16.mxu0 0
    %163 = vmatmul.mubr.bf16.gmra.mxu0 %v124
    %v164 = vpop.f32.mrf.mxu0
    %v165 = vadd.f32 0.0, %v164
    %v166 = vpop.f32.mrf.mxu0
    %v167 = vpop.f32.mrf.mxu0
    %v168 = vadd.f32 0.0, %v167
    %v169 = vpop.f32.mrf.mxu0
    %170 = vdwg.mxu0
    %v182 = vunpack.c.l.b16 %v66
    %v183 = vunpack.c.l.b16 %v67
    %v184 = vunpack.c.l.b16 %v68
    %v185 = vunpack.c.l.b16 %v69
    %v186 = vunpack.c.l.b16 %v70
    %v187 = vunpack.c.l.b16 %v71
    %v188 = vunpack.c.l.b16 %v72
    %v189 = vunpack.c.l.b16 %v73
    %v190 = vunpack.c.l.b16 %v74
    %v191 = vunpack.c.l.b16 %v75
    %v192 = vunpack.c.l.b16 %v76
    %v193 = vpack.c.b16 %v183, %v182
    %v194 = vpack.c.b16 %v185, %v184
    %v195 = vpack.c.b16 %v187, %v186
    %v196 = vpack.c.b16 %v189, %v188
    %v197 = vpack.c.b16 %v191, %v190
    %v198 = vpack.c.b16 %v192, %v192
    %v205 = vsel %vm122, %v40, 0
    %v208 = vsel %vm126, %v198, 0
    %210 = vmatprep.subr.bf16.mxu0 0
    %211 = vmatpush1.bf16.msra.mxu0 0
    %212 = vmatprep.subr.bf16.mxu0 0
    %213 = vmatpush1.bf16.msra.mxu0 0
    %214 = vmatprep.subr.bf16.mxu0 0
    %215 = vmatpush1.bf16.msra.mxu0 %v208
    %216 = vmatprep.subr.bf16.mxu0 0
    %217 = vmatpush1.bf16.msra.mxu0 %v197
    %218 = vmatprep.subr.bf16.mxu0 0
    %219 = vmatpush1.bf16.msra.mxu0 %v196
    %220 = vmatprep.subr.bf16.mxu0 0
    %221 = vmatpush1.bf16.msra.mxu0 %v195
    %222 = vmatprep.subr.bf16.mxu0 0
    %223 = vmatpush1.bf16.msra.mxu0 %v194
    %224 = vmatprep.subr.bf16.mxu0 0
    %225 = vmatpush1.bf16.msra.mxu0 %v193
    %226 = vmatprep.subr.bf16.mxu0 0
    %227 = vmatpush2.bf16.msra.mxu0 0
    %228 = vmatprep.subr.bf16.mxu0 0
    %229 = vmatpush2.bf16.msra.mxu0 0
    %230 = vmatprep.subr.bf16.mxu0 0
    %231 = vmatpush2.bf16.msra.mxu0 0
    %232 = vmatprep.subr.bf16.mxu0 0
    %233 = vmatpush2.bf16.msra.mxu0 0
    %234 = vmatprep.subr.bf16.mxu0 0
    %235 = vmatpush2.bf16.msra.mxu0 0
    %236 = vmatprep.subr.bf16.mxu0 0
    %237 = vmatpush2.bf16.msra.mxu0 0
    %238 = vmatprep.subr.bf16.mxu0 0
    %239 = vmatpush2.bf16.msra.mxu0 0
    %240 = vmatprep.subr.bf16.mxu0 0
    %241 = vmatpush2.bf16.msra.mxu0 0
    %242 = vmatprep.mubr.bf16.mxu0 0
    %243 = vmatmul.mubr.bf16.gmra.mxu0 %v205
    %v244 = vpop.f32.mrf.mxu0
    %v245 = vadd.f32 %v165, %v244
    %v246 = vpop.f32.mrf.mxu0
    %v247 = vpop.f32.mrf.mxu0
    %v248 = vadd.f32 %v168, %v247
    %v249 = vpop.f32.mrf.mxu0
    %250 = vdwg.mxu0
    %v252 = vsel %vm122, %v50, 0
    %254 = vmatprep.subr.bf16.mxu0 0
    %255 = vmatpush1.bf16.msra.mxu0 0
    %256 = vmatprep.subr.bf16.mxu0 0
    %257 = vmatpush1.bf16.msra.mxu0 0
    %258 = vmatprep.subr.bf16.mxu0 0
    %259 = vmatpush1.bf16.msra.mxu0 %v128
    %260 = vmatprep.subr.bf16.mxu0 0
    %261 = vmatpush1.bf16.msra.mxu0 %v115
    %262 = vmatprep.subr.bf16.mxu0 0
    %263 = vmatpush1.bf16.msra.mxu0 %v114
    %264 = vmatprep.subr.bf16.mxu0 0
    %265 = vmatpush1.bf16.msra.mxu0 %v113
    %266 = vmatprep.subr.bf16.mxu0 0
    %267 = vmatpush1.bf16.msra.mxu0 %v112
    %268 = vmatprep.subr.bf16.mxu0 0
    %269 = vmatpush1.bf16.msra.mxu0 %v111
    %270 = vmatprep.subr.bf16.mxu0 0
    %271 = vmatpush2.bf16.msra.mxu0 0
    %272 = vmatprep.subr.bf16.mxu0 0
    %273 = vmatpush2.bf16.msra.mxu0 0
    %274 = vmatprep.subr.bf16.mxu0 0
    %275 = vmatpush2.bf16.msra.mxu0 0
    %276 = vmatprep.subr.bf16.mxu0 0
    %277 = vmatpush2.bf16.msra.mxu0 0
    %278 = vmatprep.subr.bf16.mxu0 0
    %279 = vmatpush2.bf16.msra.mxu0 0
    %280 = vmatprep.subr.bf16.mxu0 0
    %281 = vmatpush2.bf16.msra.mxu0 0
    %282 = vmatprep.subr.bf16.mxu0 0
    %283 = vmatpush2.bf16.msra.mxu0 0
    %284 = vmatprep.subr.bf16.mxu0 0
    %285 = vmatpush2.bf16.msra.mxu0 0
    %286 = vmatprep.mubr.bf16.mxu0 0
    %287 = vmatmul.mubr.bf16.gmra.mxu0 %v252
    %v288 = vpop.f32.mrf.mxu0
    %v289 = vadd.f32 0.0, %v288
    %v290 = vpop.f32.mrf.mxu0
    %v291 = vpop.f32.mrf.mxu0
    %v292 = vadd.f32 0.0, %v291
    %v293 = vpop.f32.mrf.mxu0
    %294 = vdwg.mxu0
    %295 = vmatprep.subr.bf16.mxu0 0
    %296 = vmatpush1.bf16.msra.mxu0 0
    %297 = vmatprep.subr.bf16.mxu0 0
    %298 = vmatpush1.bf16.msra.mxu0 0
    %299 = vmatprep.subr.bf16.mxu0 0
    %300 = vmatpush1.bf16.msra.mxu0 %v208
    %301 = vmatprep.subr.bf16.mxu0 0
    %302 = vmatpush1.bf16.msra.mxu0 %v197
    %303 = vmatprep.subr.bf16.mxu0 0
    %304 = vmatpush1.bf16.msra.mxu0 %v196
    %305 = vmatprep.subr.bf16.mxu0 0
    %306 = vmatpush1.bf16.msra.mxu0 %v195
    %307 = vmatprep.subr.bf16.mxu0 0
    %308 = vmatpush1.bf16.msra.mxu0 %v194
    %309 = vmatprep.subr.bf16.mxu0 0
    %310 = vmatpush1.bf16.msra.mxu0 %v193
    %311 = vmatprep.subr.bf16.mxu0 0
    %312 = vmatpush2.bf16.msra.mxu0 0
    %313 = vmatprep.subr.bf16.mxu0 0
    %314 = vmatpush2.bf16.msra.mxu0 0
    %315 = vmatprep.subr.bf16.mxu0 0
    %316 = vmatpush2.bf16.msra.mxu0 0
    %317 = vmatprep.subr.bf16.mxu0 0
    %318 = vmatpush2.bf16.msra.mxu0 0
    %319 = vmatprep.subr.bf16.mxu0 0
    %320 = vmatpush2.bf16.msra.mxu0 0
    %321 = vmatprep.subr.bf16.mxu0 0
    %322 = vmatpush2.bf16.msra.mxu0 0
    %323 = vmatprep.subr.bf16.mxu0 0
    %324 = vmatpush2.bf16.msra.mxu0 0
    %325 = vmatprep.subr.bf16.mxu0 0
    %326 = vmatpush2.bf16.msra.mxu0 0
    %327 = vmatprep.mubr.bf16.mxu0 0
    %328 = vmatmul.mubr.bf16.gmra.mxu0 %v124
    %v329 = vpop.f32.mrf.mxu0
    %v330 = vadd.f32 %v289, %v329
    %v331 = vpop.f32.mrf.mxu0
    %v332 = vpop.f32.mrf.mxu0
    %v333 = vadd.f32 %v292, %v332
    %v334 = vpop.f32.mrf.mxu0
    %335 = vdwg.mxu0
    %s336 = scalar_lea.vmem %s1, 88
    %v337 = vld [vmem:[%s336] sm:$0xf]
    %v338 = vld [vmem:[%s336 + $0x4] sm:$0xf]
    %v339 = vld [vmem:[%s336 + $0x8] sm:$0xf]
    %v340 = vld [vmem:[%s336 + $0xc] sm:$0xf]
    %v341 = vld [vmem:[%s336 + $0x10] sm:$0xf]
    %v342 = vld [vmem:[%s336 + $0x14] sm:$0xf]
    %v343 = vld [vmem:[%s336 + $0x18] sm:$0xf]
    %v344 = vld [vmem:[%s336 + $0x1c] sm:$0xf]
    %v345 = vld [vmem:[%s336 + $0x20] sm:$0xf]
    %v346 = vld [vmem:[%s336 + $0x24] sm:$0xf]
    %v347 = vld [vmem:[%s336 + $0x28] sm:$0x3]
    %v359 = vunpack.c.l.b16 %v337
    %v360 = vunpack.c.l.b16 %v338
    %v361 = vunpack.c.l.b16 %v339
    %v362 = vunpack.c.l.b16 %v340
    %v363 = vunpack.c.l.b16 %v341
    %v364 = vunpack.c.l.b16 %v342
    %v365 = vunpack.c.l.b16 %v343
    %v366 = vunpack.c.l.b16 %v344
    %v367 = vunpack.c.l.b16 %v345
    %v368 = vunpack.c.l.b16 %v346
    %v369 = vunpack.c.l.b16 %v347
    %v370 = vpack.c.b16 %v360, %v359
    %v371 = vpack.c.b16 %v362, %v361
    %v372 = vpack.c.b16 %v364, %v363
    %v373 = vpack.c.b16 %v366, %v365
    %v374 = vpack.c.b16 %v368, %v367
    %v375 = vpack.c.b16 %v369, %v369
    %v382 = vsel %vm126, %v375, 0
    %384 = vmatprep.subr.bf16.mxu0 0
    %385 = vmatpush1.bf16.msra.mxu0 0
    %386 = vmatprep.subr.bf16.mxu0 0
    %387 = vmatpush1.bf16.msra.mxu0 0
    %388 = vmatprep.subr.bf16.mxu0 0
    %389 = vmatpush1.bf16.msra.mxu0 %v382
    %390 = vmatprep.subr.bf16.mxu0 0
    %391 = vmatpush1.bf16.msra.mxu0 %v374
    %392 = vmatprep.subr.bf16.mxu0 0
    %393 = vmatpush1.bf16.msra.mxu0 %v373
    %394 = vmatprep.subr.bf16.mxu0 0
    %395 = vmatpush1.bf16.msra.mxu0 %v372
    %396 = vmatprep.subr.bf16.mxu0 0
    %397 = vmatpush1.bf16.msra.mxu0 %v371
    %398 = vmatprep.subr.bf16.mxu0 0
    %399 = vmatpush1.bf16.msra.mxu0 %v370
    %400 = vmatprep.subr.bf16.mxu0 0
    %401 = vmatpush2.bf16.msra.mxu0 0
    %402 = vmatprep.subr.bf16.mxu0 0
    %403 = vmatpush2.bf16.msra.mxu0 0
    %404 = vmatprep.subr.bf16.mxu0 0
    %405 = vmatpush2.bf16.msra.mxu0 0
    %406 = vmatprep.subr.bf16.mxu0 0
    %407 = vmatpush2.bf16.msra.mxu0 0
    %408 = vmatprep.subr.bf16.mxu0 0
    %409 = vmatpush2.bf16.msra.mxu0 0
    %410 = vmatprep.subr.bf16.mxu0 0
    %411 = vmatpush2.bf16.msra.mxu0 0
    %412 = vmatprep.subr.bf16.mxu0 0
    %413 = vmatpush2.bf16.msra.mxu0 0
    %414 = vmatprep.subr.bf16.mxu0 0
    %415 = vmatpush2.bf16.msra.mxu0 0
    %416 = vmatprep.mubr.bf16.mxu0 0
    %417 = vmatmul.mubr.bf16.gmra.mxu0 %v252
    %v418 = vpop.f32.mrf.mxu0
    %v419 = vadd.f32 0.0, %v418
    %v420 = vpop.f32.mrf.mxu0
    %v421 = vpop.f32.mrf.mxu0
    %v422 = vadd.f32 0.0, %v421
    %v423 = vpop.f32.mrf.mxu0
    %424 = vdwg.mxu0
    %v425 = vadd.f32 %v245, %v419
    %v426 = vadd.f32 %v248, %v422
    %v428 = vsel %vm122, %v55, 0
    %430 = vmatprep.subr.bf16.mxu0 0
    %431 = vmatpush1.bf16.msra.mxu0 0
    %432 = vmatprep.subr.bf16.mxu0 0
    %433 = vmatpush1.bf16.msra.mxu0 0
    %434 = vmatprep.subr.bf16.mxu0 0
    %435 = vmatpush1.bf16.msra.mxu0 %v382
    %436 = vmatprep.subr.bf16.mxu0 0
    %437 = vmatpush1.bf16.msra.mxu0 %v374
    %438 = vmatprep.subr.bf16.mxu0 0
    %439 = vmatpush1.bf16.msra.mxu0 %v373
    %440 = vmatprep.subr.bf16.mxu0 0
    %441 = vmatpush1.bf16.msra.mxu0 %v372
    %442 = vmatprep.subr.bf16.mxu0 0
    %443 = vmatpush1.bf16.msra.mxu0 %v371
    %444 = vmatprep.subr.bf16.mxu0 0
    %445 = vmatpush1.bf16.msra.mxu0 %v370
    %446 = vmatprep.subr.bf16.mxu0 0
    %447 = vmatpush2.bf16.msra.mxu0 0
    %448 = vmatprep.subr.bf16.mxu0 0
    %449 = vmatpush2.bf16.msra.mxu0 0
    %450 = vmatprep.subr.bf16.mxu0 0
    %451 = vmatpush2.bf16.msra.mxu0 0
    %452 = vmatprep.subr.bf16.mxu0 0
    %453 = vmatpush2.bf16.msra.mxu0 0
    %454 = vmatprep.subr.bf16.mxu0 0
    %455 = vmatpush2.bf16.msra.mxu0 0
    %456 = vmatprep.subr.bf16.mxu0 0
    %457 = vmatpush2.bf16.msra.mxu0 0
    %458 = vmatprep.subr.bf16.mxu0 0
    %459 = vmatpush2.bf16.msra.mxu0 0
    %460 = vmatprep.subr.bf16.mxu0 0
    %461 = vmatpush2.bf16.msra.mxu0 0
    %462 = vmatprep.mubr.bf16.mxu0 0
    %463 = vmatmul.mubr.bf16.gmra.mxu0 %v428
    %v464 = vpop.f32.mrf.mxu0
    %v465 = vadd.f32 0.0, %v464
    %v466 = vpop.f32.mrf.mxu0
    %v467 = vpop.f32.mrf.mxu0
    %v468 = vadd.f32 0.0, %v467
    %v469 = vpop.f32.mrf.mxu0
    %470 = vdwg.mxu0
    %v471 = vadd.f32 %v330, %v465
    %v472 = vadd.f32 %v333, %v468
    %s473 = scalar_lea.vmem %s1, 132
    %v474 = vld [vmem:[%s473] sm:$0xf]
    %v475 = vld [vmem:[%s473 + $0x4] sm:$0xf]
    %v476 = vld [vmem:[%s473 + $0x8] sm:$0xf]
    %v477 = vld [vmem:[%s473 + $0xc] sm:$0xf]
    %v478 = vld [vmem:[%s473 + $0x10] sm:$0xf]
    %v479 = vld [vmem:[%s473 + $0x14] sm:$0xf]
    %v480 = vld [vmem:[%s473 + $0x18] sm:$0xf]
    %v481 = vld [vmem:[%s473 + $0x1c] sm:$0xf]
    %v482 = vld [vmem:[%s473 + $0x20] sm:$0xf]
    %v483 = vld [vmem:[%s473 + $0x24] sm:$0xf]
    %v484 = vld [vmem:[%s473 + $0x28] sm:$0x3]
    %v496 = vunpack.c.l.b16 %v474
    %v497 = vunpack.c.l.b16 %v475
    %v498 = vunpack.c.l.b16 %v476
    %v499 = vunpack.c.l.b16 %v477
    %v500 = vunpack.c.l.b16 %v478
    %v501 = vunpack.c.l.b16 %v479
    %v502 = vunpack.c.l.b16 %v480
    %v503 = vunpack.c.l.b16 %v481
    %v504 = vunpack.c.l.b16 %v482
    %v505 = vunpack.c.l.b16 %v483
    %v506 = vunpack.c.l.b16 %v484
    %v507 = vpack.c.b16 %v497, %v496
    %v508 = vpack.c.b16 %v499, %v498
    %v509 = vpack.c.b16 %v501, %v500
    %v510 = vpack.c.b16 %v503, %v502
    %v511 = vpack.c.b16 %v505, %v504
    %v512 = vpack.c.b16 %v506, %v506
    %v519 = vsel %vm126, %v512, 0
    %521 = vmatprep.subr.bf16.mxu0 0
    %522 = vmatpush1.bf16.msra.mxu0 0
    %523 = vmatprep.subr.bf16.mxu0 0
    %524 = vmatpush1.bf16.msra.mxu0 0
    %525 = vmatprep.subr.bf16.mxu0 0
    %526 = vmatpush1.bf16.msra.mxu0 %v519
    %527 = vmatprep.subr.bf16.mxu0 0
    %528 = vmatpush1.bf16.msra.mxu0 %v511
    %529 = vmatprep.subr.bf16.mxu0 0
    %530 = vmatpush1.bf16.msra.mxu0 %v510
    %531 = vmatprep.subr.bf16.mxu0 0
    %532 = vmatpush1.bf16.msra.mxu0 %v509
    %533 = vmatprep.subr.bf16.mxu0 0
    %534 = vmatpush1.bf16.msra.mxu0 %v508
    %535 = vmatprep.subr.bf16.mxu0 0
    %536 = vmatpush1.bf16.msra.mxu0 %v507
    %537 = vmatprep.subr.bf16.mxu0 0
    %538 = vmatpush2.bf16.msra.mxu0 0
    %539 = vmatprep.subr.bf16.mxu0 0
    %540 = vmatpush2.bf16.msra.mxu0 0
    %541 = vmatprep.subr.bf16.mxu0 0
    %542 = vmatpush2.bf16.msra.mxu0 0
    %543 = vmatprep.subr.bf16.mxu0 0
    %544 = vmatpush2.bf16.msra.mxu0 0
    %545 = vmatprep.subr.bf16.mxu0 0
    %546 = vmatpush2.bf16.msra.mxu0 0
    %547 = vmatprep.subr.bf16.mxu0 0
    %548 = vmatpush2.bf16.msra.mxu0 0
    %549 = vmatprep.subr.bf16.mxu0 0
    %550 = vmatpush2.bf16.msra.mxu0 0
    %551 = vmatprep.subr.bf16.mxu0 0
    %552 = vmatpush2.bf16.msra.mxu0 0
    %553 = vmatprep.mubr.bf16.mxu0 0
    %554 = vmatmul.mubr.bf16.gmra.mxu0 %v428
    %v555 = vpop.f32.mrf.mxu0
    %v556 = vadd.f32 0.0, %v555
    %v557 = vpop.f32.mrf.mxu0
    %v558 = vpop.f32.mrf.mxu0
    %v559 = vadd.f32 0.0, %v558
    %v560 = vpop.f32.mrf.mxu0
    %561 = vdwg.mxu0
    %v562 = vadd.f32 %v425, %v556
    %v563 = vadd.f32 %v426, %v559
    %v565 = vsel %vm122, %v60, 0
    %567 = vmatprep.subr.bf16.mxu0 0
    %568 = vmatpush1.bf16.msra.mxu0 0
    %569 = vmatprep.subr.bf16.mxu0 0
    %570 = vmatpush1.bf16.msra.mxu0 0
    %571 = vmatprep.subr.bf16.mxu0 0
    %572 = vmatpush1.bf16.msra.mxu0 %v519
    %573 = vmatprep.subr.bf16.mxu0 0
    %574 = vmatpush1.bf16.msra.mxu0 %v511
    %575 = vmatprep.subr.bf16.mxu0 0
    %576 = vmatpush1.bf16.msra.mxu0 %v510
    %577 = vmatprep.subr.bf16.mxu0 0
    %578 = vmatpush1.bf16.msra.mxu0 %v509
    %579 = vmatprep.subr.bf16.mxu0 0
    %580 = vmatpush1.bf16.msra.mxu0 %v508
    %581 = vmatprep.subr.bf16.mxu0 0
    %582 = vmatpush1.bf16.msra.mxu0 %v507
    %583 = vmatprep.subr.bf16.mxu0 0
    %584 = vmatpush2.bf16.msra.mxu0 0
    %585 = vmatprep.subr.bf16.mxu0 0
    %586 = vmatpush2.bf16.msra.mxu0 0
    %587 = vmatprep.subr.bf16.mxu0 0
    %588 = vmatpush2.bf16.msra.mxu0 0
    %589 = vmatprep.subr.bf16.mxu0 0
    %590 = vmatpush2.bf16.msra.mxu0 0
    %591 = vmatprep.subr.bf16.mxu0 0
    %592 = vmatpush2.bf16.msra.mxu0 0
    %593 = vmatprep.subr.bf16.mxu0 0
    %594 = vmatpush2.bf16.msra.mxu0 0
    %595 = vmatprep.subr.bf16.mxu0 0
    %596 = vmatpush2.bf16.msra.mxu0 0
    %597 = vmatprep.subr.bf16.mxu0 0
    %598 = vmatpush2.bf16.msra.mxu0 0
    %599 = vmatprep.mubr.bf16.mxu0 0
    %600 = vmatmul.mubr.bf16.gmra.mxu0 %v565
    %v601 = vpop.f32.mrf.mxu0
    %v602 = vadd.f32 0.0, %v601
    %v603 = vpop.f32.mrf.mxu0
    %v604 = vpop.f32.mrf.mxu0
    %v605 = vadd.f32 0.0, %v604
    %v606 = vpop.f32.mrf.mxu0
    %607 = vdwg.mxu0
    %v608 = vadd.f32 %v471, %v602
    %v609 = vadd.f32 %v472, %v605
    %s610 = scalar_lea.vmem %s1, 176
    %v611 = vld [vmem:[%s610] sm:$0xf]
    %v612 = vld [vmem:[%s610 + $0x4] sm:$0xf]
    %v613 = vld [vmem:[%s610 + $0x8] sm:$0xf]
    %v614 = vld [vmem:[%s610 + $0xc] sm:$0xf]
    %v615 = vld [vmem:[%s610 + $0x10] sm:$0xf]
    %v616 = vld [vmem:[%s610 + $0x14] sm:$0xf]
    %v617 = vld [vmem:[%s610 + $0x18] sm:$0xf]
    %v618 = vld [vmem:[%s610 + $0x1c] sm:$0xf]
    %v619 = vld [vmem:[%s610 + $0x20] sm:$0xf]
    %v620 = vld [vmem:[%s610 + $0x24] sm:$0xf]
    %v621 = vld [vmem:[%s610 + $0x28] sm:$0x3]
    %v633 = vunpack.c.l.b16 %v611
    %v634 = vunpack.c.l.b16 %v612
    %v635 = vunpack.c.l.b16 %v613
    %v636 = vunpack.c.l.b16 %v614
    %v637 = vunpack.c.l.b16 %v615
    %v638 = vunpack.c.l.b16 %v616
    %v639 = vunpack.c.l.b16 %v617
    %v640 = vunpack.c.l.b16 %v618
    %v641 = vunpack.c.l.b16 %v619
    %v642 = vunpack.c.l.b16 %v620
    %v643 = vunpack.c.l.b16 %v621
    %v644 = vpack.c.b16 %v634, %v633
    %v645 = vpack.c.b16 %v636, %v635
    %v646 = vpack.c.b16 %v638, %v637
    %v647 = vpack.c.b16 %v640, %v639
    %v648 = vpack.c.b16 %v642, %v641
    %v649 = vpack.c.b16 %v643, %v643
    %v656 = vsel %vm126, %v649, 0
    %658 = vmatprep.subr.bf16.mxu0 0
    %659 = vmatpush1.bf16.msra.mxu0 0
    %660 = vmatprep.subr.bf16.mxu0 0
    %661 = vmatpush1.bf16.msra.mxu0 0
    %662 = vmatprep.subr.bf16.mxu0 0
    %663 = vmatpush1.bf16.msra.mxu0 %v656
    %664 = vmatprep.subr.bf16.mxu0 0
    %665 = vmatpush1.bf16.msra.mxu0 %v648
    %666 = vmatprep.subr.bf16.mxu0 0
    %667 = vmatpush1.bf16.msra.mxu0 %v647
    %668 = vmatprep.subr.bf16.mxu0 0
    %669 = vmatpush1.bf16.msra.mxu0 %v646
    %670 = vmatprep.subr.bf16.mxu0 0
    %671 = vmatpush1.bf16.msra.mxu0 %v645
    %672 = vmatprep.subr.bf16.mxu0 0
    %673 = vmatpush1.bf16.msra.mxu0 %v644
    %674 = vmatprep.subr.bf16.mxu0 0
    %675 = vmatpush2.bf16.msra.mxu0 0
    %676 = vmatprep.subr.bf16.mxu0 0
    %677 = vmatpush2.bf16.msra.mxu0 0
    %678 = vmatprep.subr.bf16.mxu0 0
    %679 = vmatpush2.bf16.msra.mxu0 0
    %680 = vmatprep.subr.bf16.mxu0 0
    %681 = vmatpush2.bf16.msra.mxu0 0
    %682 = vmatprep.subr.bf16.mxu0 0
    %683 = vmatpush2.bf16.msra.mxu0 0
    %684 = vmatprep.subr.bf16.mxu0 0
    %685 = vmatpush2.bf16.msra.mxu0 0
    %686 = vmatprep.subr.bf16.mxu0 0
    %687 = vmatpush2.bf16.msra.mxu0 0
    %688 = vmatprep.subr.bf16.mxu0 0
    %689 = vmatpush2.bf16.msra.mxu0 0
    %690 = vmatprep.mubr.bf16.mxu0 0
    %691 = vmatmul.mubr.bf16.gmra.mxu0 %v565
    %v692 = vpop.f32.mrf.mxu0
    %v693 = vadd.f32 0.0, %v692
    %v694 = vpop.f32.mrf.mxu0
    %v695 = vpop.f32.mrf.mxu0
    %v696 = vadd.f32 0.0, %v695
    %v697 = vpop.f32.mrf.mxu0
    %698 = vdwg.mxu0
    %v699 = vadd.f32 %v562, %v693
    %v700 = vadd.f32 %v563, %v696
    %v702 = vsel %vm122, %v65, 0
    %704 = vmatprep.subr.bf16.mxu0 0
    %705 = vmatpush1.bf16.msra.mxu0 0
    %706 = vmatprep.subr.bf16.mxu0 0
    %707 = vmatpush1.bf16.msra.mxu0 0
    %708 = vmatprep.subr.bf16.mxu0 0
    %709 = vmatpush1.bf16.msra.mxu0 %v656
    %710 = vmatprep.subr.bf16.mxu0 0
    %711 = vmatpush1.bf16.msra.mxu0 %v648
    %712 = vmatprep.subr.bf16.mxu0 0
    %713 = vmatpush1.bf16.msra.mxu0 %v647
    %714 = vmatprep.subr.bf16.mxu0 0
    %715 = vmatpush1.bf16.msra.mxu0 %v646
    %716 = vmatprep.subr.bf16.mxu0 0
    %717 = vmatpush1.bf16.msra.mxu0 %v645
    %718 = vmatprep.subr.bf16.mxu0 0
    %719 = vmatpush1.bf16.msra.mxu0 %v644
    %720 = vmatprep.subr.bf16.mxu0 0
    %721 = vmatpush2.bf16.msra.mxu0 0
    %722 = vmatprep.subr.bf16.mxu0 0
    %723 = vmatpush2.bf16.msra.mxu0 0
    %724 = vmatprep.subr.bf16.mxu0 0
    %725 = vmatpush2.bf16.msra.mxu0 0
    %726 = vmatprep.subr.bf16.mxu0 0
    %727 = vmatpush2.bf16.msra.mxu0 0
    %728 = vmatprep.subr.bf16.mxu0 0
    %729 = vmatpush2.bf16.msra.mxu0 0
    %730 = vmatprep.subr.bf16.mxu0 0
    %731 = vmatpush2.bf16.msra.mxu0 0
    %732 = vmatprep.subr.bf16.mxu0 0
    %733 = vmatpush2.bf16.msra.mxu0 0
    %734 = vmatprep.subr.bf16.mxu0 0
    %735 = vmatpush2.bf16.msra.mxu0 0
    %736 = vmatprep.mubr.bf16.mxu0 0
    %737 = vmatmul.mubr.bf16.gmra.mxu0 %v702
    %v738 = vpop.f32.mrf.mxu0
    %v739 = vadd.f32 0.0, %v738
    %v740 = vpop.f32.mrf.mxu0
    %v741 = vpop.f32.mrf.mxu0
    %v742 = vadd.f32 0.0, %v741
    %v743 = vpop.f32.mrf.mxu0
    %744 = vdwg.mxu0
    %v745 = vadd.f32 %v608, %v739
    %v746 = vadd.f32 %v609, %v742
    %v747 = vmax.f32 %v699, %v745
    %v748 = vmax.f32 %v700, %v746
    %751 = vrot.lane.b32.xlu0 %v747, 80
    %v752 = vpop.permute.xlu0 %751
    %753 = vrot.lane.b32.xlu0 %v748, 80
    %v754 = vpop.permute.xlu0 %753
    %v757 = vmax.f32 %v747, %v752
    %v758 = vmax.f32 %v748, %v754
    %v759 = vld [vmem:[%s2] sm:$0x1]
    %v761 = vlaneseq
    %v762 = vshrl.u32 %v761, 7
    %v763 = vsub.s32 0, %v762
    %v764 = vrot.slane %v759, %v763
    %v766 = vadd.f32 %v757, %v764
    %v767 = vadd.f32 %v758, %v764
    %vm768 = vcmp.gt.f32.partialorder %v766, 0.0
    %vm769 = vcmp.gt.f32.partialorder %v767, 0.0
    %v770 = vmin.f32 %v766, 0.0
    %v771 = vmin.f32 %v767, 0.0
    %v772 = vmul.f32 %v770, 1.442695
    %v773 = vpow.pop %v772
    %v774 = vmul.f32 %v771, 1.442695
    %v775 = vpow.pop %v774
    %v776 = vsub.f32 %v773, 1.0
    %v777 = vsub.f32 %v775, 1.0
    %v778 = vsel %vm768, %v766, %v776
    %v779 = vsel %vm769, %v767, %v777
    %vm780 = vcmask 392192
    %781 = vst.msk [vmem:[#allocation2] sm:$0xff] %vm780, %v778
    %vm782 = vcmask 388096
    %783 = vst.msk [vmem:[#allocation2 + $0x8] sm:$0xf] %vm782, %v779
    %s784 = scalar_lea.vmem %s0, 28
    %v785 = vld [vmem:[%s784] ss:$2 sm:$0xff]
    %s786 = scalar_lea.vmem %s0, 44
    %v787 = vld [vmem:[%s786] ss:$2 sm:$0xf]
    %v788 = vpack.c.bf16 %v787, %v785
    %s789 = scalar_lea.vmem %s0, 29
    %v790 = vld [vmem:[%s789] ss:$2 sm:$0xff]
    %s791 = scalar_lea.vmem %s0, 45
    %v792 = vld [vmem:[%s791] ss:$2 sm:$0xf]
    %v793 = vpack.c.bf16 %v792, %v790
    %s794 = scalar_lea.vmem %s0, 30
    %v795 = vld [vmem:[%s794] ss:$2 sm:$0xff]
    %s796 = scalar_lea.vmem %s0, 46
    %v797 = vld [vmem:[%s796] ss:$2 sm:$0xf]
    %v798 = vpack.c.bf16 %v797, %v795
    %s799 = scalar_lea.vmem %s0, 31
    %v800 = vld [vmem:[%s799] ss:$2 sm:$0xff]
    %s801 = scalar_lea.vmem %s0, 47
    %v802 = vld [vmem:[%s801] ss:$2 sm:$0xf]
    %v803 = vpack.c.bf16 %v802, %v800
    %s804 = scalar_lea.vmem %s0, 32
    %v805 = vld [vmem:[%s804] ss:$2 sm:$0xff]
    %s806 = scalar_lea.vmem %s0, 48
    %v807 = vld [vmem:[%s806] ss:$2 sm:$0xf]
    %v808 = vpack.c.bf16 %v807, %v805
    %s809 = scalar_lea.vmem %s0, 33
    %v810 = vld [vmem:[%s809] ss:$2 sm:$0xff]
    %s811 = scalar_lea.vmem %s0, 49
    %v812 = vld [vmem:[%s811] ss:$2 sm:$0xf]
    %v813 = vpack.c.bf16 %v812, %v810
    %v814 = vld [vmem:[%s1] sm:$0xf]
    %v815 = vld [vmem:[%s1 + $0x4] sm:$0xf]
    %v816 = vld [vmem:[%s1 + $0x8] sm:$0xf]
    %v817 = vld [vmem:[%s1 + $0xc] sm:$0xf]
    %v818 = vld [vmem:[%s1 + $0x10] sm:$0xf]
    %v819 = vld [vmem:[%s1 + $0x14] sm:$0xf]
    %v820 = vld [vmem:[%s1 + $0x18] sm:$0xf]
    %v821 = vld [vmem:[%s1 + $0x1c] sm:$0xf]
    %v822 = vld [vmem:[%s1 + $0x20] sm:$0xf]
    %v823 = vld [vmem:[%s1 + $0x24] sm:$0xf]
    %v824 = vld [vmem:[%s1 + $0x28] sm:$0x3]
    %v825 = vld [vmem:[%s77] sm:$0xf]
    %v826 = vld [vmem:[%s77 + $0x4] sm:$0xf]
    %v827 = vld [vmem:[%s77 + $0x8] sm:$0xf]
    %v828 = vld [vmem:[%s77 + $0xc] sm:$0xf]
    %v829 = vld [vmem:[%s77 + $0x10] sm:$0xf]
    %v830 = vld [vmem:[%s77 + $0x14] sm:$0xf]
    %v831 = vld [vmem:[%s77 + $0x18] sm:$0xf]
    %v832 = vld [vmem:[%s77 + $0x1c] sm:$0xf]
    %v833 = vld [vmem:[%s77 + $0x20] sm:$0xf]
    %v834 = vld [vmem:[%s77 + $0x24] sm:$0xf]
    %v835 = vld [vmem:[%s77 + $0x28] sm:$0x3]
    %v847 = vunpack.c.l.b16 %v825
    %v848 = vunpack.c.l.b16 %v826
    %v849 = vunpack.c.l.b16 %v827
    %v850 = vunpack.c.l.b16 %v828
    %v851 = vunpack.c.l.b16 %v829
    %v852 = vunpack.c.l.b16 %v830
    %v853 = vunpack.c.l.b16 %v831
    %v854 = vunpack.c.l.b16 %v832
    %v855 = vunpack.c.l.b16 %v833
    %v856 = vunpack.c.l.b16 %v834
    %v857 = vunpack.c.l.b16 %v835
    %v858 = vpack.c.b16 %v848, %v847
    %v859 = vpack.c.b16 %v850, %v849
    %v860 = vpack.c.b16 %v852, %v851
    %v861 = vpack.c.b16 %v854, %v853
    %v862 = vpack.c.b16 %v856, %v855
    %v863 = vpack.c.b16 %v857, %v857
    %v870 = vsel %vm122, %v793, 0
    %v873 = vsel %vm126, %v863, 0
    %875 = vmatprep.subr.bf16.mxu0 0
    %876 = vmatpush1.bf16.msra.mxu0 0
    %877 = vmatprep.subr.bf16.mxu0 0
    %878 = vmatpush1.bf16.msra.mxu0 0
    %879 = vmatprep.subr.bf16.mxu0 0
    %880 = vmatpush1.bf16.msra.mxu0 %v873
    %881 = vmatprep.subr.bf16.mxu0 0
    %882 = vmatpush1.bf16.msra.mxu0 %v862
    %883 = vmatprep.subr.bf16.mxu0 0
    %884 = vmatpush1.bf16.msra.mxu0 %v861
    %885 = vmatprep.subr.bf16.mxu0 0
    %886 = vmatpush1.bf16.msra.mxu0 %v860
    %887 = vmatprep.subr.bf16.mxu0 0
    %888 = vmatpush1.bf16.msra.mxu0 %v859
    %889 = vmatprep.subr.bf16.mxu0 0
    %890 = vmatpush1.bf16.msra.mxu0 %v858
    %891 = vmatprep.subr.bf16.mxu0 0
    %892 = vmatpush2.bf16.msra.mxu0 0
    %893 = vmatprep.subr.bf16.mxu0 0
    %894 = vmatpush2.bf16.msra.mxu0 0
    %895 = vmatprep.subr.bf16.mxu0 0
    %896 = vmatpush2.bf16.msra.mxu0 0
    %897 = vmatprep.subr.bf16.mxu0 0
    %898 = vmatpush2.bf16.msra.mxu0 0
    %899 = vmatprep.subr.bf16.mxu0 0
    %900 = vmatpush2.bf16.msra.mxu0 0
    %901 = vmatprep.subr.bf16.mxu0 0
    %902 = vmatpush2.bf16.msra.mxu0 0
    %903 = vmatprep.subr.bf16.mxu0 0
    %904 = vmatpush2.bf16.msra.mxu0 0
    %905 = vmatprep.subr.bf16.mxu0 0
    %906 = vmatpush2.bf16.msra.mxu0 0
    %907 = vmatprep.mubr.bf16.mxu0 0
    %908 = vmatmul.mubr.bf16.gmra.mxu0 %v870
    %v909 = vpop.f32.mrf.mxu0
    %v910 = vadd.f32 0.0, %v909
    %v911 = vpop.f32.mrf.mxu0
    %v912 = vpop.f32.mrf.mxu0
    %v913 = vadd.f32 0.0, %v912
    %v914 = vpop.f32.mrf.mxu0
    %915 = vdwg.mxu0
    %v927 = vunpack.c.l.b16 %v814
    %v928 = vunpack.c.l.b16 %v815
    %v929 = vunpack.c.l.b16 %v816
    %v930 = vunpack.c.l.b16 %v817
    %v931 = vunpack.c.l.b16 %v818
    %v932 = vunpack.c.l.b16 %v819
    %v933 = vunpack.c.l.b16 %v820
    %v934 = vunpack.c.l.b16 %v821
    %v935 = vunpack.c.l.b16 %v822
    %v936 = vunpack.c.l.b16 %v823
    %v937 = vunpack.c.l.b16 %v824
    %v938 = vpack.c.b16 %v928, %v927
    %v939 = vpack.c.b16 %v930, %v929
    %v940 = vpack.c.b16 %v932, %v931
    %v941 = vpack.c.b16 %v934, %v933
    %v942 = vpack.c.b16 %v936, %v935
    %v943 = vpack.c.b16 %v937, %v937
    %v950 = vsel %vm122, %v788, 0
    %v953 = vsel %vm126, %v943, 0
    %955 = vmatprep.subr.bf16.mxu0 0
    %956 = vmatpush1.bf16.msra.mxu0 0
    %957 = vmatprep.subr.bf16.mxu0 0
    %958 = vmatpush1.bf16.msra.mxu0 0
    %959 = vmatprep.subr.bf16.mxu0 0
    %960 = vmatpush1.bf16.msra.mxu0 %v953
    %961 = vmatprep.subr.bf16.mxu0 0
    %962 = vmatpush1.bf16.msra.mxu0 %v942
    %963 = vmatprep.subr.bf16.mxu0 0
    %964 = vmatpush1.bf16.msra.mxu0 %v941
    %965 = vmatprep.subr.bf16.mxu0 0
    %966 = vmatpush1.bf16.msra.mxu0 %v940
    %967 = vmatprep.subr.bf16.mxu0 0
    %968 = vmatpush1.bf16.msra.mxu0 %v939
    %969 = vmatprep.subr.bf16.mxu0 0
    %970 = vmatpush1.bf16.msra.mxu0 %v938
    %971 = vmatprep.subr.bf16.mxu0 0
    %972 = vmatpush2.bf16.msra.mxu0 0
    %973 = vmatprep.subr.bf16.mxu0 0
    %974 = vmatpush2.bf16.msra.mxu0 0
    %975 = vmatprep.subr.bf16.mxu0 0
    %976 = vmatpush2.bf16.msra.mxu0 0
    %977 = vmatprep.subr.bf16.mxu0 0
    %978 = vmatpush2.bf16.msra.mxu0 0
    %979 = vmatprep.subr.bf16.mxu0 0
    %980 = vmatpush2.bf16.msra.mxu0 0
    %981 = vmatprep.subr.bf16.mxu0 0
    %982 = vmatpush2.bf16.msra.mxu0 0
    %983 = vmatprep.subr.bf16.mxu0 0
    %984 = vmatpush2.bf16.msra.mxu0 0
    %985 = vmatprep.subr.bf16.mxu0 0
    %986 = vmatpush2.bf16.msra.mxu0 0
    %987 = vmatprep.mubr.bf16.mxu0 0
    %988 = vmatmul.mubr.bf16.gmra.mxu0 %v950
    %v989 = vpop.f32.mrf.mxu0
    %v990 = vadd.f32 %v910, %v989
    %v991 = vpop.f32.mrf.mxu0
    %v992 = vpop.f32.mrf.mxu0
    %v993 = vadd.f32 %v913, %v992
    %v994 = vpop.f32.mrf.mxu0
    %995 = vdwg.mxu0
    %v997 = vsel %vm122, %v798, 0
    %999 = vmatprep.subr.bf16.mxu0 0
    %1000 = vmatpush1.bf16.msra.mxu0 0
    %1001 = vmatprep.subr.bf16.mxu0 0
    %1002 = vmatpush1.bf16.msra.mxu0 0
    %1003 = vmatprep.subr.bf16.mxu0 0
    %1004 = vmatpush1.bf16.msra.mxu0 %v873
    %1005 = vmatprep.subr.bf16.mxu0 0
    %1006 = vmatpush1.bf16.msra.mxu0 %v862
    %1007 = vmatprep.subr.bf16.mxu0 0
    %1008 = vmatpush1.bf16.msra.mxu0 %v861
    %1009 = vmatprep.subr.bf16.mxu0 0
    %1010 = vmatpush1.bf16.msra.mxu0 %v860
    %1011 = vmatprep.subr.bf16.mxu0 0
    %1012 = vmatpush1.bf16.msra.mxu0 %v859
    %1013 = vmatprep.subr.bf16.mxu0 0
    %1014 = vmatpush1.bf16.msra.mxu0 %v858
    %1015 = vmatprep.subr.bf16.mxu0 0
    %1016 = vmatpush2.bf16.msra.mxu0 0
    %1017 = vmatprep.subr.bf16.mxu0 0
    %1018 = vmatpush2.bf16.msra.mxu0 0
    %1019 = vmatprep.subr.bf16.mxu0 0
    %1020 = vmatpush2.bf16.msra.mxu0 0
    %1021 = vmatprep.subr.bf16.mxu0 0
    %1022 = vmatpush2.bf16.msra.mxu0 0
    %1023 = vmatprep.subr.bf16.mxu0 0
    %1024 = vmatpush2.bf16.msra.mxu0 0
    %1025 = vmatprep.subr.bf16.mxu0 0
    %1026 = vmatpush2.bf16.msra.mxu0 0
    %1027 = vmatprep.subr.bf16.mxu0 0
    %1028 = vmatpush2.bf16.msra.mxu0 0
    %1029 = vmatprep.subr.bf16.mxu0 0
    %1030 = vmatpush2.bf16.msra.mxu0 0
    %1031 = vmatprep.mubr.bf16.mxu0 0
    %1032 = vmatmul.mubr.bf16.gmra.mxu0 %v997
    %v1033 = vpop.f32.mrf.mxu0
    %v1034 = vadd.f32 0.0, %v1033
    %v1035 = vpop.f32.mrf.mxu0
    %v1036 = vpop.f32.mrf.mxu0
    %v1037 = vadd.f32 0.0, %v1036
    %v1038 = vpop.f32.mrf.mxu0
    %1039 = vdwg.mxu0
    %1040 = vmatprep.subr.bf16.mxu0 0
    %1041 = vmatpush1.bf16.msra.mxu0 0
    %1042 = vmatprep.subr.bf16.mxu0 0
    %1043 = vmatpush1.bf16.msra.mxu0 0
    %1044 = vmatprep.subr.bf16.mxu0 0
    %1045 = vmatpush1.bf16.msra.mxu0 %v953
    %1046 = vmatprep.subr.bf16.mxu0 0
    %1047 = vmatpush1.bf16.msra.mxu0 %v942
    %1048 = vmatprep.subr.bf16.mxu0 0
    %1049 = vmatpush1.bf16.msra.mxu0 %v941
    %1050 = vmatprep.subr.bf16.mxu0 0
    %1051 = vmatpush1.bf16.msra.mxu0 %v940
    %1052 = vmatprep.subr.bf16.mxu0 0
    %1053 = vmatpush1.bf16.msra.mxu0 %v939
    %1054 = vmatprep.subr.bf16.mxu0 0
    %1055 = vmatpush1.bf16.msra.mxu0 %v938
    %1056 = vmatprep.subr.bf16.mxu0 0
    %1057 = vmatpush2.bf16.msra.mxu0 0
    %1058 = vmatprep.subr.bf16.mxu0 0
    %1059 = vmatpush2.bf16.msra.mxu0 0
    %1060 = vmatprep.subr.bf16.mxu0 0
    %1061 = vmatpush2.bf16.msra.mxu0 0
    %1062 = vmatprep.subr.bf16.mxu0 0
    %1063 = vmatpush2.bf16.msra.mxu0 0
    %1064 = vmatprep.subr.bf16.mxu0 0
    %1065 = vmatpush2.bf16.msra.mxu0 0
    %1066 = vmatprep.subr.bf16.mxu0 0
    %1067 = vmatpush2.bf16.msra.mxu0 0
    %1068 = vmatprep.subr.bf16.mxu0 0
    %1069 = vmatpush2.bf16.msra.mxu0 0
    %1070 = vmatprep.subr.bf16.mxu0 0
    %1071 = vmatpush2.bf16.msra.mxu0 0
    %1072 = vmatprep.mubr.bf16.mxu0 0
    %1073 = vmatmul.mubr.bf16.gmra.mxu0 %v870
    %v1074 = vpop.f32.mrf.mxu0
    %v1075 = vadd.f32 %v1034, %v1074
    %v1076 = vpop.f32.mrf.mxu0
    %v1077 = vpop.f32.mrf.mxu0
    %v1078 = vadd.f32 %v1037, %v1077
    %v1079 = vpop.f32.mrf.mxu0
    %1080 = vdwg.mxu0
    %v1081 = vld [vmem:[%s336] sm:$0xf]
    %v1082 = vld [vmem:[%s336 + $0x4] sm:$0xf]
    %v1083 = vld [vmem:[%s336 + $0x8] sm:$0xf]
    %v1084 = vld [vmem:[%s336 + $0xc] sm:$0xf]
    %v1085 = vld [vmem:[%s336 + $0x10] sm:$0xf]
    %v1086 = vld [vmem:[%s336 + $0x14] sm:$0xf]
    %v1087 = vld [vmem:[%s336 + $0x18] sm:$0xf]
    %v1088 = vld [vmem:[%s336 + $0x1c] sm:$0xf]
    %v1089 = vld [vmem:[%s336 + $0x20] sm:$0xf]
    %v1090 = vld [vmem:[%s336 + $0x24] sm:$0xf]
    %v1091 = vld [vmem:[%s336 + $0x28] sm:$0x3]
    %v1103 = vunpack.c.l.b16 %v1081
    %v1104 = vunpack.c.l.b16 %v1082
    %v1105 = vunpack.c.l.b16 %v1083
    %v1106 = vunpack.c.l.b16 %v1084
    %v1107 = vunpack.c.l.b16 %v1085
    %v1108 = vunpack.c.l.b16 %v1086
    %v1109 = vunpack.c.l.b16 %v1087
    %v1110 = vunpack.c.l.b16 %v1088
    %v1111 = vunpack.c.l.b16 %v1089
    %v1112 = vunpack.c.l.b16 %v1090
    %v1113 = vunpack.c.l.b16 %v1091
    %v1114 = vpack.c.b16 %v1104, %v1103
    %v1115 = vpack.c.b16 %v1106, %v1105
    %v1116 = vpack.c.b16 %v1108, %v1107
    %v1117 = vpack.c.b16 %v1110, %v1109
    %v1118 = vpack.c.b16 %v1112, %v1111
    %v1119 = vpack.c.b16 %v1113, %v1113
    %v1126 = vsel %vm126, %v1119, 0
    %1128 = vmatprep.subr.bf16.mxu0 0
    %1129 = vmatpush1.bf16.msra.mxu0 0
    %1130 = vmatprep.subr.bf16.mxu0 0
    %1131 = vmatpush1.bf16.msra.mxu0 0
    %1132 = vmatprep.subr.bf16.mxu0 0
    %1133 = vmatpush1.bf16.msra.mxu0 %v1126
    %1134 = vmatprep.subr.bf16.mxu0 0
    %1135 = vmatpush1.bf16.msra.mxu0 %v1118
    %1136 = vmatprep.subr.bf16.mxu0 0
    %1137 = vmatpush1.bf16.msra.mxu0 %v1117
    %1138 = vmatprep.subr.bf16.mxu0 0
    %1139 = vmatpush1.bf16.msra.mxu0 %v1116
    %1140 = vmatprep.subr.bf16.mxu0 0
    %1141 = vmatpush1.bf16.msra.mxu0 %v1115
    %1142 = vmatprep.subr.bf16.mxu0 0
    %1143 = vmatpush1.bf16.msra.mxu0 %v1114
    %1144 = vmatprep.subr.bf16.mxu0 0
    %1145 = vmatpush2.bf16.msra.mxu0 0
    %1146 = vmatprep.subr.bf16.mxu0 0
    %1147 = vmatpush2.bf16.msra.mxu0 0
    %1148 = vmatprep.subr.bf16.mxu0 0
    %1149 = vmatpush2.bf16.msra.mxu0 0
    %1150 = vmatprep.subr.bf16.mxu0 0
    %1151 = vmatpush2.bf16.msra.mxu0 0
    %1152 = vmatprep.subr.bf16.mxu0 0
    %1153 = vmatpush2.bf16.msra.mxu0 0
    %1154 = vmatprep.subr.bf16.mxu0 0
    %1155 = vmatpush2.bf16.msra.mxu0 0
    %1156 = vmatprep.subr.bf16.mxu0 0
    %1157 = vmatpush2.bf16.msra.mxu0 0
    %1158 = vmatprep.subr.bf16.mxu0 0
    %1159 = vmatpush2.bf16.msra.mxu0 0
    %1160 = vmatprep.mubr.bf16.mxu0 0
    %1161 = vmatmul.mubr.bf16.gmra.mxu0 %v997
    %v1162 = vpop.f32.mrf.mxu0
    %v1163 = vadd.f32 0.0, %v1162
    %v1164 = vpop.f32.mrf.mxu0
    %v1165 = vpop.f32.mrf.mxu0
    %v1166 = vadd.f32 0.0, %v1165
    %v1167 = vpop.f32.mrf.mxu0
    %1168 = vdwg.mxu0
    %v1169 = vadd.f32 %v990, %v1163
    %v1170 = vadd.f32 %v993, %v1166
    %v1172 = vsel %vm122, %v803, 0
    %1174 = vmatprep.subr.bf16.mxu0 0
    %1175 = vmatpush1.bf16.msra.mxu0 0
    %1176 = vmatprep.subr.bf16.mxu0 0
    %1177 = vmatpush1.bf16.msra.mxu0 0
    %1178 = vmatprep.subr.bf16.mxu0 0
    %1179 = vmatpush1.bf16.msra.mxu0 %v1126
    %1180 = vmatprep.subr.bf16.mxu0 0
    %1181 = vmatpush1.bf16.msra.mxu0 %v1118
    %1182 = vmatprep.subr.bf16.mxu0 0
    %1183 = vmatpush1.bf16.msra.mxu0 %v1117
    %1184 = vmatprep.subr.bf16.mxu0 0
    %1185 = vmatpush1.bf16.msra.mxu0 %v1116
    %1186 = vmatprep.subr.bf16.mxu0 0
    %1187 = vmatpush1.bf16.msra.mxu0 %v1115
    %1188 = vmatprep.subr.bf16.mxu0 0
    %1189 = vmatpush1.bf16.msra.mxu0 %v1114
    %1190 = vmatprep.subr.bf16.mxu0 0
    %1191 = vmatpush2.bf16.msra.mxu0 0
    %1192 = vmatprep.subr.bf16.mxu0 0
    %1193 = vmatpush2.bf16.msra.mxu0 0
    %1194 = vmatprep.subr.bf16.mxu0 0
    %1195 = vmatpush2.bf16.msra.mxu0 0
    %1196 = vmatprep.subr.bf16.mxu0 0
    %1197 = vmatpush2.bf16.msra.mxu0 0
    %1198 = vmatprep.subr.bf16.mxu0 0
    %1199 = vmatpush2.bf16.msra.mxu0 0
    %1200 = vmatprep.subr.bf16.mxu0 0
    %1201 = vmatpush2.bf16.msra.mxu0 0
    %1202 = vmatprep.subr.bf16.mxu0 0
    %1203 = vmatpush2.bf16.msra.mxu0 0
    %1204 = vmatprep.subr.bf16.mxu0 0
    %1205 = vmatpush2.bf16.msra.mxu0 0
    %1206 = vmatprep.mubr.bf16.mxu0 0
    %1207 = vmatmul.mubr.bf16.gmra.mxu0 %v1172
    %v1208 = vpop.f32.mrf.mxu0
    %v1209 = vadd.f32 0.0, %v1208
    %v1210 = vpop.f32.mrf.mxu0
    %v1211 = vpop.f32.mrf.mxu0
    %v1212 = vadd.f32 0.0, %v1211
    %v1213 = vpop.f32.mrf.mxu0
    %1214 = vdwg.mxu0
    %v1215 = vadd.f32 %v1075, %v1209
    %v1216 = vadd.f32 %v1078, %v1212
    %v1217 = vld [vmem:[%s473] sm:$0xf]
    %v1218 = vld [vmem:[%s473 + $0x4] sm:$0xf]
    %v1219 = vld [vmem:[%s473 + $0x8] sm:$0xf]
    %v1220 = vld [vmem:[%s473 + $0xc] sm:$0xf]
    %v1221 = vld [vmem:[%s473 + $0x10] sm:$0xf]
    %v1222 = vld [vmem:[%s473 + $0x14] sm:$0xf]
    %v1223 = vld [vmem:[%s473 + $0x18] sm:$0xf]
    %v1224 = vld [vmem:[%s473 + $0x1c] sm:$0xf]
    %v1225 = vld [vmem:[%s473 + $0x20] sm:$0xf]
    %v1226 = vld [vmem:[%s473 + $0x24] sm:$0xf]
    %v1227 = vld [vmem:[%s473 + $0x28] sm:$0x3]
    %v1239 = vunpack.c.l.b16 %v1217
    %v1240 = vunpack.c.l.b16 %v1218
    %v1241 = vunpack.c.l.b16 %v1219
    %v1242 = vunpack.c.l.b16 %v1220
    %v1243 = vunpack.c.l.b16 %v1221
    %v1244 = vunpack.c.l.b16 %v1222
    %v1245 = vunpack.c.l.b16 %v1223
    %v1246 = vunpack.c.l.b16 %v1224
    %v1247 = vunpack.c.l.b16 %v1225
    %v1248 = vunpack.c.l.b16 %v1226
    %v1249 = vunpack.c.l.b16 %v1227
    %v1250 = vpack.c.b16 %v1240, %v1239
    %v1251 = vpack.c.b16 %v1242, %v1241
    %v1252 = vpack.c.b16 %v1244, %v1243
    %v1253 = vpack.c.b16 %v1246, %v1245
    %v1254 = vpack.c.b16 %v1248, %v1247
    %v1255 = vpack.c.b16 %v1249, %v1249
    %v1262 = vsel %vm126, %v1255, 0
    %1264 = vmatprep.subr.bf16.mxu0 0
    %1265 = vmatpush1.bf16.msra.mxu0 0
    %1266 = vmatprep.subr.bf16.mxu0 0
    %1267 = vmatpush1.bf16.msra.mxu0 0
    %1268 = vmatprep.subr.bf16.mxu0 0
    %1269 = vmatpush1.bf16.msra.mxu0 %v1262
    %1270 = vmatprep.subr.bf16.mxu0 0
    %1271 = vmatpush1.bf16.msra.mxu0 %v1254
    %1272 = vmatprep.subr.bf16.mxu0 0
    %1273 = vmatpush1.bf16.msra.mxu0 %v1253
    %1274 = vmatprep.subr.bf16.mxu0 0
    %1275 = vmatpush1.bf16.msra.mxu0 %v1252
    %1276 = vmatprep.subr.bf16.mxu0 0
    %1277 = vmatpush1.bf16.msra.mxu0 %v1251
    %1278 = vmatprep.subr.bf16.mxu0 0
    %1279 = vmatpush1.bf16.msra.mxu0 %v1250
    %1280 = vmatprep.subr.bf16.mxu0 0
    %1281 = vmatpush2.bf16.msra.mxu0 0
    %1282 = vmatprep.subr.bf16.mxu0 0
    %1283 = vmatpush2.bf16.msra.mxu0 0
    %1284 = vmatprep.subr.bf16.mxu0 0
    %1285 = vmatpush2.bf16.msra.mxu0 0
    %1286 = vmatprep.subr.bf16.mxu0 0
    %1287 = vmatpush2.bf16.msra.mxu0 0
    %1288 = vmatprep.subr.bf16.mxu0 0
    %1289 = vmatpush2.bf16.msra.mxu0 0
    %1290 = vmatprep.subr.bf16.mxu0 0
    %1291 = vmatpush2.bf16.msra.mxu0 0
    %1292 = vmatprep.subr.bf16.mxu0 0
    %1293 = vmatpush2.bf16.msra.mxu0 0
    %1294 = vmatprep.subr.bf16.mxu0 0
    %1295 = vmatpush2.bf16.msra.mxu0 0
    %1296 = vmatprep.mubr.bf16.mxu0 0
    %1297 = vmatmul.mubr.bf16.gmra.mxu0 %v1172
    %v1298 = vpop.f32.mrf.mxu0
    %v1299 = vadd.f32 0.0, %v1298
    %v1300 = vpop.f32.mrf.mxu0
    %v1301 = vpop.f32.mrf.mxu0
    %v1302 = vadd.f32 0.0, %v1301
    %v1303 = vpop.f32.mrf.mxu0
    %1304 = vdwg.mxu0
    %v1305 = vadd.f32 %v1169, %v1299
    %v1306 = vadd.f32 %v1170, %v1302
    %v1308 = vsel %vm122, %v808, 0
    %1310 = vmatprep.subr.bf16.mxu0 0
    %1311 = vmatpush1.bf16.msra.mxu0 0
    %1312 = vmatprep.subr.bf16.mxu0 0
    %1313 = vmatpush1.bf16.msra.mxu0 0
    %1314 = vmatprep.subr.bf16.mxu0 0
    %1315 = vmatpush1.bf16.msra.mxu0 %v1262
    %1316 = vmatprep.subr.bf16.mxu0 0
    %1317 = vmatpush1.bf16.msra.mxu0 %v1254
    %1318 = vmatprep.subr.bf16.mxu0 0
    %1319 = vmatpush1.bf16.msra.mxu0 %v1253
    %1320 = vmatprep.subr.bf16.mxu0 0
    %1321 = vmatpush1.bf16.msra.mxu0 %v1252
    %1322 = vmatprep.subr.bf16.mxu0 0
    %1323 = vmatpush1.bf16.msra.mxu0 %v1251
    %1324 = vmatprep.subr.bf16.mxu0 0
    %1325 = vmatpush1.bf16.msra.mxu0 %v1250
    %1326 = vmatprep.subr.bf16.mxu0 0
    %1327 = vmatpush2.bf16.msra.mxu0 0
    %1328 = vmatprep.subr.bf16.mxu0 0
    %1329 = vmatpush2.bf16.msra.mxu0 0
    %1330 = vmatprep.subr.bf16.mxu0 0
    %1331 = vmatpush2.bf16.msra.mxu0 0
    %1332 = vmatprep.subr.bf16.mxu0 0
    %1333 = vmatpush2.bf16.msra.mxu0 0
    %1334 = vmatprep.subr.bf16.mxu0 0
    %1335 = vmatpush2.bf16.msra.mxu0 0
    %1336 = vmatprep.subr.bf16.mxu0 0
    %1337 = vmatpush2.bf16.msra.mxu0 0
    %1338 = vmatprep.subr.bf16.mxu0 0
    %1339 = vmatpush2.bf16.msra.mxu0 0
    %1340 = vmatprep.subr.bf16.mxu0 0
    %1341 = vmatpush2.bf16.msra.mxu0 0
    %1342 = vmatprep.mubr.bf16.mxu0 0
    %1343 = vmatmul.mubr.bf16.gmra.mxu0 %v1308
    %v1344 = vpop.f32.mrf.mxu0
    %v1345 = vadd.f32 0.0, %v1344
    %v1346 = vpop.f32.mrf.mxu0
    %v1347 = vpop.f32.mrf.mxu0
    %v1348 = vadd.f32 0.0, %v1347
    %v1349 = vpop.f32.mrf.mxu0
    %1350 = vdwg.mxu0
    %v1351 = vadd.f32 %v1215, %v1345
    %v1352 = vadd.f32 %v1216, %v1348
    %v1353 = vld [vmem:[%s610] sm:$0xf]
    %v1354 = vld [vmem:[%s610 + $0x4] sm:$0xf]
    %v1355 = vld [vmem:[%s610 + $0x8] sm:$0xf]
    %v1356 = vld [vmem:[%s610 + $0xc] sm:$0xf]
    %v1357 = vld [vmem:[%s610 + $0x10] sm:$0xf]
    %v1358 = vld [vmem:[%s610 + $0x14] sm:$0xf]
    %v1359 = vld [vmem:[%s610 + $0x18] sm:$0xf]
    %v1360 = vld [vmem:[%s610 + $0x1c] sm:$0xf]
    %v1361 = vld [vmem:[%s610 + $0x20] sm:$0xf]
    %v1362 = vld [vmem:[%s610 + $0x24] sm:$0xf]
    %v1363 = vld [vmem:[%s610 + $0x28] sm:$0x3]
    %v1375 = vunpack.c.l.b16 %v1353
    %v1376 = vunpack.c.l.b16 %v1354
    %v1377 = vunpack.c.l.b16 %v1355
    %v1378 = vunpack.c.l.b16 %v1356
    %v1379 = vunpack.c.l.b16 %v1357
    %v1380 = vunpack.c.l.b16 %v1358
    %v1381 = vunpack.c.l.b16 %v1359
    %v1382 = vunpack.c.l.b16 %v1360
    %v1383 = vunpack.c.l.b16 %v1361
    %v1384 = vunpack.c.l.b16 %v1362
    %v1385 = vunpack.c.l.b16 %v1363
    %v1386 = vpack.c.b16 %v1376, %v1375
    %v1387 = vpack.c.b16 %v1378, %v1377
    %v1388 = vpack.c.b16 %v1380, %v1379
    %v1389 = vpack.c.b16 %v1382, %v1381
    %v1390 = vpack.c.b16 %v1384, %v1383
    %v1391 = vpack.c.b16 %v1385, %v1385
    %v1398 = vsel %vm126, %v1391, 0
    %1400 = vmatprep.subr.bf16.mxu0 0
    %1401 = vmatpush1.bf16.msra.mxu0 0
    %1402 = vmatprep.subr.bf16.mxu0 0
    %1403 = vmatpush1.bf16.msra.mxu0 0
    %1404 = vmatprep.subr.bf16.mxu0 0
    %1405 = vmatpush1.bf16.msra.mxu0 %v1398
    %1406 = vmatprep.subr.bf16.mxu0 0
    %1407 = vmatpush1.bf16.msra.mxu0 %v1390
    %1408 = vmatprep.subr.bf16.mxu0 0
    %1409 = vmatpush1.bf16.msra.mxu0 %v1389
    %1410 = vmatprep.subr.bf16.mxu0 0
    %1411 = vmatpush1.bf16.msra.mxu0 %v1388
    %1412 = vmatprep.subr.bf16.mxu0 0
    %1413 = vmatpush1.bf16.msra.mxu0 %v1387
    %1414 = vmatprep.subr.bf16.mxu0 0
    %1415 = vmatpush1.bf16.msra.mxu0 %v1386
    %1416 = vmatprep.subr.bf16.mxu0 0
    %1417 = vmatpush2.bf16.msra.mxu0 0
    %1418 = vmatprep.subr.bf16.mxu0 0
    %1419 = vmatpush2.bf16.msra.mxu0 0
    %1420 = vmatprep.subr.bf16.mxu0 0
    %1421 = vmatpush2.bf16.msra.mxu0 0
    %1422 = vmatprep.subr.bf16.mxu0 0
    %1423 = vmatpush2.bf16.msra.mxu0 0
    %1424 = vmatprep.subr.bf16.mxu0 0
    %1425 = vmatpush2.bf16.msra.mxu0 0
    %1426 = vmatprep.subr.bf16.mxu0 0
    %1427 = vmatpush2.bf16.msra.mxu0 0
    %1428 = vmatprep.subr.bf16.mxu0 0
    %1429 = vmatpush2.bf16.msra.mxu0 0
    %1430 = vmatprep.subr.bf16.mxu0 0
    %1431 = vmatpush2.bf16.msra.mxu0 0
    %1432 = vmatprep.mubr.bf16.mxu0 0
    %1433 = vmatmul.mubr.bf16.gmra.mxu0 %v1308
    %v1434 = vpop.f32.mrf.mxu0
    %v1435 = vadd.f32 0.0, %v1434
    %v1436 = vpop.f32.mrf.mxu0
    %v1437 = vpop.f32.mrf.mxu0
    %v1438 = vadd.f32 0.0, %v1437
    %v1439 = vpop.f32.mrf.mxu0
    %1440 = vdwg.mxu0
    %v1441 = vadd.f32 %v1305, %v1435
    %v1442 = vadd.f32 %v1306, %v1438
    %v1444 = vsel %vm122, %v813, 0
    %1446 = vmatprep.subr.bf16.mxu0 0
    %1447 = vmatpush1.bf16.msra.mxu0 0
    %1448 = vmatprep.subr.bf16.mxu0 0
    %1449 = vmatpush1.bf16.msra.mxu0 0
    %1450 = vmatprep.subr.bf16.mxu0 0
    %1451 = vmatpush1.bf16.msra.mxu0 %v1398
    %1452 = vmatprep.subr.bf16.mxu0 0
    %1453 = vmatpush1.bf16.msra.mxu0 %v1390
    %1454 = vmatprep.subr.bf16.mxu0 0
    %1455 = vmatpush1.bf16.msra.mxu0 %v1389
    %1456 = vmatprep.subr.bf16.mxu0 0
    %1457 = vmatpush1.bf16.msra.mxu0 %v1388
    %1458 = vmatprep.subr.bf16.mxu0 0
    %1459 = vmatpush1.bf16.msra.mxu0 %v1387
    %1460 = vmatprep.subr.bf16.mxu0 0
    %1461 = vmatpush1.bf16.msra.mxu0 %v1386
    %1462 = vmatprep.subr.bf16.mxu0 0
    %1463 = vmatpush2.bf16.msra.mxu0 0
    %1464 = vmatprep.subr.bf16.mxu0 0
    %1465 = vmatpush2.bf16.msra.mxu0 0
    %1466 = vmatprep.subr.bf16.mxu0 0
    %1467 = vmatpush2.bf16.msra.mxu0 0
    %1468 = vmatprep.subr.bf16.mxu0 0
    %1469 = vmatpush2.bf16.msra.mxu0 0
    %1470 = vmatprep.subr.bf16.mxu0 0
    %1471 = vmatpush2.bf16.msra.mxu0 0
    %1472 = vmatprep.subr.bf16.mxu0 0
    %1473 = vmatpush2.bf16.msra.mxu0 0
    %1474 = vmatprep.subr.bf16.mxu0 0
    %1475 = vmatpush2.bf16.msra.mxu0 0
    %1476 = vmatprep.subr.bf16.mxu0 0
    %1477 = vmatpush2.bf16.msra.mxu0 0
    %1478 = vmatprep.mubr.bf16.mxu0 0
    %1479 = vmatmul.mubr.bf16.gmra.mxu0 %v1444
    %v1480 = vpop.f32.mrf.mxu0
    %v1481 = vadd.f32 0.0, %v1480
    %v1482 = vpop.f32.mrf.mxu0
    %v1483 = vpop.f32.mrf.mxu0
    %v1484 = vadd.f32 0.0, %v1483
    %v1485 = vpop.f32.mrf.mxu0
    %1486 = vdwg.mxu0
    %v1487 = vadd.f32 %v1351, %v1481
    %v1488 = vadd.f32 %v1352, %v1484
    %v1489 = vmax.f32 %v1441, %v1487
    %v1490 = vmax.f32 %v1442, %v1488
    %1493 = vrot.lane.b32.xlu0 %v1489, 80
    %v1494 = vpop.permute.xlu0 %1493
    %1495 = vrot.lane.b32.xlu0 %v1490, 80
    %v1496 = vpop.permute.xlu0 %1495
    %v1499 = vmax.f32 %v1489, %v1494
    %v1500 = vmax.f32 %v1490, %v1496
    %v1501 = vld [vmem:[%s2] sm:$0x1]
    %v1503 = vlaneseq
    %v1504 = vshrl.u32 %v1503, 7
    %v1505 = vsub.s32 0, %v1504
    %v1506 = vrot.slane %v1501, %v1505
    %v1508 = vadd.f32 %v1499, %v1506
    %v1509 = vadd.f32 %v1500, %v1506
    %vm1510 = vcmp.gt.f32.partialorder %v1508, 0.0
    %vm1511 = vcmp.gt.f32.partialorder %v1509, 0.0
    %v1512 = vmin.f32 %v1508, 0.0
    %v1513 = vmin.f32 %v1509, 0.0
    %v1514 = vmul.f32 %v1512, 1.442695
    %v1515 = vpow.pop %v1514
    %v1516 = vmul.f32 %v1513, 1.442695
    %v1517 = vpow.pop %v1516
    %v1518 = vsub.f32 %v1515, 1.0
    %v1519 = vsub.f32 %v1517, 1.0
    %v1520 = vsel %vm1510, %v1508, %v1518
    %v1521 = vsel %vm1511, %v1509, %v1519
    %1522 = vst.msk [vmem:[#allocation2 + $0xc] sm:$0xff] %vm780, %v1520
    %1523 = vst.msk [vmem:[#allocation2 + $0x14] sm:$0xf] %vm782, %v1521
    %v1524 = vld [vmem:[#allocation2] ss:$2 sm:$0x1f]
    %v1525 = vpack.c.bf16 %v1524, %v1524
    %s1526 = scalar_lea.vmem [#allocation2], 1
    %v1527 = vld [vmem:[%s1526] ss:$2 sm:$0x1f]
    %v1528 = vpack.c.bf16 %v1527, %v1527
    %s1529 = scalar_lea.vmem [#allocation2], 2
    %v1530 = vld [vmem:[%s1529] ss:$2 sm:$0x1f]
    %v1531 = vpack.c.bf16 %v1530, %v1530
    %s1532 = scalar_lea.vmem [#allocation2], 3
    %v1533 = vld [vmem:[%s1532] ss:$2 sm:$0x1f]
    %v1534 = vpack.c.bf16 %v1533, %v1533
    %v1535 = vld [vmem:[%s3] sm:$0xf]
    %v1536 = vld [vmem:[%s3 + $0x4] sm:$0xf]
    %v1537 = vld [vmem:[%s3 + $0x8] sm:$0xf]
    %v1538 = vld [vmem:[%s3 + $0xc] sm:$0xf]
    %v1539 = vld [vmem:[%s3 + $0x10] sm:$0xf]
    %v1540 = vld [vmem:[%s3 + $0x14] sm:$0xf]
    %s1541 = scalar_lea.vmem %s3, 24
    %v1542 = vld [vmem:[%s1541] sm:$0xf]
    %v1543 = vld [vmem:[%s1541 + $0x4] sm:$0xf]
    %v1544 = vld [vmem:[%s1541 + $0x8] sm:$0xf]
    %v1545 = vld [vmem:[%s1541 + $0xc] sm:$0xf]
    %v1546 = vld [vmem:[%s1541 + $0x10] sm:$0xf]
    %v1547 = vld [vmem:[%s1541 + $0x14] sm:$0xf]
    %v1554 = vunpack.c.l.b16 %v1542
    %v1555 = vunpack.c.l.b16 %v1543
    %v1556 = vunpack.c.l.b16 %v1544
    %v1557 = vunpack.c.l.b16 %v1545
    %v1558 = vunpack.c.l.b16 %v1546
    %v1559 = vunpack.c.l.b16 %v1547
    %v1560 = vpack.c.b16 %v1555, %v1554
    %v1561 = vpack.c.b16 %v1557, %v1556
    %v1562 = vpack.c.b16 %v1559, %v1558
    %v1567 = vsel %vm780, %v1528, 0
    %1569 = vmatprep.subr.bf16.mxu0 0
    %1570 = vmatpush1.bf16.msra.mxu0 0
    %1571 = vmatprep.subr.bf16.mxu0 0
    %1572 = vmatpush1.bf16.msra.mxu0 0
    %1573 = vmatprep.subr.bf16.mxu0 0
    %1574 = vmatpush1.bf16.msra.mxu0 0
    %1575 = vmatprep.subr.bf16.mxu0 0
    %1576 = vmatpush1.bf16.msra.mxu0 0
    %1577 = vmatprep.subr.bf16.mxu0 0
    %1578 = vmatpush1.bf16.msra.mxu0 0
    %1579 = vmatprep.subr.bf16.mxu0 0
    %1580 = vmatpush1.bf16.msra.mxu0 %v1562
    %1581 = vmatprep.subr.bf16.mxu0 0
    %1582 = vmatpush1.bf16.msra.mxu0 %v1561
    %1583 = vmatprep.subr.bf16.mxu0 0
    %1584 = vmatpush1.bf16.msra.mxu0 %v1560
    %1585 = vmatprep.subr.bf16.mxu0 0
    %1586 = vmatpush2.bf16.msra.mxu0 0
    %1587 = vmatprep.subr.bf16.mxu0 0
    %1588 = vmatpush2.bf16.msra.mxu0 0
    %1589 = vmatprep.subr.bf16.mxu0 0
    %1590 = vmatpush2.bf16.msra.mxu0 0
    %1591 = vmatprep.subr.bf16.mxu0 0
    %1592 = vmatpush2.bf16.msra.mxu0 0
    %1593 = vmatprep.subr.bf16.mxu0 0
    %1594 = vmatpush2.bf16.msra.mxu0 0
    %1595 = vmatprep.subr.bf16.mxu0 0
    %1596 = vmatpush2.bf16.msra.mxu0 0
    %1597 = vmatprep.subr.bf16.mxu0 0
    %1598 = vmatpush2.bf16.msra.mxu0 0
    %1599 = vmatprep.subr.bf16.mxu0 0
    %1600 = vmatpush2.bf16.msra.mxu0 0
    %1601 = vmatprep.mubr.bf16.mxu0 0
    %1602 = vmatmul.mubr.bf16.gmra.mxu0 %v1567
    %v1603 = vpop.f32.mrf.mxu0
    %v1604 = vadd.f32 0.0, %v1603
    %v1605 = vpop.f32.mrf.mxu0
    %v1606 = vpop.f32.mrf.mxu0
    %v1607 = vpop.f32.mrf.mxu0
    %1608 = vdwg.mxu0
    %v1615 = vunpack.c.l.b16 %v1535
    %v1616 = vunpack.c.l.b16 %v1536
    %v1617 = vunpack.c.l.b16 %v1537
    %v1618 = vunpack.c.l.b16 %v1538
    %v1619 = vunpack.c.l.b16 %v1539
    %v1620 = vunpack.c.l.b16 %v1540
    %v1621 = vpack.c.b16 %v1616, %v1615
    %v1622 = vpack.c.b16 %v1618, %v1617
    %v1623 = vpack.c.b16 %v1620, %v1619
    %v1628 = vsel %vm780, %v1525, 0
    %1630 = vmatprep.subr.bf16.mxu0 0
    %1631 = vmatpush1.bf16.msra.mxu0 0
    %1632 = vmatprep.subr.bf16.mxu0 0
    %1633 = vmatpush1.bf16.msra.mxu0 0
    %1634 = vmatprep.subr.bf16.mxu0 0
    %1635 = vmatpush1.bf16.msra.mxu0 0
    %1636 = vmatprep.subr.bf16.mxu0 0
    %1637 = vmatpush1.bf16.msra.mxu0 0
    %1638 = vmatprep.subr.bf16.mxu0 0
    %1639 = vmatpush1.bf16.msra.mxu0 0
    %1640 = vmatprep.subr.bf16.mxu0 0
    %1641 = vmatpush1.bf16.msra.mxu0 %v1623
    %1642 = vmatprep.subr.bf16.mxu0 0
    %1643 = vmatpush1.bf16.msra.mxu0 %v1622
    %1644 = vmatprep.subr.bf16.mxu0 0
    %1645 = vmatpush1.bf16.msra.mxu0 %v1621
    %1646 = vmatprep.subr.bf16.mxu0 0
    %1647 = vmatpush2.bf16.msra.mxu0 0
    %1648 = vmatprep.subr.bf16.mxu0 0
    %1649 = vmatpush2.bf16.msra.mxu0 0
    %1650 = vmatprep.subr.bf16.mxu0 0
    %1651 = vmatpush2.bf16.msra.mxu0 0
    %1652 = vmatprep.subr.bf16.mxu0 0
    %1653 = vmatpush2.bf16.msra.mxu0 0
    %1654 = vmatprep.subr.bf16.mxu0 0
    %1655 = vmatpush2.bf16.msra.mxu0 0
    %1656 = vmatprep.subr.bf16.mxu0 0
    %1657 = vmatpush2.bf16.msra.mxu0 0
    %1658 = vmatprep.subr.bf16.mxu0 0
    %1659 = vmatpush2.bf16.msra.mxu0 0
    %1660 = vmatprep.subr.bf16.mxu0 0
    %1661 = vmatpush2.bf16.msra.mxu0 0
    %1662 = vmatprep.mubr.bf16.mxu0 0
    %1663 = vmatmul.mubr.bf16.gmra.mxu0 %v1628
    %v1664 = vpop.f32.mrf.mxu0
    %v1665 = vadd.f32 %v1604, %v1664
    %v1666 = vpop.f32.mrf.mxu0
    %v1667 = vpop.f32.mrf.mxu0
    %v1668 = vpop.f32.mrf.mxu0
    %1669 = vdwg.mxu0
    %v1671 = vsel %vm780, %v1531, 0
    %1673 = vmatprep.subr.bf16.mxu0 0
    %1674 = vmatpush1.bf16.msra.mxu0 0
    %1675 = vmatprep.subr.bf16.mxu0 0
    %1676 = vmatpush1.bf16.msra.mxu0 0
    %1677 = vmatprep.subr.bf16.mxu0 0
    %1678 = vmatpush1.bf16.msra.mxu0 0
    %1679 = vmatprep.subr.bf16.mxu0 0
    %1680 = vmatpush1.bf16.msra.mxu0 0
    %1681 = vmatprep.subr.bf16.mxu0 0
    %1682 = vmatpush1.bf16.msra.mxu0 0
    %1683 = vmatprep.subr.bf16.mxu0 0
    %1684 = vmatpush1.bf16.msra.mxu0 %v1562
    %1685 = vmatprep.subr.bf16.mxu0 0
    %1686 = vmatpush1.bf16.msra.mxu0 %v1561
    %1687 = vmatprep.subr.bf16.mxu0 0
    %1688 = vmatpush1.bf16.msra.mxu0 %v1560
    %1689 = vmatprep.subr.bf16.mxu0 0
    %1690 = vmatpush2.bf16.msra.mxu0 0
    %1691 = vmatprep.subr.bf16.mxu0 0
    %1692 = vmatpush2.bf16.msra.mxu0 0
    %1693 = vmatprep.subr.bf16.mxu0 0
    %1694 = vmatpush2.bf16.msra.mxu0 0
    %1695 = vmatprep.subr.bf16.mxu0 0
    %1696 = vmatpush2.bf16.msra.mxu0 0
    %1697 = vmatprep.subr.bf16.mxu0 0
    %1698 = vmatpush2.bf16.msra.mxu0 0
    %1699 = vmatprep.subr.bf16.mxu0 0
    %1700 = vmatpush2.bf16.msra.mxu0 0
    %1701 = vmatprep.subr.bf16.mxu0 0
    %1702 = vmatpush2.bf16.msra.mxu0 0
    %1703 = vmatprep.subr.bf16.mxu0 0
    %1704 = vmatpush2.bf16.msra.mxu0 0
    %1705 = vmatprep.mubr.bf16.mxu0 0
    %1706 = vmatmul.mubr.bf16.gmra.mxu0 %v1671
    %v1707 = vpop.f32.mrf.mxu0
    %v1708 = vadd.f32 0.0, %v1707
    %v1709 = vpop.f32.mrf.mxu0
    %v1710 = vpop.f32.mrf.mxu0
    %v1711 = vpop.f32.mrf.mxu0
    %1712 = vdwg.mxu0
    %1713 = vmatprep.subr.bf16.mxu0 0
    %1714 = vmatpush1.bf16.msra.mxu0 0
    %1715 = vmatprep.subr.bf16.mxu0 0
    %1716 = vmatpush1.bf16.msra.mxu0 0
    %1717 = vmatprep.subr.bf16.mxu0 0
    %1718 = vmatpush1.bf16.msra.mxu0 0
    %1719 = vmatprep.subr.bf16.mxu0 0
    %1720 = vmatpush1.bf16.msra.mxu0 0
    %1721 = vmatprep.subr.bf16.mxu0 0
    %1722 = vmatpush1.bf16.msra.mxu0 0
    %1723 = vmatprep.subr.bf16.mxu0 0
    %1724 = vmatpush1.bf16.msra.mxu0 %v1623
    %1725 = vmatprep.subr.bf16.mxu0 0
    %1726 = vmatpush1.bf16.msra.mxu0 %v1622
    %1727 = vmatprep.subr.bf16.mxu0 0
    %1728 = vmatpush1.bf16.msra.mxu0 %v1621
    %1729 = vmatprep.subr.bf16.mxu0 0
    %1730 = vmatpush2.bf16.msra.mxu0 0
    %1731 = vmatprep.subr.bf16.mxu0 0
    %1732 = vmatpush2.bf16.msra.mxu0 0
    %1733 = vmatprep.subr.bf16.mxu0 0
    %1734 = vmatpush2.bf16.msra.mxu0 0
    %1735 = vmatprep.subr.bf16.mxu0 0
    %1736 = vmatpush2.bf16.msra.mxu0 0
    %1737 = vmatprep.subr.bf16.mxu0 0
    %1738 = vmatpush2.bf16.msra.mxu0 0
    %1739 = vmatprep.subr.bf16.mxu0 0
    %1740 = vmatpush2.bf16.msra.mxu0 0
    %1741 = vmatprep.subr.bf16.mxu0 0
    %1742 = vmatpush2.bf16.msra.mxu0 0
    %1743 = vmatprep.subr.bf16.mxu0 0
    %1744 = vmatpush2.bf16.msra.mxu0 0
    %1745 = vmatprep.mubr.bf16.mxu0 0
    %1746 = vmatmul.mubr.bf16.gmra.mxu0 %v1567
    %v1747 = vpop.f32.mrf.mxu0
    %v1748 = vadd.f32 %v1708, %v1747
    %v1749 = vpop.f32.mrf.mxu0
    %v1750 = vpop.f32.mrf.mxu0
    %v1751 = vpop.f32.mrf.mxu0
    %1752 = vdwg.mxu0
    %s1753 = scalar_lea.vmem %s3, 48
    %v1754 = vld [vmem:[%s1753] sm:$0xf]
    %v1755 = vld [vmem:[%s1753 + $0x4] sm:$0xf]
    %v1756 = vld [vmem:[%s1753 + $0x8] sm:$0xf]
    %v1757 = vld [vmem:[%s1753 + $0xc] sm:$0xf]
    %v1758 = vld [vmem:[%s1753 + $0x10] sm:$0xf]
    %v1759 = vld [vmem:[%s1753 + $0x14] sm:$0xf]
    %v1766 = vunpack.c.l.b16 %v1754
    %v1767 = vunpack.c.l.b16 %v1755
    %v1768 = vunpack.c.l.b16 %v1756
    %v1769 = vunpack.c.l.b16 %v1757
    %v1770 = vunpack.c.l.b16 %v1758
    %v1771 = vunpack.c.l.b16 %v1759
    %v1772 = vpack.c.b16 %v1767, %v1766
    %v1773 = vpack.c.b16 %v1769, %v1768
    %v1774 = vpack.c.b16 %v1771, %v1770
    %1778 = vmatprep.subr.bf16.mxu0 0
    %1779 = vmatpush1.bf16.msra.mxu0 0
    %1780 = vmatprep.subr.bf16.mxu0 0
    %1781 = vmatpush1.bf16.msra.mxu0 0
    %1782 = vmatprep.subr.bf16.mxu0 0
    %1783 = vmatpush1.bf16.msra.mxu0 0
    %1784 = vmatprep.subr.bf16.mxu0 0
    %1785 = vmatpush1.bf16.msra.mxu0 0
    %1786 = vmatprep.subr.bf16.mxu0 0
    %1787 = vmatpush1.bf16.msra.mxu0 0
    %1788 = vmatprep.subr.bf16.mxu0 0
    %1789 = vmatpush1.bf16.msra.mxu0 %v1774
    %1790 = vmatprep.subr.bf16.mxu0 0
    %1791 = vmatpush1.bf16.msra.mxu0 %v1773
    %1792 = vmatprep.subr.bf16.mxu0 0
    %1793 = vmatpush1.bf16.msra.mxu0 %v1772
    %1794 = vmatprep.subr.bf16.mxu0 0
    %1795 = vmatpush2.bf16.msra.mxu0 0
    %1796 = vmatprep.subr.bf16.mxu0 0
    %1797 = vmatpush2.bf16.msra.mxu0 0
    %1798 = vmatprep.subr.bf16.mxu0 0
    %1799 = vmatpush2.bf16.msra.mxu0 0
    %1800 = vmatprep.subr.bf16.mxu0 0
    %1801 = vmatpush2.bf16.msra.mxu0 0
    %1802 = vmatprep.subr.bf16.mxu0 0
    %1803 = vmatpush2.bf16.msra.mxu0 0
    %1804 = vmatprep.subr.bf16.mxu0 0
    %1805 = vmatpush2.bf16.msra.mxu0 0
    %1806 = vmatprep.subr.bf16.mxu0 0
    %1807 = vmatpush2.bf16.msra.mxu0 0
    %1808 = vmatprep.subr.bf16.mxu0 0
    %1809 = vmatpush2.bf16.msra.mxu0 0
    %1810 = vmatprep.mubr.bf16.mxu0 0
    %1811 = vmatmul.mubr.bf16.gmra.mxu0 %v1671
    %v1812 = vpop.f32.mrf.mxu0
    %v1813 = vadd.f32 0.0, %v1812
    %v1814 = vpop.f32.mrf.mxu0
    %v1815 = vpop.f32.mrf.mxu0
    %v1816 = vpop.f32.mrf.mxu0
    %1817 = vdwg.mxu0
    %v1818 = vadd.f32 %v1665, %v1813
    %v1820 = vsel %vm780, %v1534, 0
    %1822 = vmatprep.subr.bf16.mxu0 0
    %1823 = vmatpush1.bf16.msra.mxu0 0
    %1824 = vmatprep.subr.bf16.mxu0 0
    %1825 = vmatpush1.bf16.msra.mxu0 0
    %1826 = vmatprep.subr.bf16.mxu0 0
    %1827 = vmatpush1.bf16.msra.mxu0 0
    %1828 = vmatprep.subr.bf16.mxu0 0
    %1829 = vmatpush1.bf16.msra.mxu0 0
    %1830 = vmatprep.subr.bf16.mxu0 0
    %1831 = vmatpush1.bf16.msra.mxu0 0
    %1832 = vmatprep.subr.bf16.mxu0 0
    %1833 = vmatpush1.bf16.msra.mxu0 %v1774
    %1834 = vmatprep.subr.bf16.mxu0 0
    %1835 = vmatpush1.bf16.msra.mxu0 %v1773
    %1836 = vmatprep.subr.bf16.mxu0 0
    %1837 = vmatpush1.bf16.msra.mxu0 %v1772
    %1838 = vmatprep.subr.bf16.mxu0 0
    %1839 = vmatpush2.bf16.msra.mxu0 0
    %1840 = vmatprep.subr.bf16.mxu0 0
    %1841 = vmatpush2.bf16.msra.mxu0 0
    %1842 = vmatprep.subr.bf16.mxu0 0
    %1843 = vmatpush2.bf16.msra.mxu0 0
    %1844 = vmatprep.subr.bf16.mxu0 0
    %1845 = vmatpush2.bf16.msra.mxu0 0
    %1846 = vmatprep.subr.bf16.mxu0 0
    %1847 = vmatpush2.bf16.msra.mxu0 0
    %1848 = vmatprep.subr.bf16.mxu0 0
    %1849 = vmatpush2.bf16.msra.mxu0 0
    %1850 = vmatprep.subr.bf16.mxu0 0
    %1851 = vmatpush2.bf16.msra.mxu0 0
    %1852 = vmatprep.subr.bf16.mxu0 0
    %1853 = vmatpush2.bf16.msra.mxu0 0
    %1854 = vmatprep.mubr.bf16.mxu0 0
    %1855 = vmatmul.mubr.bf16.gmra.mxu0 %v1820
    %v1856 = vpop.f32.mrf.mxu0
    %v1857 = vadd.f32 0.0, %v1856
    %v1858 = vpop.f32.mrf.mxu0
    %v1859 = vpop.f32.mrf.mxu0
    %v1860 = vpop.f32.mrf.mxu0
    %1861 = vdwg.mxu0
    %v1862 = vadd.f32 %v1748, %v1857
    %v1863 = vmax.f32 %v1818, %v1862
    %1865 = vrot.lane.b32.xlu0 %v1863, 88
    %v1866 = vpop.permute.xlu0 %1865
    %v1868 = vmax.f32 %v1863, %v1866
    %v1869 = vld [vmem:[%s4] sm:$0x1]
    %v1871 = vlaneseq
    %v1872 = vshrl.u32 %v1871, 7
    %v1873 = vsub.s32 0, %v1872
    %v1874 = vrot.slane %v1869, %v1873
    %v1876 = vadd.f32 %v1868, %v1874
    %vm1877 = vcmp.gt.f32.partialorder %v1876, 0.0
    %v1878 = vmin.f32 %v1876, 0.0
    %v1879 = vmul.f32 %v1878, 1.442695
    %v1880 = vpow.pop %v1879
    %v1881 = vsub.f32 %v1880, 1.0
    %v1882 = vsel %vm1877, %v1876, %v1881
    %vm1883 = vcmask 323584
    %1884 = vst.msk [vmem:[#allocation3] sm:$0x1f] %vm1883, %v1882
    %s1885 = scalar_lea.vmem [#allocation2], 12
    %v1886 = vld [vmem:[%s1885] ss:$2 sm:$0x1f]
    %v1887 = vpack.c.bf16 %v1886, %v1886
    %s1888 = scalar_lea.vmem [#allocation2], 13
    %v1889 = vld [vmem:[%s1888] ss:$2 sm:$0x1f]
    %v1890 = vpack.c.bf16 %v1889, %v1889
    %s1891 = scalar_lea.vmem [#allocation2], 14
    %v1892 = vld [vmem:[%s1891] ss:$2 sm:$0x1f]
    %v1893 = vpack.c.bf16 %v1892, %v1892
    %s1894 = scalar_lea.vmem [#allocation2], 15
    %v1895 = vld [vmem:[%s1894] ss:$2 sm:$0x1f]
    %v1896 = vpack.c.bf16 %v1895, %v1895
    %v1897 = vld [vmem:[%s3] sm:$0xf]
    %v1898 = vld [vmem:[%s3 + $0x4] sm:$0xf]
    %v1899 = vld [vmem:[%s3 + $0x8] sm:$0xf]
    %v1900 = vld [vmem:[%s3 + $0xc] sm:$0xf]
    %v1901 = vld [vmem:[%s3 + $0x10] sm:$0xf]
    %v1902 = vld [vmem:[%s3 + $0x14] sm:$0xf]
    %v1903 = vld [vmem:[%s1541] sm:$0xf]
    %v1904 = vld [vmem:[%s1541 + $0x4] sm:$0xf]
    %v1905 = vld [vmem:[%s1541 + $0x8] sm:$0xf]
    %v1906 = vld [vmem:[%s1541 + $0xc] sm:$0xf]
    %v1907 = vld [vmem:[%s1541 + $0x10] sm:$0xf]
    %v1908 = vld [vmem:[%s1541 + $0x14] sm:$0xf]
    %v1915 = vunpack.c.l.b16 %v1903
    %v1916 = vunpack.c.l.b16 %v1904
    %v1917 = vunpack.c.l.b16 %v1905
    %v1918 = vunpack.c.l.b16 %v1906
    %v1919 = vunpack.c.l.b16 %v1907
    %v1920 = vunpack.c.l.b16 %v1908
    %v1921 = vpack.c.b16 %v1916, %v1915
    %v1922 = vpack.c.b16 %v1918, %v1917
    %v1923 = vpack.c.b16 %v1920, %v1919
    %v1928 = vsel %vm780, %v1890, 0
    %1930 = vmatprep.subr.bf16.mxu0 0
    %1931 = vmatpush1.bf16.msra.mxu0 0
    %1932 = vmatprep.subr.bf16.mxu0 0
    %1933 = vmatpush1.bf16.msra.mxu0 0
    %1934 = vmatprep.subr.bf16.mxu0 0
    %1935 = vmatpush1.bf16.msra.mxu0 0
    %1936 = vmatprep.subr.bf16.mxu0 0
    %1937 = vmatpush1.bf16.msra.mxu0 0
    %1938 = vmatprep.subr.bf16.mxu0 0
    %1939 = vmatpush1.bf16.msra.mxu0 0
    %1940 = vmatprep.subr.bf16.mxu0 0
    %1941 = vmatpush1.bf16.msra.mxu0 %v1923
    %1942 = vmatprep.subr.bf16.mxu0 0
    %1943 = vmatpush1.bf16.msra.mxu0 %v1922
    %1944 = vmatprep.subr.bf16.mxu0 0
    %1945 = vmatpush1.bf16.msra.mxu0 %v1921
    %1946 = vmatprep.subr.bf16.mxu0 0
    %1947 = vmatpush2.bf16.msra.mxu0 0
    %1948 = vmatprep.subr.bf16.mxu0 0
    %1949 = vmatpush2.bf16.msra.mxu0 0
    %1950 = vmatprep.subr.bf16.mxu0 0
    %1951 = vmatpush2.bf16.msra.mxu0 0
    %1952 = vmatprep.subr.bf16.mxu0 0
    %1953 = vmatpush2.bf16.msra.mxu0 0
    %1954 = vmatprep.subr.bf16.mxu0 0
    %1955 = vmatpush2.bf16.msra.mxu0 0
    %1956 = vmatprep.subr.bf16.mxu0 0
    %1957 = vmatpush2.bf16.msra.mxu0 0
    %1958 = vmatprep.subr.bf16.mxu0 0
    %1959 = vmatpush2.bf16.msra.mxu0 0
    %1960 = vmatprep.subr.bf16.mxu0 0
    %1961 = vmatpush2.bf16.msra.mxu0 0
    %1962 = vmatprep.mubr.bf16.mxu0 0
    %1963 = vmatmul.mubr.bf16.gmra.mxu0 %v1928
    %v1964 = vpop.f32.mrf.mxu0
    %v1965 = vadd.f32 0.0, %v1964
    %v1966 = vpop.f32.mrf.mxu0
    %v1967 = vpop.f32.mrf.mxu0
    %v1968 = vpop.f32.mrf.mxu0
    %1969 = vdwg.mxu0
    %v1976 = vunpack.c.l.b16 %v1897
    %v1977 = vunpack.c.l.b16 %v1898
    %v1978 = vunpack.c.l.b16 %v1899
    %v1979 = vunpack.c.l.b16 %v1900
    %v1980 = vunpack.c.l.b16 %v1901
    %v1981 = vunpack.c.l.b16 %v1902
    %v1982 = vpack.c.b16 %v1977, %v1976
    %v1983 = vpack.c.b16 %v1979, %v1978
    %v1984 = vpack.c.b16 %v1981, %v1980
    %v1989 = vsel %vm780, %v1887, 0
    %1991 = vmatprep.subr.bf16.mxu0 0
    %1992 = vmatpush1.bf16.msra.mxu0 0
    %1993 = vmatprep.subr.bf16.mxu0 0
    %1994 = vmatpush1.bf16.msra.mxu0 0
    %1995 = vmatprep.subr.bf16.mxu0 0
    %1996 = vmatpush1.bf16.msra.mxu0 0
    %1997 = vmatprep.subr.bf16.mxu0 0
    %1998 = vmatpush1.bf16.msra.mxu0 0
    %1999 = vmatprep.subr.bf16.mxu0 0
    %2000 = vmatpush1.bf16.msra.mxu0 0
    %2001 = vmatprep.subr.bf16.mxu0 0
    %2002 = vmatpush1.bf16.msra.mxu0 %v1984
    %2003 = vmatprep.subr.bf16.mxu0 0
    %2004 = vmatpush1.bf16.msra.mxu0 %v1983
    %2005 = vmatprep.subr.bf16.mxu0 0
    %2006 = vmatpush1.bf16.msra.mxu0 %v1982
    %2007 = vmatprep.subr.bf16.mxu0 0
    %2008 = vmatpush2.bf16.msra.mxu0 0
    %2009 = vmatprep.subr.bf16.mxu0 0
    %2010 = vmatpush2.bf16.msra.mxu0 0
    %2011 = vmatprep.subr.bf16.mxu0 0
    %2012 = vmatpush2.bf16.msra.mxu0 0
    %2013 = vmatprep.subr.bf16.mxu0 0
    %2014 = vmatpush2.bf16.msra.mxu0 0
    %2015 = vmatprep.subr.bf16.mxu0 0
    %2016 = vmatpush2.bf16.msra.mxu0 0
    %2017 = vmatprep.subr.bf16.mxu0 0
    %2018 = vmatpush2.bf16.msra.mxu0 0
    %2019 = vmatprep.subr.bf16.mxu0 0
    %2020 = vmatpush2.bf16.msra.mxu0 0
    %2021 = vmatprep.subr.bf16.mxu0 0
    %2022 = vmatpush2.bf16.msra.mxu0 0
    %2023 = vmatprep.mubr.bf16.mxu0 0
    %2024 = vmatmul.mubr.bf16.gmra.mxu0 %v1989
    %v2025 = vpop.f32.mrf.mxu0
    %v2026 = vadd.f32 %v1965, %v2025
    %v2027 = vpop.f32.mrf.mxu0
    %v2028 = vpop.f32.mrf.mxu0
    %v2029 = vpop.f32.mrf.mxu0
    %2030 = vdwg.mxu0
    %v2032 = vsel %vm780, %v1893, 0
    %2034 = vmatprep.subr.bf16.mxu0 0
    %2035 = vmatpush1.bf16.msra.mxu0 0
    %2036 = vmatprep.subr.bf16.mxu0 0
    %2037 = vmatpush1.bf16.msra.mxu0 0
    %2038 = vmatprep.subr.bf16.mxu0 0
    %2039 = vmatpush1.bf16.msra.mxu0 0
    %2040 = vmatprep.subr.bf16.mxu0 0
    %2041 = vmatpush1.bf16.msra.mxu0 0
    %2042 = vmatprep.subr.bf16.mxu0 0
    %2043 = vmatpush1.bf16.msra.mxu0 0
    %2044 = vmatprep.subr.bf16.mxu0 0
    %2045 = vmatpush1.bf16.msra.mxu0 %v1923
    %2046 = vmatprep.subr.bf16.mxu0 0
    %2047 = vmatpush1.bf16.msra.mxu0 %v1922
    %2048 = vmatprep.subr.bf16.mxu0 0
    %2049 = vmatpush1.bf16.msra.mxu0 %v1921
    %2050 = vmatprep.subr.bf16.mxu0 0
    %2051 = vmatpush2.bf16.msra.mxu0 0
    %2052 = vmatprep.subr.bf16.mxu0 0
    %2053 = vmatpush2.bf16.msra.mxu0 0
    %2054 = vmatprep.subr.bf16.mxu0 0
    %2055 = vmatpush2.bf16.msra.mxu0 0
    %2056 = vmatprep.subr.bf16.mxu0 0
    %2057 = vmatpush2.bf16.msra.mxu0 0
    %2058 = vmatprep.subr.bf16.mxu0 0
    %2059 = vmatpush2.bf16.msra.mxu0 0
    %2060 = vmatprep.subr.bf16.mxu0 0
    %2061 = vmatpush2.bf16.msra.mxu0 0
    %2062 = vmatprep.subr.bf16.mxu0 0
    %2063 = vmatpush2.bf16.msra.mxu0 0
    %2064 = vmatprep.subr.bf16.mxu0 0
    %2065 = vmatpush2.bf16.msra.mxu0 0
    %2066 = vmatprep.mubr.bf16.mxu0 0
    %2067 = vmatmul.mubr.bf16.gmra.mxu0 %v2032
    %v2068 = vpop.f32.mrf.mxu0
    %v2069 = vadd.f32 0.0, %v2068
    %v2070 = vpop.f32.mrf.mxu0
    %v2071 = vpop.f32.mrf.mxu0
    %v2072 = vpop.f32.mrf.mxu0
    %2073 = vdwg.mxu0
    %2074 = vmatprep.subr.bf16.mxu0 0
    %2075 = vmatpush1.bf16.msra.mxu0 0
    %2076 = vmatprep.subr.bf16.mxu0 0
    %2077 = vmatpush1.bf16.msra.mxu0 0
    %2078 = vmatprep.subr.bf16.mxu0 0
    %2079 = vmatpush1.bf16.msra.mxu0 0
    %2080 = vmatprep.subr.bf16.mxu0 0
    %2081 = vmatpush1.bf16.msra.mxu0 0
    %2082 = vmatprep.subr.bf16.mxu0 0
    %2083 = vmatpush1.bf16.msra.mxu0 0
    %2084 = vmatprep.subr.bf16.mxu0 0
    %2085 = vmatpush1.bf16.msra.mxu0 %v1984
    %2086 = vmatprep.subr.bf16.mxu0 0
    %2087 = vmatpush1.bf16.msra.mxu0 %v1983
    %2088 = vmatprep.subr.bf16.mxu0 0
    %2089 = vmatpush1.bf16.msra.mxu0 %v1982
    %2090 = vmatprep.subr.bf16.mxu0 0
    %2091 = vmatpush2.bf16.msra.mxu0 0
    %2092 = vmatprep.subr.bf16.mxu0 0
    %2093 = vmatpush2.bf16.msra.mxu0 0
    %2094 = vmatprep.subr.bf16.mxu0 0
    %2095 = vmatpush2.bf16.msra.mxu0 0
    %2096 = vmatprep.subr.bf16.mxu0 0
    %2097 = vmatpush2.bf16.msra.mxu0 0
    %2098 = vmatprep.subr.bf16.mxu0 0
    %2099 = vmatpush2.bf16.msra.mxu0 0
    %2100 = vmatprep.subr.bf16.mxu0 0
    %2101 = vmatpush2.bf16.msra.mxu0 0
    %2102 = vmatprep.subr.bf16.mxu0 0
    %2103 = vmatpush2.bf16.msra.mxu0 0
    %2104 = vmatprep.subr.bf16.mxu0 0
    %2105 = vmatpush2.bf16.msra.mxu0 0
    %2106 = vmatprep.mubr.bf16.mxu0 0
    %2107 = vmatmul.mubr.bf16.gmra.mxu0 %v1928
    %v2108 = vpop.f32.mrf.mxu0
    %v2109 = vadd.f32 %v2069, %v2108
    %v2110 = vpop.f32.mrf.mxu0
    %v2111 = vpop.f32.mrf.mxu0
    %v2112 = vpop.f32.mrf.mxu0
    %2113 = vdwg.mxu0
    %v2114 = vld [vmem:[%s1753] sm:$0xf]
    %v2115 = vld [vmem:[%s1753 + $0x4] sm:$0xf]
    %v2116 = vld [vmem:[%s1753 + $0x8] sm:$0xf]
    %v2117 = vld [vmem:[%s1753 + $0xc] sm:$0xf]
    %v2118 = vld [vmem:[%s1753 + $0x10] sm:$0xf]
    %v2119 = vld [vmem:[%s1753 + $0x14] sm:$0xf]
    %v2126 = vunpack.c.l.b16 %v2114
    %v2127 = vunpack.c.l.b16 %v2115
    %v2128 = vunpack.c.l.b16 %v2116
    %v2129 = vunpack.c.l.b16 %v2117
    %v2130 = vunpack.c.l.b16 %v2118
    %v2131 = vunpack.c.l.b16 %v2119
    %v2132 = vpack.c.b16 %v2127, %v2126
    %v2133 = vpack.c.b16 %v2129, %v2128
    %v2134 = vpack.c.b16 %v2131, %v2130
    %2138 = vmatprep.subr.bf16.mxu0 0
    %2139 = vmatpush1.bf16.msra.mxu0 0
    %2140 = vmatprep.subr.bf16.mxu0 0
    %2141 = vmatpush1.bf16.msra.mxu0 0
    %2142 = vmatprep.subr.bf16.mxu0 0
    %2143 = vmatpush1.bf16.msra.mxu0 0
    %2144 = vmatprep.subr.bf16.mxu0 0
    %2145 = vmatpush1.bf16.msra.mxu0 0
    %2146 = vmatprep.subr.bf16.mxu0 0
    %2147 = vmatpush1.bf16.msra.mxu0 0
    %2148 = vmatprep.subr.bf16.mxu0 0
    %2149 = vmatpush1.bf16.msra.mxu0 %v2134
    %2150 = vmatprep.subr.bf16.mxu0 0
    %2151 = vmatpush1.bf16.msra.mxu0 %v2133
    %2152 = vmatprep.subr.bf16.mxu0 0
    %2153 = vmatpush1.bf16.msra.mxu0 %v2132
    %2154 = vmatprep.subr.bf16.mxu0 0
    %2155 = vmatpush2.bf16.msra.mxu0 0
    %2156 = vmatprep.subr.bf16.mxu0 0
    %2157 = vmatpush2.bf16.msra.mxu0 0
    %2158 = vmatprep.subr.bf16.mxu0 0
    %2159 = vmatpush2.bf16.msra.mxu0 0
    %2160 = vmatprep.subr.bf16.mxu0 0
    %2161 = vmatpush2.bf16.msra.mxu0 0
    %2162 = vmatprep.subr.bf16.mxu0 0
    %2163 = vmatpush2.bf16.msra.mxu0 0
    %2164 = vmatprep.subr.bf16.mxu0 0
    %2165 = vmatpush2.bf16.msra.mxu0 0
    %2166 = vmatprep.subr.bf16.mxu0 0
    %2167 = vmatpush2.bf16.msra.mxu0 0
    %2168 = vmatprep.subr.bf16.mxu0 0
    %2169 = vmatpush2.bf16.msra.mxu0 0
    %2170 = vmatprep.mubr.bf16.mxu0 0
    %2171 = vmatmul.mubr.bf16.gmra.mxu0 %v2032
    %v2172 = vpop.f32.mrf.mxu0
    %v2173 = vadd.f32 0.0, %v2172
    %v2174 = vpop.f32.mrf.mxu0
    %v2175 = vpop.f32.mrf.mxu0
    %v2176 = vpop.f32.mrf.mxu0
    %2177 = vdwg.mxu0
    %v2178 = vadd.f32 %v2026, %v2173
    %v2180 = vsel %vm780, %v1896, 0
    %2182 = vmatprep.subr.bf16.mxu0 0
    %2183 = vmatpush1.bf16.msra.mxu0 0
    %2184 = vmatprep.subr.bf16.mxu0 0
    %2185 = vmatpush1.bf16.msra.mxu0 0
    %2186 = vmatprep.subr.bf16.mxu0 0
    %2187 = vmatpush1.bf16.msra.mxu0 0
    %2188 = vmatprep.subr.bf16.mxu0 0
    %2189 = vmatpush1.bf16.msra.mxu0 0
    %2190 = vmatprep.subr.bf16.mxu0 0
    %2191 = vmatpush1.bf16.msra.mxu0 0
    %2192 = vmatprep.subr.bf16.mxu0 0
    %2193 = vmatpush1.bf16.msra.mxu0 %v2134
    %2194 = vmatprep.subr.bf16.mxu0 0
    %2195 = vmatpush1.bf16.msra.mxu0 %v2133
    %2196 = vmatprep.subr.bf16.mxu0 0
    %2197 = vmatpush1.bf16.msra.mxu0 %v2132
    %2198 = vmatprep.subr.bf16.mxu0 0
    %2199 = vmatpush2.bf16.msra.mxu0 0
    %2200 = vmatprep.subr.bf16.mxu0 0
    %2201 = vmatpush2.bf16.msra.mxu0 0
    %2202 = vmatprep.subr.bf16.mxu0 0
    %2203 = vmatpush2.bf16.msra.mxu0 0
    %2204 = vmatprep.subr.bf16.mxu0 0
    %2205 = vmatpush2.bf16.msra.mxu0 0
    %2206 = vmatprep.subr.bf16.mxu0 0
    %2207 = vmatpush2.bf16.msra.mxu0 0
    %2208 = vmatprep.subr.bf16.mxu0 0
    %2209 = vmatpush2.bf16.msra.mxu0 0
    %2210 = vmatprep.subr.bf16.mxu0 0
    %2211 = vmatpush2.bf16.msra.mxu0 0
    %2212 = vmatprep.subr.bf16.mxu0 0
    %2213 = vmatpush2.bf16.msra.mxu0 0
    %2214 = vmatprep.mubr.bf16.mxu0 0
    %2215 = vmatmul.mubr.bf16.gmra.mxu0 %v2180
    %v2216 = vpop.f32.mrf.mxu0
    %v2217 = vadd.f32 0.0, %v2216
    %v2218 = vpop.f32.mrf.mxu0
    %v2219 = vpop.f32.mrf.mxu0
    %v2220 = vpop.f32.mrf.mxu0
    %2221 = vdwg.mxu0
    %v2222 = vadd.f32 %v2109, %v2217
    %v2223 = vmax.f32 %v2178, %v2222
    %2225 = vrot.lane.b32.xlu0 %v2223, 88
    %v2226 = vpop.permute.xlu0 %2225
    %v2228 = vmax.f32 %v2223, %v2226
    %v2229 = vld [vmem:[%s4] sm:$0x1]
    %v2231 = vlaneseq
    %v2232 = vshrl.u32 %v2231, 7
    %v2233 = vsub.s32 0, %v2232
    %v2234 = vrot.slane %v2229, %v2233
    %v2236 = vadd.f32 %v2228, %v2234
    %vm2237 = vcmp.gt.f32.partialorder %v2236, 0.0
    %v2238 = vmin.f32 %v2236, 0.0
    %v2239 = vmul.f32 %v2238, 1.442695
    %v2240 = vpow.pop %v2239
    %v2241 = vsub.f32 %v2240, 1.0
    %v2242 = vsel %vm2237, %v2236, %v2241
    %2243 = vst.msk [vmem:[#allocation3 + $0x5] sm:$0x1f] %vm1883, %v2242
    %v2244 = vld [vmem:[#allocation3] ss:$2 sm:$0x3]
    %v2245 = vpack.c.bf16 %v2244, %v2244
    %s2246 = scalar_lea.vmem [#allocation3], 1
    %v2247 = vld [vmem:[%s2246] ss:$2 sm:$0x3]
    %v2248 = vpack.c.bf16 %v2247, %v2247
    %s2249 = scalar_lea.vmem [#allocation3], 2
    %v2250 = vld [vmem:[%s2249] ss:$2 sm:$0x3]
    %v2251 = vpack.c.bf16 %v2250, %v2250
    %v2252 = vld [vmem:[%s5] sm:$0xf]
    %v2253 = vld [vmem:[%s5 + $0x4] sm:$0xf]
    %v2254 = vld [vmem:[%s5 + $0x8] sm:$0xf]
    %v2255 = vld [vmem:[%s5 + $0xc] sm:$0xf]
    %v2256 = vld [vmem:[%s5 + $0x10] sm:$0xf]
    %s2257 = scalar_lea.vmem %s5, 20
    %v2258 = vld [vmem:[%s2257] sm:$0xf]
    %v2259 = vld [vmem:[%s2257 + $0x4] sm:$0xf]
    %v2260 = vld [vmem:[%s2257 + $0x8] sm:$0xf]
    %v2261 = vld [vmem:[%s2257 + $0xc] sm:$0xf]
    %v2262 = vld [vmem:[%s2257 + $0x10] sm:$0xf]
    %v2268 = vunpack.c.l.b16 %v2258
    %v2269 = vunpack.c.l.b16 %v2259
    %v2270 = vunpack.c.l.b16 %v2260
    %v2271 = vunpack.c.l.b16 %v2261
    %v2272 = vunpack.c.l.b16 %v2262
    %v2273 = vpack.c.b16 %v2269, %v2268
    %v2274 = vpack.c.b16 %v2271, %v2270
    %v2275 = vpack.c.b16 %v2272, %v2272
    %vm2278 = vcmask 326656
    %v2280 = vsel %vm2278, %v2248, 0
    %vm2282 = vcmask 1043456
    %v2284 = vsel %vm2282, %v2275, 0
    %2286 = vmatprep.subr.bf16.mxu0 0
    %2287 = vmatpush1.bf16.msra.mxu0 0
    %2288 = vmatprep.subr.bf16.mxu0 0
    %2289 = vmatpush1.bf16.msra.mxu0 0
    %2290 = vmatprep.subr.bf16.mxu0 0
    %2291 = vmatpush1.bf16.msra.mxu0 0
    %2292 = vmatprep.subr.bf16.mxu0 0
    %2293 = vmatpush1.bf16.msra.mxu0 0
    %2294 = vmatprep.subr.bf16.mxu0 0
    %2295 = vmatpush1.bf16.msra.mxu0 0
    %2296 = vmatprep.subr.bf16.mxu0 0
    %2297 = vmatpush1.bf16.msra.mxu0 %v2284
    %2298 = vmatprep.subr.bf16.mxu0 0
    %2299 = vmatpush1.bf16.msra.mxu0 %v2274
    %2300 = vmatprep.subr.bf16.mxu0 0
    %2301 = vmatpush1.bf16.msra.mxu0 %v2273
    %2302 = vmatprep.subr.bf16.mxu0 0
    %2303 = vmatpush2.bf16.msra.mxu0 0
    %2304 = vmatprep.subr.bf16.mxu0 0
    %2305 = vmatpush2.bf16.msra.mxu0 0
    %2306 = vmatprep.subr.bf16.mxu0 0
    %2307 = vmatpush2.bf16.msra.mxu0 0
    %2308 = vmatprep.subr.bf16.mxu0 0
    %2309 = vmatpush2.bf16.msra.mxu0 0
    %2310 = vmatprep.subr.bf16.mxu0 0
    %2311 = vmatpush2.bf16.msra.mxu0 0
    %2312 = vmatprep.subr.bf16.mxu0 0
    %2313 = vmatpush2.bf16.msra.mxu0 0
    %2314 = vmatprep.subr.bf16.mxu0 0
    %2315 = vmatpush2.bf16.msra.mxu0 0
    %2316 = vmatprep.subr.bf16.mxu0 0
    %2317 = vmatpush2.bf16.msra.mxu0 0
    %2318 = vmatprep.mubr.bf16.mxu0 0
    %2319 = vmatmul.mubr.bf16.gmra.mxu0 %v2280
    %v2320 = vpop.f32.mrf.mxu0
    %v2321 = vadd.f32 0.0, %v2320
    %v2322 = vpop.f32.mrf.mxu0
    %v2323 = vpop.f32.mrf.mxu0
    %v2324 = vpop.f32.mrf.mxu0
    %2325 = vdwg.mxu0
    %v2331 = vunpack.c.l.b16 %v2252
    %v2332 = vunpack.c.l.b16 %v2253
    %v2333 = vunpack.c.l.b16 %v2254
    %v2334 = vunpack.c.l.b16 %v2255
    %v2335 = vunpack.c.l.b16 %v2256
    %v2336 = vpack.c.b16 %v2332, %v2331
    %v2337 = vpack.c.b16 %v2334, %v2333
    %v2338 = vpack.c.b16 %v2335, %v2335
    %v2342 = vsel %vm2278, %v2245, 0
    %v2345 = vsel %vm2282, %v2338, 0
    %2347 = vmatprep.subr.bf16.mxu0 0
    %2348 = vmatpush1.bf16.msra.mxu0 0
    %2349 = vmatprep.subr.bf16.mxu0 0
    %2350 = vmatpush1.bf16.msra.mxu0 0
    %2351 = vmatprep.subr.bf16.mxu0 0
    %2352 = vmatpush1.bf16.msra.mxu0 0
    %2353 = vmatprep.subr.bf16.mxu0 0
    %2354 = vmatpush1.bf16.msra.mxu0 0
    %2355 = vmatprep.subr.bf16.mxu0 0
    %2356 = vmatpush1.bf16.msra.mxu0 0
    %2357 = vmatprep.subr.bf16.mxu0 0
    %2358 = vmatpush1.bf16.msra.mxu0 %v2345
    %2359 = vmatprep.subr.bf16.mxu0 0
    %2360 = vmatpush1.bf16.msra.mxu0 %v2337
    %2361 = vmatprep.subr.bf16.mxu0 0
    %2362 = vmatpush1.bf16.msra.mxu0 %v2336
    %2363 = vmatprep.subr.bf16.mxu0 0
    %2364 = vmatpush2.bf16.msra.mxu0 0
    %2365 = vmatprep.subr.bf16.mxu0 0
    %2366 = vmatpush2.bf16.msra.mxu0 0
    %2367 = vmatprep.subr.bf16.mxu0 0
    %2368 = vmatpush2.bf16.msra.mxu0 0
    %2369 = vmatprep.subr.bf16.mxu0 0
    %2370 = vmatpush2.bf16.msra.mxu0 0
    %2371 = vmatprep.subr.bf16.mxu0 0
    %2372 = vmatpush2.bf16.msra.mxu0 0
    %2373 = vmatprep.subr.bf16.mxu0 0
    %2374 = vmatpush2.bf16.msra.mxu0 0
    %2375 = vmatprep.subr.bf16.mxu0 0
    %2376 = vmatpush2.bf16.msra.mxu0 0
    %2377 = vmatprep.subr.bf16.mxu0 0
    %2378 = vmatpush2.bf16.msra.mxu0 0
    %2379 = vmatprep.mubr.bf16.mxu0 0
    %2380 = vmatmul.mubr.bf16.gmra.mxu0 %v2342
    %v2381 = vpop.f32.mrf.mxu0
    %v2382 = vadd.f32 %v2321, %v2381
    %v2383 = vpop.f32.mrf.mxu0
    %v2384 = vpop.f32.mrf.mxu0
    %v2385 = vpop.f32.mrf.mxu0
    %2386 = vdwg.mxu0
    %v2388 = vsel %vm2278, %v2251, 0
    %2390 = vmatprep.subr.bf16.mxu0 0
    %2391 = vmatpush1.bf16.msra.mxu0 0
    %2392 = vmatprep.subr.bf16.mxu0 0
    %2393 = vmatpush1.bf16.msra.mxu0 0
    %2394 = vmatprep.subr.bf16.mxu0 0
    %2395 = vmatpush1.bf16.msra.mxu0 0
    %2396 = vmatprep.subr.bf16.mxu0 0
    %2397 = vmatpush1.bf16.msra.mxu0 0
    %2398 = vmatprep.subr.bf16.mxu0 0
    %2399 = vmatpush1.bf16.msra.mxu0 0
    %2400 = vmatprep.subr.bf16.mxu0 0
    %2401 = vmatpush1.bf16.msra.mxu0 %v2284
    %2402 = vmatprep.subr.bf16.mxu0 0
    %2403 = vmatpush1.bf16.msra.mxu0 %v2274
    %2404 = vmatprep.subr.bf16.mxu0 0
    %2405 = vmatpush1.bf16.msra.mxu0 %v2273
    %2406 = vmatprep.subr.bf16.mxu0 0
    %2407 = vmatpush2.bf16.msra.mxu0 0
    %2408 = vmatprep.subr.bf16.mxu0 0
    %2409 = vmatpush2.bf16.msra.mxu0 0
    %2410 = vmatprep.subr.bf16.mxu0 0
    %2411 = vmatpush2.bf16.msra.mxu0 0
    %2412 = vmatprep.subr.bf16.mxu0 0
    %2413 = vmatpush2.bf16.msra.mxu0 0
    %2414 = vmatprep.subr.bf16.mxu0 0
    %2415 = vmatpush2.bf16.msra.mxu0 0
    %2416 = vmatprep.subr.bf16.mxu0 0
    %2417 = vmatpush2.bf16.msra.mxu0 0
    %2418 = vmatprep.subr.bf16.mxu0 0
    %2419 = vmatpush2.bf16.msra.mxu0 0
    %2420 = vmatprep.subr.bf16.mxu0 0
    %2421 = vmatpush2.bf16.msra.mxu0 0
    %2422 = vmatprep.mubr.bf16.mxu0 0
    %2423 = vmatmul.mubr.bf16.gmra.mxu0 %v2388
    %v2424 = vpop.f32.mrf.mxu0
    %v2425 = vadd.f32 0.0, %v2424
    %v2426 = vpop.f32.mrf.mxu0
    %v2427 = vpop.f32.mrf.mxu0
    %v2428 = vpop.f32.mrf.mxu0
    %2429 = vdwg.mxu0
    %2430 = vmatprep.subr.bf16.mxu0 0
    %2431 = vmatpush1.bf16.msra.mxu0 0
    %2432 = vmatprep.subr.bf16.mxu0 0
    %2433 = vmatpush1.bf16.msra.mxu0 0
    %2434 = vmatprep.subr.bf16.mxu0 0
    %2435 = vmatpush1.bf16.msra.mxu0 0
    %2436 = vmatprep.subr.bf16.mxu0 0
    %2437 = vmatpush1.bf16.msra.mxu0 0
    %2438 = vmatprep.subr.bf16.mxu0 0
    %2439 = vmatpush1.bf16.msra.mxu0 0
    %2440 = vmatprep.subr.bf16.mxu0 0
    %2441 = vmatpush1.bf16.msra.mxu0 %v2345
    %2442 = vmatprep.subr.bf16.mxu0 0
    %2443 = vmatpush1.bf16.msra.mxu0 %v2337
    %2444 = vmatprep.subr.bf16.mxu0 0
    %2445 = vmatpush1.bf16.msra.mxu0 %v2336
    %2446 = vmatprep.subr.bf16.mxu0 0
    %2447 = vmatpush2.bf16.msra.mxu0 0
    %2448 = vmatprep.subr.bf16.mxu0 0
    %2449 = vmatpush2.bf16.msra.mxu0 0
    %2450 = vmatprep.subr.bf16.mxu0 0
    %2451 = vmatpush2.bf16.msra.mxu0 0
    %2452 = vmatprep.subr.bf16.mxu0 0
    %2453 = vmatpush2.bf16.msra.mxu0 0
    %2454 = vmatprep.subr.bf16.mxu0 0
    %2455 = vmatpush2.bf16.msra.mxu0 0
    %2456 = vmatprep.subr.bf16.mxu0 0
    %2457 = vmatpush2.bf16.msra.mxu0 0
    %2458 = vmatprep.subr.bf16.mxu0 0
    %2459 = vmatpush2.bf16.msra.mxu0 0
    %2460 = vmatprep.subr.bf16.mxu0 0
    %2461 = vmatpush2.bf16.msra.mxu0 0
    %2462 = vmatprep.mubr.bf16.mxu0 0
    %2463 = vmatmul.mubr.bf16.gmra.mxu0 %v2280
    %v2464 = vpop.f32.mrf.mxu0
    %v2465 = vadd.f32 %v2425, %v2464
    %v2466 = vpop.f32.mrf.mxu0
    %v2467 = vpop.f32.mrf.mxu0
    %v2468 = vpop.f32.mrf.mxu0
    %2469 = vdwg.mxu0
    %v2470 = vmax.f32 %v2382, %v2465
    %2472 = vrot.lane.b32.xlu0 %v2470, 96
    %v2473 = vpop.permute.xlu0 %2472
    %v2475 = vmax.f32 %v2470, %v2473
    %v2476 = vld [vmem:[%s6] sm:$0x1]
    %v2478 = vlaneseq
    %v2479 = vshrl.u32 %v2478, 7
    %v2480 = vsub.s32 0, %v2479
    %v2481 = vrot.slane %v2476, %v2480
    %v2483 = vadd.f32 %v2475, %v2481
    %vm2484 = vcmp.gt.f32.partialorder %v2483, 0.0
    %v2485 = vmin.f32 %v2483, 0.0
    %v2486 = vmul.f32 %v2485, 1.442695
    %v2487 = vpow.pop %v2486
    %v2488 = vsub.f32 %v2487, 1.0
    %v2489 = vsel %vm2484, %v2483, %v2488
    %vm2490 = vcmask 254976
    %2491 = vst.msk [vmem:[#allocation4] sm:$0x3] %vm2490, %v2489
    %s2492 = scalar_lea.vmem [#allocation3], 5
    %v2493 = vld [vmem:[%s2492] ss:$2 sm:$0x3]
    %v2494 = vpack.c.bf16 %v2493, %v2493
    %s2495 = scalar_lea.vmem [#allocation3], 6
    %v2496 = vld [vmem:[%s2495] ss:$2 sm:$0x3]
    %v2497 = vpack.c.bf16 %v2496, %v2496
    %s2498 = scalar_lea.vmem [#allocation3], 7
    %v2499 = vld [vmem:[%s2498] ss:$2 sm:$0x3]
    %v2500 = vpack.c.bf16 %v2499, %v2499
    %v2501 = vld [vmem:[%s5] sm:$0xf]
    %v2502 = vld [vmem:[%s5 + $0x4] sm:$0xf]
    %v2503 = vld [vmem:[%s5 + $0x8] sm:$0xf]
    %v2504 = vld [vmem:[%s5 + $0xc] sm:$0xf]
    %v2505 = vld [vmem:[%s5 + $0x10] sm:$0xf]
    %v2506 = vld [vmem:[%s2257] sm:$0xf]
    %v2507 = vld [vmem:[%s2257 + $0x4] sm:$0xf]
    %v2508 = vld [vmem:[%s2257 + $0x8] sm:$0xf]
    %v2509 = vld [vmem:[%s2257 + $0xc] sm:$0xf]
    %v2510 = vld [vmem:[%s2257 + $0x10] sm:$0xf]
    %v2516 = vunpack.c.l.b16 %v2506
    %v2517 = vunpack.c.l.b16 %v2507
    %v2518 = vunpack.c.l.b16 %v2508
    %v2519 = vunpack.c.l.b16 %v2509
    %v2520 = vunpack.c.l.b16 %v2510
    %v2521 = vpack.c.b16 %v2517, %v2516
    %v2522 = vpack.c.b16 %v2519, %v2518
    %v2523 = vpack.c.b16 %v2520, %v2520
    %v2527 = vsel %vm2278, %v2497, 0
    %v2530 = vsel %vm2282, %v2523, 0
    %2532 = vmatprep.subr.bf16.mxu0 0
    %2533 = vmatpush1.bf16.msra.mxu0 0
    %2534 = vmatprep.subr.bf16.mxu0 0
    %2535 = vmatpush1.bf16.msra.mxu0 0
    %2536 = vmatprep.subr.bf16.mxu0 0
    %2537 = vmatpush1.bf16.msra.mxu0 0
    %2538 = vmatprep.subr.bf16.mxu0 0
    %2539 = vmatpush1.bf16.msra.mxu0 0
    %2540 = vmatprep.subr.bf16.mxu0 0
    %2541 = vmatpush1.bf16.msra.mxu0 0
    %2542 = vmatprep.subr.bf16.mxu0 0
    %2543 = vmatpush1.bf16.msra.mxu0 %v2530
    %2544 = vmatprep.subr.bf16.mxu0 0
    %2545 = vmatpush1.bf16.msra.mxu0 %v2522
    %2546 = vmatprep.subr.bf16.mxu0 0
    %2547 = vmatpush1.bf16.msra.mxu0 %v2521
    %2548 = vmatprep.subr.bf16.mxu0 0
    %2549 = vmatpush2.bf16.msra.mxu0 0
    %2550 = vmatprep.subr.bf16.mxu0 0
    %2551 = vmatpush2.bf16.msra.mxu0 0
    %2552 = vmatprep.subr.bf16.mxu0 0
    %2553 = vmatpush2.bf16.msra.mxu0 0
    %2554 = vmatprep.subr.bf16.mxu0 0
    %2555 = vmatpush2.bf16.msra.mxu0 0
    %2556 = vmatprep.subr.bf16.mxu0 0
    %2557 = vmatpush2.bf16.msra.mxu0 0
    %2558 = vmatprep.subr.bf16.mxu0 0
    %2559 = vmatpush2.bf16.msra.mxu0 0
    %2560 = vmatprep.subr.bf16.mxu0 0
    %2561 = vmatpush2.bf16.msra.mxu0 0
    %2562 = vmatprep.subr.bf16.mxu0 0
    %2563 = vmatpush2.bf16.msra.mxu0 0
    %2564 = vmatprep.mubr.bf16.mxu0 0
    %2565 = vmatmul.mubr.bf16.gmra.mxu0 %v2527
    %v2566 = vpop.f32.mrf.mxu0
    %v2567 = vadd.f32 0.0, %v2566
    %v2568 = vpop.f32.mrf.mxu0
    %v2569 = vpop.f32.mrf.mxu0
    %v2570 = vpop.f32.mrf.mxu0
    %2571 = vdwg.mxu0
    %v2577 = vunpack.c.l.b16 %v2501
    %v2578 = vunpack.c.l.b16 %v2502
    %v2579 = vunpack.c.l.b16 %v2503
    %v2580 = vunpack.c.l.b16 %v2504
    %v2581 = vunpack.c.l.b16 %v2505
    %v2582 = vpack.c.b16 %v2578, %v2577
    %v2583 = vpack.c.b16 %v2580, %v2579
    %v2584 = vpack.c.b16 %v2581, %v2581
    %v2588 = vsel %vm2278, %v2494, 0
    %v2591 = vsel %vm2282, %v2584, 0
    %2593 = vmatprep.subr.bf16.mxu0 0
    %2594 = vmatpush1.bf16.msra.mxu0 0
    %2595 = vmatprep.subr.bf16.mxu0 0
    %2596 = vmatpush1.bf16.msra.mxu0 0
    %2597 = vmatprep.subr.bf16.mxu0 0
    %2598 = vmatpush1.bf16.msra.mxu0 0
    %2599 = vmatprep.subr.bf16.mxu0 0
    %2600 = vmatpush1.bf16.msra.mxu0 0
    %2601 = vmatprep.subr.bf16.mxu0 0
    %2602 = vmatpush1.bf16.msra.mxu0 0
    %2603 = vmatprep.subr.bf16.mxu0 0
    %2604 = vmatpush1.bf16.msra.mxu0 %v2591
    %2605 = vmatprep.subr.bf16.mxu0 0
    %2606 = vmatpush1.bf16.msra.mxu0 %v2583
    %2607 = vmatprep.subr.bf16.mxu0 0
    %2608 = vmatpush1.bf16.msra.mxu0 %v2582
    %2609 = vmatprep.subr.bf16.mxu0 0
    %2610 = vmatpush2.bf16.msra.mxu0 0
    %2611 = vmatprep.subr.bf16.mxu0 0
    %2612 = vmatpush2.bf16.msra.mxu0 0
    %2613 = vmatprep.subr.bf16.mxu0 0
    %2614 = vmatpush2.bf16.msra.mxu0 0
    %2615 = vmatprep.subr.bf16.mxu0 0
    %2616 = vmatpush2.bf16.msra.mxu0 0
    %2617 = vmatprep.subr.bf16.mxu0 0
    %2618 = vmatpush2.bf16.msra.mxu0 0
    %2619 = vmatprep.subr.bf16.mxu0 0
    %2620 = vmatpush2.bf16.msra.mxu0 0
    %2621 = vmatprep.subr.bf16.mxu0 0
    %2622 = vmatpush2.bf16.msra.mxu0 0
    %2623 = vmatprep.subr.bf16.mxu0 0
    %2624 = vmatpush2.bf16.msra.mxu0 0
    %2625 = vmatprep.mubr.bf16.mxu0 0
    %2626 = vmatmul.mubr.bf16.gmra.mxu0 %v2588
    %v2627 = vpop.f32.mrf.mxu0
    %v2628 = vadd.f32 %v2567, %v2627
    %v2629 = vpop.f32.mrf.mxu0
    %v2630 = vpop.f32.mrf.mxu0
    %v2631 = vpop.f32.mrf.mxu0
    %2632 = vdwg.mxu0
    %v2634 = vsel %vm2278, %v2500, 0
    %2636 = vmatprep.subr.bf16.mxu0 0
    %2637 = vmatpush1.bf16.msra.mxu0 0
    %2638 = vmatprep.subr.bf16.mxu0 0
    %2639 = vmatpush1.bf16.msra.mxu0 0
    %2640 = vmatprep.subr.bf16.mxu0 0
    %2641 = vmatpush1.bf16.msra.mxu0 0
    %2642 = vmatprep.subr.bf16.mxu0 0
    %2643 = vmatpush1.bf16.msra.mxu0 0
    %2644 = vmatprep.subr.bf16.mxu0 0
    %2645 = vmatpush1.bf16.msra.mxu0 0
    %2646 = vmatprep.subr.bf16.mxu0 0
    %2647 = vmatpush1.bf16.msra.mxu0 %v2530
    %2648 = vmatprep.subr.bf16.mxu0 0
    %2649 = vmatpush1.bf16.msra.mxu0 %v2522
    %2650 = vmatprep.subr.bf16.mxu0 0
    %2651 = vmatpush1.bf16.msra.mxu0 %v2521
    %2652 = vmatprep.subr.bf16.mxu0 0
    %2653 = vmatpush2.bf16.msra.mxu0 0
    %2654 = vmatprep.subr.bf16.mxu0 0
    %2655 = vmatpush2.bf16.msra.mxu0 0
    %2656 = vmatprep.subr.bf16.mxu0 0
    %2657 = vmatpush2.bf16.msra.mxu0 0
    %2658 = vmatprep.subr.bf16.mxu0 0
    %2659 = vmatpush2.bf16.msra.mxu0 0
    %2660 = vmatprep.subr.bf16.mxu0 0
    %2661 = vmatpush2.bf16.msra.mxu0 0
    %2662 = vmatprep.subr.bf16.mxu0 0
    %2663 = vmatpush2.bf16.msra.mxu0 0
    %2664 = vmatprep.subr.bf16.mxu0 0
    %2665 = vmatpush2.bf16.msra.mxu0 0
    %2666 = vmatprep.subr.bf16.mxu0 0
    %2667 = vmatpush2.bf16.msra.mxu0 0
    %2668 = vmatprep.mubr.bf16.mxu0 0
    %2669 = vmatmul.mubr.bf16.gmra.mxu0 %v2634
    %v2670 = vpop.f32.mrf.mxu0
    %v2671 = vadd.f32 0.0, %v2670
    %v2672 = vpop.f32.mrf.mxu0
    %v2673 = vpop.f32.mrf.mxu0
    %v2674 = vpop.f32.mrf.mxu0
    %2675 = vdwg.mxu0
    %2676 = vmatprep.subr.bf16.mxu0 0
    %2677 = vmatpush1.bf16.msra.mxu0 0
    %2678 = vmatprep.subr.bf16.mxu0 0
    %2679 = vmatpush1.bf16.msra.mxu0 0
    %2680 = vmatprep.subr.bf16.mxu0 0
    %2681 = vmatpush1.bf16.msra.mxu0 0
    %2682 = vmatprep.subr.bf16.mxu0 0
    %2683 = vmatpush1.bf16.msra.mxu0 0
    %2684 = vmatprep.subr.bf16.mxu0 0
    %2685 = vmatpush1.bf16.msra.mxu0 0
    %2686 = vmatprep.subr.bf16.mxu0 0
    %2687 = vmatpush1.bf16.msra.mxu0 %v2591
    %2688 = vmatprep.subr.bf16.mxu0 0
    %2689 = vmatpush1.bf16.msra.mxu0 %v2583
    %2690 = vmatprep.subr.bf16.mxu0 0
    %2691 = vmatpush1.bf16.msra.mxu0 %v2582
    %2692 = vmatprep.subr.bf16.mxu0 0
    %2693 = vmatpush2.bf16.msra.mxu0 0
    %2694 = vmatprep.subr.bf16.mxu0 0
    %2695 = vmatpush2.bf16.msra.mxu0 0
    %2696 = vmatprep.subr.bf16.mxu0 0
    %2697 = vmatpush2.bf16.msra.mxu0 0
    %2698 = vmatprep.subr.bf16.mxu0 0
    %2699 = vmatpush2.bf16.msra.mxu0 0
    %2700 = vmatprep.subr.bf16.mxu0 0
    %2701 = vmatpush2.bf16.msra.mxu0 0
    %2702 = vmatprep.subr.bf16.mxu0 0
    %2703 = vmatpush2.bf16.msra.mxu0 0
    %2704 = vmatprep.subr.bf16.mxu0 0
    %2705 = vmatpush2.bf16.msra.mxu0 0
    %2706 = vmatprep.subr.bf16.mxu0 0
    %2707 = vmatpush2.bf16.msra.mxu0 0
    %2708 = vmatprep.mubr.bf16.mxu0 0
    %2709 = vmatmul.mubr.bf16.gmra.mxu0 %v2527
    %v2710 = vpop.f32.mrf.mxu0
    %v2711 = vadd.f32 %v2671, %v2710
    %v2712 = vpop.f32.mrf.mxu0
    %v2713 = vpop.f32.mrf.mxu0
    %v2714 = vpop.f32.mrf.mxu0
    %2715 = vdwg.mxu0
    %v2716 = vmax.f32 %v2628, %v2711
    %2718 = vrot.lane.b32.xlu0 %v2716, 96
    %v2719 = vpop.permute.xlu0 %2718
    %v2721 = vmax.f32 %v2716, %v2719
    %v2722 = vld [vmem:[%s6] sm:$0x1]
    %v2724 = vlaneseq
    %v2725 = vshrl.u32 %v2724, 7
    %v2726 = vsub.s32 0, %v2725
    %v2727 = vrot.slane %v2722, %v2726
    %v2729 = vadd.f32 %v2721, %v2727
    %vm2730 = vcmp.gt.f32.partialorder %v2729, 0.0
    %v2731 = vmin.f32 %v2729, 0.0
    %v2732 = vmul.f32 %v2731, 1.442695
    %v2733 = vpow.pop %v2732
    %v2734 = vsub.f32 %v2733, 1.0
    %v2735 = vsel %vm2730, %v2729, %v2734
    %2736 = vst.msk [vmem:[#allocation4 + $0x2] sm:$0x3] %vm2490, %v2735
    %v2737 = vld [vmem:[#allocation4] ss:$2 sm:$0x3]
    %v2738 = vpack.c.bf16 %v2737, %v2737
    %s2739 = scalar_lea.vmem [#allocation4], 1
    %v2740 = vld [vmem:[%s2739] ss:$2 sm:$0x3]
    %v2741 = vpack.c.bf16 %v2740, %v2740
    %v2742 = vld [vmem:[%s7] sm:$0xf]
    %v2743 = vld [vmem:[%s7 + $0x4] sm:$0xf]
    %v2744 = vld [vmem:[%s7 + $0x8] sm:$0xf]
    %v2745 = vld [vmem:[%s7 + $0xc] sm:$0xf]
    %s2746 = scalar_lea.vmem %s7, 16
    %v2747 = vld [vmem:[%s2746] sm:$0xf]
    %v2748 = vld [vmem:[%s2746 + $0x4] sm:$0xf]
    %v2749 = vld [vmem:[%s2746 + $0x8] sm:$0xf]
    %v2750 = vld [vmem:[%s2746 + $0xc] sm:$0xf]
    %v2755 = vunpack.c.l.b16 %v2747
    %v2756 = vunpack.c.l.b16 %v2748
    %v2757 = vunpack.c.l.b16 %v2749
    %v2758 = vunpack.c.l.b16 %v2750
    %v2759 = vpack.c.b16 %v2756, %v2755
    %v2760 = vpack.c.b16 %v2758, %v2757
    %vm2763 = vcmask 261120
    %v2765 = vsel %vm2763, %v2741, 0
    %2767 = vmatprep.subr.bf16.mxu0 0
    %2768 = vmatpush1.bf16.msra.mxu0 0
    %2769 = vmatprep.subr.bf16.mxu0 0
    %2770 = vmatpush1.bf16.msra.mxu0 0
    %2771 = vmatprep.subr.bf16.mxu0 0
    %2772 = vmatpush1.bf16.msra.mxu0 0
    %2773 = vmatprep.subr.bf16.mxu0 0
    %2774 = vmatpush1.bf16.msra.mxu0 0
    %2775 = vmatprep.subr.bf16.mxu0 0
    %2776 = vmatpush1.bf16.msra.mxu0 0
    %2777 = vmatprep.subr.bf16.mxu0 0
    %2778 = vmatpush1.bf16.msra.mxu0 0
    %2779 = vmatprep.subr.bf16.mxu0 0
    %2780 = vmatpush1.bf16.msra.mxu0 %v2760
    %2781 = vmatprep.subr.bf16.mxu0 0
    %2782 = vmatpush1.bf16.msra.mxu0 %v2759
    %2783 = vmatprep.subr.bf16.mxu0 0
    %2784 = vmatpush2.bf16.msra.mxu0 0
    %2785 = vmatprep.subr.bf16.mxu0 0
    %2786 = vmatpush2.bf16.msra.mxu0 0
    %2787 = vmatprep.subr.bf16.mxu0 0
    %2788 = vmatpush2.bf16.msra.mxu0 0
    %2789 = vmatprep.subr.bf16.mxu0 0
    %2790 = vmatpush2.bf16.msra.mxu0 0
    %2791 = vmatprep.subr.bf16.mxu0 0
    %2792 = vmatpush2.bf16.msra.mxu0 0
    %2793 = vmatprep.subr.bf16.mxu0 0
    %2794 = vmatpush2.bf16.msra.mxu0 0
    %2795 = vmatprep.subr.bf16.mxu0 0
    %2796 = vmatpush2.bf16.msra.mxu0 0
    %2797 = vmatprep.subr.bf16.mxu0 0
    %2798 = vmatpush2.bf16.msra.mxu0 0
    %2799 = vmatprep.mubr.bf16.mxu0 0
    %2800 = vmatmul.mubr.bf16.gmra.mxu0 %v2765
    %v2801 = vpop.f32.mrf.mxu0
    %v2802 = vadd.f32 0.0, %v2801
    %v2803 = vpop.f32.mrf.mxu0
    %v2804 = vpop.f32.mrf.mxu0
    %v2805 = vpop.f32.mrf.mxu0
    %2806 = vdwg.mxu0
    %v2811 = vunpack.c.l.b16 %v2742
    %v2812 = vunpack.c.l.b16 %v2743
    %v2813 = vunpack.c.l.b16 %v2744
    %v2814 = vunpack.c.l.b16 %v2745
    %v2815 = vpack.c.b16 %v2812, %v2811
    %v2816 = vpack.c.b16 %v2814, %v2813
    %v2820 = vsel %vm2763, %v2738, 0
    %2822 = vmatprep.subr.bf16.mxu0 0
    %2823 = vmatpush1.bf16.msra.mxu0 0
    %2824 = vmatprep.subr.bf16.mxu0 0
    %2825 = vmatpush1.bf16.msra.mxu0 0
    %2826 = vmatprep.subr.bf16.mxu0 0
    %2827 = vmatpush1.bf16.msra.mxu0 0
    %2828 = vmatprep.subr.bf16.mxu0 0
    %2829 = vmatpush1.bf16.msra.mxu0 0
    %2830 = vmatprep.subr.bf16.mxu0 0
    %2831 = vmatpush1.bf16.msra.mxu0 0
    %2832 = vmatprep.subr.bf16.mxu0 0
    %2833 = vmatpush1.bf16.msra.mxu0 0
    %2834 = vmatprep.subr.bf16.mxu0 0
    %2835 = vmatpush1.bf16.msra.mxu0 %v2816
    %2836 = vmatprep.subr.bf16.mxu0 0
    %2837 = vmatpush1.bf16.msra.mxu0 %v2815
    %2838 = vmatprep.subr.bf16.mxu0 0
    %2839 = vmatpush2.bf16.msra.mxu0 0
    %2840 = vmatprep.subr.bf16.mxu0 0
    %2841 = vmatpush2.bf16.msra.mxu0 0
    %2842 = vmatprep.subr.bf16.mxu0 0
    %2843 = vmatpush2.bf16.msra.mxu0 0
    %2844 = vmatprep.subr.bf16.mxu0 0
    %2845 = vmatpush2.bf16.msra.mxu0 0
    %2846 = vmatprep.subr.bf16.mxu0 0
    %2847 = vmatpush2.bf16.msra.mxu0 0
    %2848 = vmatprep.subr.bf16.mxu0 0
    %2849 = vmatpush2.bf16.msra.mxu0 0
    %2850 = vmatprep.subr.bf16.mxu0 0
    %2851 = vmatpush2.bf16.msra.mxu0 0
    %2852 = vmatprep.subr.bf16.mxu0 0
    %2853 = vmatpush2.bf16.msra.mxu0 0
    %2854 = vmatprep.mubr.bf16.mxu0 0
    %2855 = vmatmul.mubr.bf16.gmra.mxu0 %v2820
    %v2856 = vpop.f32.mrf.mxu0
    %v2857 = vadd.f32 %v2802, %v2856
    %v2858 = vpop.f32.mrf.mxu0
    %v2859 = vpop.f32.mrf.mxu0
    %v2860 = vpop.f32.mrf.mxu0
    %2861 = vdwg.mxu0
    %v2862 = vld [vmem:[%s9] sm:$0x1]
    %v2864 = vlaneseq
    %v2865 = vshrl.u32 %v2864, 7
    %v2866 = vsub.s32 0, %v2865
    %v2867 = vrot.slane %v2862, %v2866
    %v2869 = vadd.f32 %v2857, %v2867
    %vm2870 = vcmp.gt.f32.partialorder %v2869, 0.0
    %v2871 = vmin.f32 %v2869, 0.0
    %v2872 = vmul.f32 %v2871, 1.442695
    %v2873 = vpow.pop %v2872
    %v2874 = vsub.f32 %v2873, 1.0
    %v2875 = vsel %vm2870, %v2869, %v2874
    %v2876 = vpack.c.bf16 %v2875, %v2875
    %v2877 = vld [vmem:[%s8] sm:$0xf]
    %v2878 = vld [vmem:[%s8 + $0x4] sm:$0xf]
    %v2879 = vld [vmem:[%s8 + $0x8] sm:$0xf]
    %v2880 = vld [vmem:[%s8 + $0xc] sm:$0xf]
    %v2881 = vld [vmem:[%s8 + $0x10] sm:$0xf]
    %v2882 = vld [vmem:[%s8 + $0x14] sm:$0xf]
    %v2883 = vld [vmem:[%s8 + $0x18] sm:$0xf]
    %v2884 = vld [vmem:[%s8 + $0x1c] sm:$0xf]
    %v2885 = vld [vmem:[%s8 + $0x20] sm:$0xf]
    %v2886 = vld [vmem:[%s8 + $0x24] sm:$0xf]
    %v2887 = vld [vmem:[%s8 + $0x28] sm:$0xf]
    %v2888 = vld [vmem:[%s8 + $0x2c] sm:$0xf]
    %v2889 = vld [vmem:[%s8 + $0x30] sm:$0xf]
    %v2890 = vld [vmem:[%s8 + $0x34] sm:$0xf]
    %v2891 = vld [vmem:[%s8 + $0x38] sm:$0xf]
    %v2892 = vld [vmem:[%s8 + $0x3c] sm:$0xf]
    %s2893 = scalar_lea.vmem %s9, 1
    %v2894 = vld [vmem:[%s2893] sm:$0x1]
    %v2896 = vlaneseq
    %v2897 = vshrl.u32 %v2896, 7
    %v2898 = vsub.s32 0, %v2897
    %v2899 = vrot.slane %v2894, %v2898
    %v2917 = vunpack.c.l.b16 %v2877
    %v2918 = vunpack.c.l.b16 %v2878
    %v2919 = vunpack.c.l.b16 %v2879
    %v2920 = vunpack.c.l.b16 %v2880
    %v2921 = vunpack.c.l.b16 %v2881
    %v2922 = vunpack.c.l.b16 %v2882
    %v2923 = vunpack.c.l.b16 %v2883
    %v2924 = vunpack.c.l.b16 %v2884
    %v2925 = vunpack.c.l.b16 %v2885
    %v2926 = vunpack.c.l.b16 %v2886
    %v2927 = vunpack.c.l.b16 %v2887
    %v2928 = vunpack.c.l.b16 %v2888
    %v2929 = vunpack.c.l.b16 %v2889
    %v2930 = vunpack.c.l.b16 %v2890
    %v2931 = vunpack.c.l.b16 %v2891
    %v2932 = vunpack.c.l.b16 %v2892
    %v2933 = vpack.c.b16 %v2918, %v2917
    %v2934 = vpack.c.b16 %v2920, %v2919
    %v2935 = vpack.c.b16 %v2922, %v2921
    %v2936 = vpack.c.b16 %v2924, %v2923
    %v2937 = vpack.c.b16 %v2926, %v2925
    %v2938 = vpack.c.b16 %v2928, %v2927
    %v2939 = vpack.c.b16 %v2930, %v2929
    %v2940 = vpack.c.b16 %v2932, %v2931
    %2949 = vmatprep.subr.bf16.mxu0 0
    %2950 = vmatpush1.bf16.msra.mxu0 %v2940
    %2951 = vmatprep.subr.bf16.mxu0 0
    %2952 = vmatpush1.bf16.msra.mxu0 %v2939
    %2953 = vmatprep.subr.bf16.mxu0 0
    %2954 = vmatpush1.bf16.msra.mxu0 %v2938
    %2955 = vmatprep.subr.bf16.mxu0 0
    %2956 = vmatpush1.bf16.msra.mxu0 %v2937
    %2957 = vmatprep.subr.bf16.mxu0 0
    %2958 = vmatpush1.bf16.msra.mxu0 %v2936
    %2959 = vmatprep.subr.bf16.mxu0 0
    %2960 = vmatpush1.bf16.msra.mxu0 %v2935
    %2961 = vmatprep.subr.bf16.mxu0 0
    %2962 = vmatpush1.bf16.msra.mxu0 %v2934
    %2963 = vmatprep.subr.bf16.mxu0 0
    %2964 = vmatpush1.bf16.msra.mxu0 %v2933
    %2965 = vmatprep.subr.bf16.mxu0 0
    %2966 = vmatpush2.bf16.msra.mxu0 0
    %2967 = vmatprep.subr.bf16.mxu0 0
    %2968 = vmatpush2.bf16.msra.mxu0 0
    %2969 = vmatprep.subr.bf16.mxu0 0
    %2970 = vmatpush2.bf16.msra.mxu0 0
    %2971 = vmatprep.subr.bf16.mxu0 0
    %2972 = vmatpush2.bf16.msra.mxu0 0
    %2973 = vmatprep.subr.bf16.mxu0 0
    %2974 = vmatpush2.bf16.msra.mxu0 0
    %2975 = vmatprep.subr.bf16.mxu0 0
    %2976 = vmatpush2.bf16.msra.mxu0 0
    %2977 = vmatprep.subr.bf16.mxu0 0
    %2978 = vmatpush2.bf16.msra.mxu0 0
    %2979 = vmatprep.subr.bf16.mxu0 0
    %2980 = vmatpush2.bf16.msra.mxu0 0
    %2981 = vmatprep.mubr.bf16.mxu0 0
    %2982 = vmatmul.mubr.bf16.gmra.mxu0 %v2876
    %v2983 = vpop.f32.mrf.mxu0
    %v2984 = vadd.f32 %v2899, %v2983
    %v2985 = vpop.f32.mrf.mxu0
    %v2986 = vpop.f32.mrf.mxu0
    %v2987 = vpop.f32.mrf.mxu0
    %2988 = vdwg.mxu0
    %vm2989 = vcmp.gt.f32.partialorder %v2984, 0.0
    %v2990 = vmin.f32 %v2984, 0.0
    %v2991 = vmul.f32 %v2990, 1.442695
    %v2992 = vpow.pop %v2991
    %v2993 = vsub.f32 %v2992, 1.0
    %v2994 = vsel %vm2989, %v2984, %v2993
    %v2995 = vpack.c.bf16 %v2994, %v2994
    %s2996 = scalar_lea.vmem %s8, 64
    %v2997 = vld [vmem:[%s2996] sm:$0xf]
    %v2998 = vld [vmem:[%s2996 + $0x4] sm:$0xf]
    %v2999 = vld [vmem:[%s2996 + $0x8] sm:$0xf]
    %v3000 = vld [vmem:[%s2996 + $0xc] sm:$0xf]
    %v3001 = vld [vmem:[%s2996 + $0x10] sm:$0xf]
    %v3002 = vld [vmem:[%s2996 + $0x14] sm:$0xf]
    %v3003 = vld [vmem:[%s2996 + $0x18] sm:$0xf]
    %v3004 = vld [vmem:[%s2996 + $0x1c] sm:$0xf]
    %v3005 = vld [vmem:[%s2996 + $0x20] sm:$0xf]
    %v3006 = vld [vmem:[%s2996 + $0x24] sm:$0xf]
    %v3007 = vld [vmem:[%s2996 + $0x28] sm:$0xf]
    %v3008 = vld [vmem:[%s2996 + $0x2c] sm:$0xf]
    %v3009 = vld [vmem:[%s2996 + $0x30] sm:$0xf]
    %v3010 = vld [vmem:[%s2996 + $0x34] sm:$0xf]
    %v3011 = vld [vmem:[%s2996 + $0x38] sm:$0xf]
    %v3012 = vld [vmem:[%s2996 + $0x3c] sm:$0xf]
    %s3013 = scalar_lea.vmem %s9, 2
    %v3014 = vld [vmem:[%s3013] sm:$0x1]
    %v3016 = vlaneseq
    %v3017 = vshrl.u32 %v3016, 7
    %v3018 = vsub.s32 0, %v3017
    %v3019 = vrot.slane %v3014, %v3018
    %v3037 = vunpack.c.l.b16 %v2997
    %v3038 = vunpack.c.l.b16 %v2998
    %v3039 = vunpack.c.l.b16 %v2999
    %v3040 = vunpack.c.l.b16 %v3000
    %v3041 = vunpack.c.l.b16 %v3001
    %v3042 = vunpack.c.l.b16 %v3002
    %v3043 = vunpack.c.l.b16 %v3003
    %v3044 = vunpack.c.l.b16 %v3004
    %v3045 = vunpack.c.l.b16 %v3005
    %v3046 = vunpack.c.l.b16 %v3006
    %v3047 = vunpack.c.l.b16 %v3007
    %v3048 = vunpack.c.l.b16 %v3008
    %v3049 = vunpack.c.l.b16 %v3009
    %v3050 = vunpack.c.l.b16 %v3010
    %v3051 = vunpack.c.l.b16 %v3011
    %v3052 = vunpack.c.l.b16 %v3012
    %v3053 = vpack.c.b16 %v3038, %v3037
    %v3054 = vpack.c.b16 %v3040, %v3039
    %v3055 = vpack.c.b16 %v3042, %v3041
    %v3056 = vpack.c.b16 %v3044, %v3043
    %v3057 = vpack.c.b16 %v3046, %v3045
    %v3058 = vpack.c.b16 %v3048, %v3047
    %v3059 = vpack.c.b16 %v3050, %v3049
    %v3060 = vpack.c.b16 %v3052, %v3051
    %3069 = vmatprep.subr.bf16.mxu0 0
    %3070 = vmatpush1.bf16.msra.mxu0 %v3060
    %3071 = vmatprep.subr.bf16.mxu0 0
    %3072 = vmatpush1.bf16.msra.mxu0 %v3059
    %3073 = vmatprep.subr.bf16.mxu0 0
    %3074 = vmatpush1.bf16.msra.mxu0 %v3058
    %3075 = vmatprep.subr.bf16.mxu0 0
    %3076 = vmatpush1.bf16.msra.mxu0 %v3057
    %3077 = vmatprep.subr.bf16.mxu0 0
    %3078 = vmatpush1.bf16.msra.mxu0 %v3056
    %3079 = vmatprep.subr.bf16.mxu0 0
    %3080 = vmatpush1.bf16.msra.mxu0 %v3055
    %3081 = vmatprep.subr.bf16.mxu0 0
    %3082 = vmatpush1.bf16.msra.mxu0 %v3054
    %3083 = vmatprep.subr.bf16.mxu0 0
    %3084 = vmatpush1.bf16.msra.mxu0 %v3053
    %3085 = vmatprep.subr.bf16.mxu0 0
    %3086 = vmatpush2.bf16.msra.mxu0 0
    %3087 = vmatprep.subr.bf16.mxu0 0
    %3088 = vmatpush2.bf16.msra.mxu0 0
    %3089 = vmatprep.subr.bf16.mxu0 0
    %3090 = vmatpush2.bf16.msra.mxu0 0
    %3091 = vmatprep.subr.bf16.mxu0 0
    %3092 = vmatpush2.bf16.msra.mxu0 0
    %3093 = vmatprep.subr.bf16.mxu0 0
    %3094 = vmatpush2.bf16.msra.mxu0 0
    %3095 = vmatprep.subr.bf16.mxu0 0
    %3096 = vmatpush2.bf16.msra.mxu0 0
    %3097 = vmatprep.subr.bf16.mxu0 0
    %3098 = vmatpush2.bf16.msra.mxu0 0
    %3099 = vmatprep.subr.bf16.mxu0 0
    %3100 = vmatpush2.bf16.msra.mxu0 0
    %3101 = vmatprep.mubr.bf16.mxu0 0
    %3102 = vmatmul.mubr.bf16.gmra.mxu0 %v2995
    %v3103 = vpop.f32.mrf.mxu0
    %v3104 = vadd.f32 %v3019, %v3103
    %v3105 = vpop.f32.mrf.mxu0
    %v3106 = vpop.f32.mrf.mxu0
    %v3107 = vpop.f32.mrf.mxu0
    %3108 = vdwg.mxu0
    %vm3109 = vcmp.gt.f32.partialorder %v3104, 0.0
    %v3110 = vmin.f32 %v3104, 0.0
    %v3111 = vmul.f32 %v3110, 1.442695
    %v3112 = vpow.pop %v3111
    %v3113 = vsub.f32 %v3112, 1.0
    %v3114 = vsel %vm3109, %v3104, %v3113
    %v3115 = vpack.c.bf16 %v3114, %v3114
    %s3116 = scalar_lea.vmem %s8, 128
    %v3117 = vld [vmem:[%s3116] sm:$0xf]
    %v3118 = vld [vmem:[%s3116 + $0x4] sm:$0xf]
    %v3119 = vld [vmem:[%s3116 + $0x8] sm:$0xf]
    %v3120 = vld [vmem:[%s3116 + $0xc] sm:$0xf]
    %v3121 = vld [vmem:[%s3116 + $0x10] sm:$0xf]
    %v3122 = vld [vmem:[%s3116 + $0x14] sm:$0xf]
    %v3123 = vld [vmem:[%s3116 + $0x18] sm:$0xf]
    %v3124 = vld [vmem:[%s3116 + $0x1c] sm:$0xf]
    %v3125 = vld [vmem:[%s3116 + $0x20] sm:$0xf]
    %v3126 = vld [vmem:[%s3116 + $0x24] sm:$0xf]
    %v3127 = vld [vmem:[%s3116 + $0x28] sm:$0xf]
    %v3128 = vld [vmem:[%s3116 + $0x2c] sm:$0xf]
    %v3129 = vld [vmem:[%s3116 + $0x30] sm:$0xf]
    %v3130 = vld [vmem:[%s3116 + $0x34] sm:$0xf]
    %v3131 = vld [vmem:[%s3116 + $0x38] sm:$0xf]
    %v3132 = vld [vmem:[%s3116 + $0x3c] sm:$0xf]
    %s3133 = scalar_lea.vmem %s9, 3
    %v3134 = vld [vmem:[%s3133] sm:$0x1]
    %v3136 = vlaneseq
    %v3137 = vshrl.u32 %v3136, 7
    %v3138 = vsub.s32 0, %v3137
    %v3139 = vrot.slane %v3134, %v3138
    %v3157 = vunpack.c.l.b16 %v3117
    %v3158 = vunpack.c.l.b16 %v3118
    %v3159 = vunpack.c.l.b16 %v3119
    %v3160 = vunpack.c.l.b16 %v3120
    %v3161 = vunpack.c.l.b16 %v3121
    %v3162 = vunpack.c.l.b16 %v3122
    %v3163 = vunpack.c.l.b16 %v3123
    %v3164 = vunpack.c.l.b16 %v3124
    %v3165 = vunpack.c.l.b16 %v3125
    %v3166 = vunpack.c.l.b16 %v3126
    %v3167 = vunpack.c.l.b16 %v3127
    %v3168 = vunpack.c.l.b16 %v3128
    %v3169 = vunpack.c.l.b16 %v3129
    %v3170 = vunpack.c.l.b16 %v3130
    %v3171 = vunpack.c.l.b16 %v3131
    %v3172 = vunpack.c.l.b16 %v3132
    %v3173 = vpack.c.b16 %v3158, %v3157
    %v3174 = vpack.c.b16 %v3160, %v3159
    %v3175 = vpack.c.b16 %v3162, %v3161
    %v3176 = vpack.c.b16 %v3164, %v3163
    %v3177 = vpack.c.b16 %v3166, %v3165
    %v3178 = vpack.c.b16 %v3168, %v3167
    %v3179 = vpack.c.b16 %v3170, %v3169
    %v3180 = vpack.c.b16 %v3172, %v3171
    %3189 = vmatprep.subr.bf16.mxu0 0
    %3190 = vmatpush1.bf16.msra.mxu0 %v3180
    %3191 = vmatprep.subr.bf16.mxu0 0
    %3192 = vmatpush1.bf16.msra.mxu0 %v3179
    %3193 = vmatprep.subr.bf16.mxu0 0
    %3194 = vmatpush1.bf16.msra.mxu0 %v3178
    %3195 = vmatprep.subr.bf16.mxu0 0
    %3196 = vmatpush1.bf16.msra.mxu0 %v3177
    %3197 = vmatprep.subr.bf16.mxu0 0
    %3198 = vmatpush1.bf16.msra.mxu0 %v3176
    %3199 = vmatprep.subr.bf16.mxu0 0
    %3200 = vmatpush1.bf16.msra.mxu0 %v3175
    %3201 = vmatprep.subr.bf16.mxu0 0
    %3202 = vmatpush1.bf16.msra.mxu0 %v3174
    %3203 = vmatprep.subr.bf16.mxu0 0
    %3204 = vmatpush1.bf16.msra.mxu0 %v3173
    %3205 = vmatprep.subr.bf16.mxu0 0
    %3206 = vmatpush2.bf16.msra.mxu0 0
    %3207 = vmatprep.subr.bf16.mxu0 0
    %3208 = vmatpush2.bf16.msra.mxu0 0
    %3209 = vmatprep.subr.bf16.mxu0 0
    %3210 = vmatpush2.bf16.msra.mxu0 0
    %3211 = vmatprep.subr.bf16.mxu0 0
    %3212 = vmatpush2.bf16.msra.mxu0 0
    %3213 = vmatprep.subr.bf16.mxu0 0
    %3214 = vmatpush2.bf16.msra.mxu0 0
    %3215 = vmatprep.subr.bf16.mxu0 0
    %3216 = vmatpush2.bf16.msra.mxu0 0
    %3217 = vmatprep.subr.bf16.mxu0 0
    %3218 = vmatpush2.bf16.msra.mxu0 0
    %3219 = vmatprep.subr.bf16.mxu0 0
    %3220 = vmatpush2.bf16.msra.mxu0 0
    %3221 = vmatprep.mubr.bf16.mxu0 0
    %3222 = vmatmul.mubr.bf16.gmra.mxu0 %v3115
    %v3223 = vpop.f32.mrf.mxu0
    %v3224 = vadd.f32 %v3139, %v3223
    %v3225 = vpop.f32.mrf.mxu0
    %v3226 = vpop.f32.mrf.mxu0
    %v3227 = vpop.f32.mrf.mxu0
    %3228 = vdwg.mxu0
    %vm3229 = vcmp.gt.f32.partialorder %v3224, 0.0
    %v3230 = vmin.f32 %v3224, 0.0
    %v3231 = vmul.f32 %v3230, 1.442695
    %v3232 = vpow.pop %v3231
    %v3233 = vsub.f32 %v3232, 1.0
    %v3234 = vsel %vm3229, %v3224, %v3233
    %v3235 = vpack.c.bf16 %v3234, %v3234
    %s3236 = scalar_lea.vmem %s8, 192
    %v3237 = vld [vmem:[%s3236] sm:$0xf]
    %v3238 = vld [vmem:[%s3236 + $0x4] sm:$0xf]
    %v3239 = vld [vmem:[%s3236 + $0x8] sm:$0xf]
    %v3240 = vld [vmem:[%s3236 + $0xc] sm:$0xf]
    %v3241 = vld [vmem:[%s3236 + $0x10] sm:$0xf]
    %v3242 = vld [vmem:[%s3236 + $0x14] sm:$0xf]
    %v3243 = vld [vmem:[%s3236 + $0x18] sm:$0xf]
    %v3244 = vld [vmem:[%s3236 + $0x1c] sm:$0xf]
    %v3245 = vld [vmem:[%s3236 + $0x20] sm:$0xf]
    %v3246 = vld [vmem:[%s3236 + $0x24] sm:$0xf]
    %v3247 = vld [vmem:[%s3236 + $0x28] sm:$0xf]
    %v3248 = vld [vmem:[%s3236 + $0x2c] sm:$0xf]
    %v3249 = vld [vmem:[%s3236 + $0x30] sm:$0xf]
    %v3250 = vld [vmem:[%s3236 + $0x34] sm:$0xf]
    %v3251 = vld [vmem:[%s3236 + $0x38] sm:$0xf]
    %v3252 = vld [vmem:[%s3236 + $0x3c] sm:$0xf]
    %s3253 = scalar_lea.vmem %s9, 4
    %v3254 = vld [vmem:[%s3253] sm:$0x1]
    %v3256 = vlaneseq
    %v3257 = vshrl.u32 %v3256, 7
    %v3258 = vsub.s32 0, %v3257
    %v3259 = vrot.slane %v3254, %v3258
    %v3277 = vunpack.c.l.b16 %v3237
    %v3278 = vunpack.c.l.b16 %v3238
    %v3279 = vunpack.c.l.b16 %v3239
    %v3280 = vunpack.c.l.b16 %v3240
    %v3281 = vunpack.c.l.b16 %v3241
    %v3282 = vunpack.c.l.b16 %v3242
    %v3283 = vunpack.c.l.b16 %v3243
    %v3284 = vunpack.c.l.b16 %v3244
    %v3285 = vunpack.c.l.b16 %v3245
    %v3286 = vunpack.c.l.b16 %v3246
    %v3287 = vunpack.c.l.b16 %v3247
    %v3288 = vunpack.c.l.b16 %v3248
    %v3289 = vunpack.c.l.b16 %v3249
    %v3290 = vunpack.c.l.b16 %v3250
    %v3291 = vunpack.c.l.b16 %v3251
    %v3292 = vunpack.c.l.b16 %v3252
    %v3293 = vpack.c.b16 %v3278, %v3277
    %v3294 = vpack.c.b16 %v3280, %v3279
    %v3295 = vpack.c.b16 %v3282, %v3281
    %v3296 = vpack.c.b16 %v3284, %v3283
    %v3297 = vpack.c.b16 %v3286, %v3285
    %v3298 = vpack.c.b16 %v3288, %v3287
    %v3299 = vpack.c.b16 %v3290, %v3289
    %v3300 = vpack.c.b16 %v3292, %v3291
    %3309 = vmatprep.subr.bf16.mxu0 0
    %3310 = vmatpush1.bf16.msra.mxu0 %v3300
    %3311 = vmatprep.subr.bf16.mxu0 0
    %3312 = vmatpush1.bf16.msra.mxu0 %v3299
    %3313 = vmatprep.subr.bf16.mxu0 0
    %3314 = vmatpush1.bf16.msra.mxu0 %v3298
    %3315 = vmatprep.subr.bf16.mxu0 0
    %3316 = vmatpush1.bf16.msra.mxu0 %v3297
    %3317 = vmatprep.subr.bf16.mxu0 0
    %3318 = vmatpush1.bf16.msra.mxu0 %v3296
    %3319 = vmatprep.subr.bf16.mxu0 0
    %3320 = vmatpush1.bf16.msra.mxu0 %v3295
    %3321 = vmatprep.subr.bf16.mxu0 0
    %3322 = vmatpush1.bf16.msra.mxu0 %v3294
    %3323 = vmatprep.subr.bf16.mxu0 0
    %3324 = vmatpush1.bf16.msra.mxu0 %v3293
    %3325 = vmatprep.subr.bf16.mxu0 0
    %3326 = vmatpush2.bf16.msra.mxu0 0
    %3327 = vmatprep.subr.bf16.mxu0 0
    %3328 = vmatpush2.bf16.msra.mxu0 0
    %3329 = vmatprep.subr.bf16.mxu0 0
    %3330 = vmatpush2.bf16.msra.mxu0 0
    %3331 = vmatprep.subr.bf16.mxu0 0
    %3332 = vmatpush2.bf16.msra.mxu0 0
    %3333 = vmatprep.subr.bf16.mxu0 0
    %3334 = vmatpush2.bf16.msra.mxu0 0
    %3335 = vmatprep.subr.bf16.mxu0 0
    %3336 = vmatpush2.bf16.msra.mxu0 0
    %3337 = vmatprep.subr.bf16.mxu0 0
    %3338 = vmatpush2.bf16.msra.mxu0 0
    %3339 = vmatprep.subr.bf16.mxu0 0
    %3340 = vmatpush2.bf16.msra.mxu0 0
    %3341 = vmatprep.mubr.bf16.mxu0 0
    %3342 = vmatmul.mubr.bf16.gmra.mxu0 %v3235
    %v3343 = vpop.f32.mrf.mxu0
    %v3344 = vadd.f32 %v3259, %v3343
    %v3345 = vpop.f32.mrf.mxu0
    %v3346 = vpop.f32.mrf.mxu0
    %v3347 = vpop.f32.mrf.mxu0
    %3348 = vdwg.mxu0
    %3349 = vst [vmem:[#allocation5] sm:$0x3] %v3344
    // Predicated region
    $region42: #{net_forward.1} parent=1 // pred_check
      _
    $region43: #{net_forward.1} parent=1 // pred_check_branch
      %3351 = sbr.rel (0) target = $region45
    $region44: #{net_forward.1} parent=1 // pred_region
      %s3353 = ssub.s32 32, 32
      %3354 = vsyncadd [#allocation6], %s3353
      %s3356 = sshll.u32 [#allocation5], 4
      %s3357 = int_to_ptr.vmem [resolvable:$true] %s3356
      %3359 = dma.vmem_to_hbm [thread:$0]  %s3357, 32, %s10, [#allocation6]
    $region45: #{net_forward.1} parent=1 // pred_fallthru
      _
    // Predicated region
    $region46: #{net_forward.1} parent=1 // pred_check
      _
    $region47: #{net_forward.1} parent=1 // pred_check_branch
      %3361 = sbr.rel (0) target = $region49
    $region48: #{net_forward.1} parent=1 // pred_region
      %3362 = dma.done [#allocation6], 32
    $region49: #{net_forward.1} parent=1 // pred_fallthru
      _
    %3363 = vsyncpa [#allocation6], 1

</llo_original>
